<compile_context>
chip_gen: v6e
topology: v6e:2x2x1
jax: 0.10.0
libtpu: 0.0.40
codegen_flags: <defaults>
</compile_context>

<pallas_src>
import functools

import jax
import jax.numpy as jnp
from jax import lax
from jax.experimental import pallas as pl
from jax.experimental.pallas import tpu as pltpu

K = 3            # kernel_size
EPS = 1e-5       # InstanceNorm3d default eps
NEG_SLOPE = 0.01


def _band_weights(w, H, W):
    """[3,3,3,Cin,Cout] -> [3*H*W*Cin, H*W*Cout] bf16 banded weight matrix.

    band[kd*HWCin + (hi*W+wi)*Cin + ci, (ho*W+wo)*Cout + co]
        = w[kd, hi-ho+1, wi-wo+1, ci, co]   when the tap index is in [0,3),
    else 0.  The zero entries implement the H/W 'padding=1' of the conv, so
    the kernel only needs a depth halo.  The 3 depth taps are folded into the
    contraction dim so each conv becomes a single MXU matmul (K = 3*H*W*C).
    """
    Kd, Kh, Kw, Cin, Cout = w.shape
    dh = jnp.arange(H)[:, None] - jnp.arange(H)[None, :] + Kh // 2   # (H, H)
    dw = jnp.arange(W)[:, None] - jnp.arange(W)[None, :] + Kw // 2   # (W, W)
    vh = (dh >= 0) & (dh < Kh)
    vw = (dw >= 0) & (dw < Kw)
    dh_c = jnp.clip(dh, 0, Kh - 1)
    dw_c = jnp.clip(dw, 0, Kw - 1)
    t = w[:, dh_c]                       # (Kd, H, H, Kw, Cin, Cout)
    t = t[:, :, :, dw_c]                 # (Kd, H, H, W, W, Cin, Cout)
    mask = vh[:, :, None, None] & vw[None, None, :, :]
    t = jnp.where(mask[None, :, :, :, :, None, None], t, 0.0)
    t = jnp.transpose(t, (0, 1, 3, 5, 2, 4, 6))   # (kd, hi, wi, ci, ho, wo, co)
    return t.reshape(Kd * H * W * Cin, H * W * Cout).astype(jnp.bfloat16)


def _conv_block_kernel(x_ref, wb1_ref, wb2_ref, gmat_ref, gmatt_ref, o_ref,
                       xpad_ref, hpad_ref, *, NB, D, H, W, Cin, Cout):
    """NB batch samples per grid step: (conv3d -> InstanceNorm -> LReLU) x 2."""
    HWCin = H * W * Cin
    HWCout = H * W * Cout
    inv_n = 1.0 / float(D * H * W)

    def conv3(pad_ref, wb_ref):
        # One bf16 MXU matmul per conv: LHS is the lane-concatenation of the
        # three depth taps (D rows each), stacked over samples along M.
        rows = []
        for n in range(NB):                      # static, NB is tiny
            p = pad_ref[n]                       # (D+2, hwc) f32
            rows.append(jnp.concatenate([p[kd:kd + D] for kd in range(K)],
                                        axis=1))              # (D, 3*hwc)
        lhs = rows[0] if NB == 1 else jnp.concatenate(rows, axis=0)
        return jnp.dot(lhs.astype(jnp.bfloat16), wb_ref[...],
                       preferred_element_type=jnp.float32)    # (NB*D, HWCout)

    def inorm_lrelu(y):
        # Per-sample single-pass InstanceNorm3d (non-affine) + LeakyReLU.
        # Channel reduce/broadcast via fused one-hot matmuls (2 tiny dots).
        y3 = y.reshape(NB, D, HWCout)
        s1 = jnp.sum(y3, axis=1)                               # (NB, HWCout)
        s2 = jnp.sum(y3 * y3, axis=1)                          # (NB, HWCout)
        stats = jnp.dot(jnp.concatenate([s1, s2], axis=0), gmat_ref[...],
                        preferred_element_type=jnp.float32) * inv_n  # (2NB, Cout)
        mean = stats[:NB]
        var = jnp.maximum(stats[NB:] - mean * mean, 0.0)       # clamp >= 0
        inv_std = lax.rsqrt(var + EPS)
        lanes = jnp.dot(jnp.concatenate([mean, inv_std], axis=0), gmatt_ref[...],
                        preferred_element_type=jnp.float32)    # (2NB, HWCout)
        yn = (y3 - lanes[:NB][:, None, :]) * lanes[NB:][:, None, :]
        return jnp.where(yn >= 0, yn, NEG_SLOPE * yn)          # (NB, D, HWCout)

    # ---- depth-halo scratch for conv1: only 2 tiny halo rows per sample are
    #      zeroed; H/W padding is folded into the banded weights ----
    xpad_ref[:, 0:1, :] = jnp.zeros((NB, 1, HWCin), jnp.float32)
    xpad_ref[:, D + 1:D + 2, :] = jnp.zeros((NB, 1, HWCin), jnp.float32)
    xpad_ref[:, 1:D + 1, :] = x_ref[...]

    # NOTE: conv bias is intentionally omitted; it is exactly cancelled by the
    # mean subtraction of the non-affine InstanceNorm that follows each conv.
    h1 = inorm_lrelu(conv3(xpad_ref, wb1_ref))

    hpad_ref[:, 0:1, :] = jnp.zeros((NB, 1, HWCout), jnp.float32)
    hpad_ref[:, D + 1:D + 2, :] = jnp.zeros((NB, 1, HWCout), jnp.float32)
    hpad_ref[:, 1:D + 1, :] = h1

    h2 = inorm_lrelu(conv3(hpad_ref, wb2_ref))

    # TODO(synk): nn.Dropout3d(0.5) in training mode drops whole channels with
    # the framework RNG; here it is the eval-mode identity.
    o_ref[...] = h2


@jax.jit
def conv_block_forward(x, w1, b1, w2, b2):
    """x: [N, D, H, W, Cin] f32; w: [3,3,3,Cin,Cout]; b: [Cout] (unused, see note)."""
    N, D, H, W, Cin = x.shape
    Cout = w1.shape[-1]
    # Bias before a non-affine InstanceNorm is mathematically a no-op.
    del b1, b2
    HWCin, HWCout = H * W * Cin, H * W * Cout

    # Samples per grid step: fold batch into the matmul M dim (amortizes the
    # ~0.35 us/step overhead on single-TC v5e/v6e) while keeping >= 2 grid
    # steps so both v7x TensorCores get work when N > 1.
    NB = N // 2 if (N % 2 == 0 and N >= 2) else 1
    G = N // NB

    # TODO(synk): for inference with static weights, hoist/cache the band
    # construction out of the per-call path (it is re-built every call here).
    wb1 = _band_weights(w1, H, W)        # (3*HWCin,  HWCout) bf16
    wb2 = _band_weights(w2, H, W)        # (3*HWCout, HWCout) bf16

    ch = jnp.arange(HWCout, dtype=jnp.int32) % Cout
    gmat = (ch[:, None] == jnp.arange(Cout, dtype=jnp.int32)[None, :]
            ).astype(jnp.float32)        # (HWCout, Cout): lane -> channel
    gmat_t = jnp.transpose(gmat)         # (Cout, HWCout): channel -> lanes

    x2 = x.reshape(N, D, HWCin)          # lane-dense I/O layout

    flops = 2 * N * D * (3 * HWCin * HWCout + 3 * HWCout * HWCout)
    bytes_accessed = (x2.size * 4 + N * D * HWCout * 4
                      + wb1.size * 2 + wb2.size * 2
                      + (gmat.size + gmat_t.size) * 4)

    kernel = functools.partial(_conv_block_kernel,
                               NB=NB, D=D, H=H, W=W, Cin=Cin, Cout=Cout)
    invariant = pl.Buffered(1)           # never re-fetched across grid steps
    out2 = pl.pallas_call(
        kernel,
        out_shape=jax.ShapeDtypeStruct((N, D, HWCout), jnp.float32),
        grid_spec=pltpu.PrefetchScalarGridSpec(
            num_scalar_prefetch=0,
            grid=(G,),
            in_specs=[
                pl.BlockSpec((NB, D, HWCin), lambda i: (i, 0, 0)),
                pl.BlockSpec((K * HWCin, HWCout), lambda i: (0, 0),
                             pipeline_mode=invariant),
                pl.BlockSpec((K * HWCout, HWCout), lambda i: (0, 0),
                             pipeline_mode=invariant),
                pl.BlockSpec((HWCout, Cout), lambda i: (0, 0),
                             pipeline_mode=invariant),
                pl.BlockSpec((Cout, HWCout), lambda i: (0, 0),
                             pipeline_mode=invariant),
            ],
            out_specs=pl.BlockSpec((NB, D, HWCout), lambda i: (i, 0, 0)),
            scratch_shapes=[
                pltpu.VMEM((NB, D + 2, HWCin), jnp.float32),
                pltpu.VMEM((NB, D + 2, HWCout), jnp.float32),
            ],
        ),
        compiler_params=pltpu.CompilerParams(
            dimension_semantics=("parallel",),       # batch groups independent
            vmem_limit_bytes=8 * 1024 * 1024),
        cost_estimate=pl.CostEstimate(
            flops=flops,
            transcendentals=2 * N * Cout,
            bytes_accessed=bytes_accessed),
    )(x2, wb1, wb2, gmat, gmat_t)
    return out2.reshape(N, D, H, W, Cout)


def conv_block_ref(x, w1, b1, w2, b2):
    """Pure-JAX reference (NDHWC, with bias) for validation."""
    dn = ('NDHWC', 'DHWIO', 'NDHWC')

    def conv(y, w, b):
        return lax.conv_general_dilated(y, w, (1, 1, 1), 'SAME',
                                        dimension_numbers=dn) + b.reshape(
                                            1, 1, 1, 1, -1)

    def inorm_lrelu(y):
        mean = jnp.mean(y, axis=(1, 2, 3), keepdims=True)
        var = jnp.mean((y - mean) ** 2, axis=(1, 2, 3), keepdims=True)
        yn = (y - mean) * lax.rsqrt(var + EPS)
        return jnp.where(yn >= 0, yn, NEG_SLOPE * yn)

    h = inorm_lrelu(conv(x, w1, b1))
    return inorm_lrelu(conv(h, w2, b2))


if __name__ == "__main__":
    N, Cin, Cout = 4, 4, 8
    D = H = W = 8

    key = jax.random.PRNGKey(0)
    kx, kw1, kb1, kw2, kb2 = jax.random.split(key, 5)

    x = jax.random.normal(kx, (N, D, H, W, Cin), jnp.float32)
    w1 = jax.random.normal(kw1, (K, K, K, Cin, Cout), jnp.float32) * 0.1
    b1 = jax.random.normal(kb1, (Cout,), jnp.float32) * 0.1
    w2 = jax.random.normal(kw2, (K, K, K, Cout, Cout), jnp.float32) * 0.1
    b2 = jax.random.normal(kb2, (Cout,), jnp.float32) * 0.1

    out = jax.block_until_ready(conv_block_forward(x, w1, b1, w2, b2))
    ref = conv_block_ref(x, w1, b1, w2, b2)

    assert out.shape == (N, D, H, W, Cout), out.shape
    # bf16 weights/activations on the MXU (f32 accumulate) -> ~1e-2 scale
    # disagreement with the f32 reference is expected.
    max_err = float(jnp.max(jnp.abs(out - ref)))
    assert jnp.allclose(out, ref, atol=5e-2, rtol=5e-2), max_err

    print("KERNEL_OK")
</pallas_src>

<mosaic_0001>
module attributes {stable_mosaic.version = 11 : i64} {
  func.func @_conv_block_kernel(%arg0: i32, %arg1: memref<2x8x256xf32, #tpu.memory_space<vmem>>, %arg2: memref<768x512xbf16, #tpu.memory_space<vmem>>, %arg3: memref<1536x512xbf16, #tpu.memory_space<vmem>>, %arg4: memref<512x8xf32, #tpu.memory_space<vmem>>, %arg5: memref<8x512xf32, #tpu.memory_space<vmem>>, %arg6: memref<2x8x512xf32, #tpu.memory_space<vmem>>, %arg7: memref<2x10x256xf32, #tpu.memory_space<vmem>>, %arg8: memref<2x10x512xf32, #tpu.memory_space<vmem>>) attributes {dimension_semantics = [#tpu.dimension_semantics<parallel>], iteration_bounds = array<i64: 2>, scalar_prefetch = 0 : i64, scratch_operands = 2 : i64, tpu.core_type = #tpu.core_type<tc>, window_params = [{transform_indices = @transform_0, window_bounds = array<i64: 2, 8, 256>}, {pipeline_mode = #tpu.pipeline_mode<synchronous>, transform_indices = @transform_1, window_bounds = array<i64: 768, 512>}, {pipeline_mode = #tpu.pipeline_mode<synchronous>, transform_indices = @transform_2, window_bounds = array<i64: 1536, 512>}, {pipeline_mode = #tpu.pipeline_mode<synchronous>, transform_indices = @transform_3, window_bounds = array<i64: 512, 8>}, {pipeline_mode = #tpu.pipeline_mode<synchronous>, transform_indices = @transform_4, window_bounds = array<i64: 8, 512>}, {transform_indices = @transform_5, window_bounds = array<i64: 2, 8, 512>}]} {
    %cst = arith.constant 0.000000e+00 : f32
    %0 = vector.broadcast %cst : f32 to vector<2x1x256xf32>
    %c0 = arith.constant 0 : index
    %c0_0 = arith.constant 0 : index
    %c0_1 = arith.constant 0 : index
    %1 = vector.load %arg7[%c0, %c0_0, %c0_1] : memref<2x10x256xf32, #tpu.memory_space<vmem>>, vector<2x1x256xf32>
    tpu.vector_store %arg7[%c0, %c0_0, %c0_1], %0 {strides = array<i32>} : memref<2x10x256xf32, #tpu.memory_space<vmem>>, vector<2x1x256xf32>,
    %cst_2 = arith.constant 0.000000e+00 : f32
    %2 = vector.broadcast %cst_2 : f32 to vector<2x1x256xf32>
    %c0_3 = arith.constant 0 : index
    %c9 = arith.constant 9 : index
    %c0_4 = arith.constant 0 : index
    %3 = vector.load %arg7[%c0_3, %c9, %c0_4] : memref<2x10x256xf32, #tpu.memory_space<vmem>>, vector<2x1x256xf32>
    tpu.vector_store %arg7[%c0_3, %c9, %c0_4], %2 {strides = array<i32>} : memref<2x10x256xf32, #tpu.memory_space<vmem>>, vector<2x1x256xf32>,
    %c0_5 = arith.constant 0 : index
    %c0_6 = arith.constant 0 : index
    %c0_7 = arith.constant 0 : index
    %4 = vector.load %arg1[%c0_5, %c0_6, %c0_7] : memref<2x8x256xf32, #tpu.memory_space<vmem>>, vector<2x8x256xf32>
    %c0_8 = arith.constant 0 : index
    %c1 = arith.constant 1 : index
    %c0_9 = arith.constant 0 : index
    %5 = vector.load %arg7[%c0_8, %c1, %c0_9] : memref<2x10x256xf32, #tpu.memory_space<vmem>>, vector<2x8x256xf32>
    tpu.vector_store %arg7[%c0_8, %c1, %c0_9], %4 {strides = array<i32>} : memref<2x10x256xf32, #tpu.memory_space<vmem>>, vector<2x8x256xf32>,
    %c0_10 = arith.constant 0 : index
    %c0_11 = arith.constant 0 : index
    %c0_12 = arith.constant 0 : index
    %6 = vector.load %arg7[%c0_10, %c0_11, %c0_12] : memref<2x10x256xf32, #tpu.memory_space<vmem>>, vector<1x10x256xf32>
    %7 = vector.shape_cast %6 : vector<1x10x256xf32> to vector<10x256xf32>
    %8 = vector.extract_strided_slice %7 {offsets = [0, 0], sizes = [8, 256], strides = [1, 1]} : vector<10x256xf32> to vector<8x256xf32>
    %9 = vector.extract_strided_slice %7 {offsets = [1, 0], sizes = [8, 256], strides = [1, 1]} : vector<10x256xf32> to vector<8x256xf32>
    %10 = vector.extract_strided_slice %7 {offsets = [2, 0], sizes = [8, 256], strides = [1, 1]} : vector<10x256xf32> to vector<8x256xf32>
    %11 = tpu.concatenate %8, %9, %10 in 1 : vector<8x256xf32>, vector<8x256xf32>, vector<8x256xf32> -> vector<8x768xf32>
    %c1_13 = arith.constant 1 : index
    %c0_14 = arith.constant 0 : index
    %c0_15 = arith.constant 0 : index
    %12 = vector.load %arg7[%c1_13, %c0_14, %c0_15] : memref<2x10x256xf32, #tpu.memory_space<vmem>>, vector<1x10x256xf32>
    %13 = vector.shape_cast %12 : vector<1x10x256xf32> to vector<10x256xf32>
    %14 = vector.extract_strided_slice %13 {offsets = [0, 0], sizes = [8, 256], strides = [1, 1]} : vector<10x256xf32> to vector<8x256xf32>
    %15 = vector.extract_strided_slice %13 {offsets = [1, 0], sizes = [8, 256], strides = [1, 1]} : vector<10x256xf32> to vector<8x256xf32>
    %16 = vector.extract_strided_slice %13 {offsets = [2, 0], sizes = [8, 256], strides = [1, 1]} : vector<10x256xf32> to vector<8x256xf32>
    %17 = tpu.concatenate %14, %15, %16 in 1 : vector<8x256xf32>, vector<8x256xf32>, vector<8x256xf32> -> vector<8x768xf32>
    %18 = tpu.concatenate %11, %17 in 0 : vector<8x768xf32>, vector<8x768xf32> -> vector<16x768xf32>
    %19 = arith.truncf %18 : vector<16x768xf32> to vector<16x768xbf16>
    %c0_16 = arith.constant 0 : index
    %c0_17 = arith.constant 0 : index
    %20 = vector.load %arg2[%c0_16, %c0_17] : memref<768x512xbf16, #tpu.memory_space<vmem>>, vector<768x512xbf16>
    %cst_18 = arith.constant dense<0.000000e+00> : vector<16x512xf32>
    %21 = tpu.matmul %19, %20, %cst_18 {dimension_numbers = #tpu.dot_dimension_numbers<[1], [0], [0], [1], [0, 0, 1, 1], [], []>} : vector<16x768xbf16>, vector<768x512xbf16>, vector<16x512xf32> -> vector<16x512xf32>
    %22 = vector.shape_cast %21 : vector<16x512xf32> to vector<2x8x512xf32>
    %cst_19 = arith.constant dense<0.000000e+00> : vector<2x512xf32>
    %23 = vector.multi_reduction <add>, %22, %cst_19 [1] : vector<2x8x512xf32> to vector<2x512xf32>
    %24 = arith.mulf %22, %22 : vector<2x8x512xf32>
    %cst_20 = arith.constant dense<0.000000e+00> : vector<2x512xf32>
    %25 = vector.multi_reduction <add>, %24, %cst_20 [1] : vector<2x8x512xf32> to vector<2x512xf32>
    %26 = tpu.concatenate %23, %25 in 0 : vector<2x512xf32>, vector<2x512xf32> -> vector<4x512xf32>
    %c0_21 = arith.constant 0 : index
    %c0_22 = arith.constant 0 : index
    %27 = vector.load %arg4[%c0_21, %c0_22] : memref<512x8xf32, #tpu.memory_space<vmem>>, vector<512x8xf32>
    %cst_23 = arith.constant dense<0.000000e+00> : vector<4x8xf32>
    %28 = tpu.matmul %26, %27, %cst_23 {dimension_numbers = #tpu.dot_dimension_numbers<[1], [0], [0], [1], [0, 0, 1, 1], [], []>} : vector<4x512xf32>, vector<512x8xf32>, vector<4x8xf32> -> vector<4x8xf32>
    %cst_24 = arith.constant 0.001953125 : f32
    %29 = vector.broadcast %cst_24 : f32 to vector<4x8xf32>
    %30 = arith.mulf %28, %29 : vector<4x8xf32>
    %31 = vector.extract_strided_slice %30 {offsets = [0, 0], sizes = [2, 8], strides = [1, 1]} : vector<4x8xf32> to vector<2x8xf32>
    %32 = vector.extract_strided_slice %30 {offsets = [2, 0], sizes = [2, 8], strides = [1, 1]} : vector<4x8xf32> to vector<2x8xf32>
    %33 = arith.mulf %31, %31 : vector<2x8xf32>
    %34 = arith.subf %32, %33 : vector<2x8xf32>
    %cst_25 = arith.constant 0.000000e+00 : f32
    %35 = vector.broadcast %cst_25 : f32 to vector<2x8xf32>
    %36 = arith.maximumf %34, %35 : vector<2x8xf32>
    %cst_26 = arith.constant 9.99999974E-6 : f32
    %37 = vector.broadcast %cst_26 : f32 to vector<2x8xf32>
    %38 = arith.addf %36, %37 : vector<2x8xf32>
    %39 = math.rsqrt %38 : vector<2x8xf32>
    %40 = tpu.concatenate %31, %39 in 0 : vector<2x8xf32>, vector<2x8xf32> -> vector<4x8xf32>
    %c0_27 = arith.constant 0 : index
    %c0_28 = arith.constant 0 : index
    %41 = vector.load %arg5[%c0_27, %c0_28] : memref<8x512xf32, #tpu.memory_space<vmem>>, vector<8x512xf32>
    %cst_29 = arith.constant dense<0.000000e+00> : vector<4x512xf32>
    %42 = tpu.matmul %40, %41, %cst_29 {dimension_numbers = #tpu.dot_dimension_numbers<[1], [0], [0], [1], [0, 0, 1, 1], [], []>} : vector<4x8xf32>, vector<8x512xf32>, vector<4x512xf32> -> vector<4x512xf32>
    %43 = vector.extract_strided_slice %42 {offsets = [0, 0], sizes = [2, 512], strides = [1, 1]} : vector<4x512xf32> to vector<2x512xf32>
    %44 = vector.shape_cast %43 : vector<2x512xf32> to vector<2x1x512xf32>
    %45 = vector.broadcast %44 : vector<2x1x512xf32> to vector<2x8x512xf32>
    %46 = arith.subf %22, %45 : vector<2x8x512xf32>
    %47 = vector.extract_strided_slice %42 {offsets = [2, 0], sizes = [2, 512], strides = [1, 1]} : vector<4x512xf32> to vector<2x512xf32>
    %48 = vector.shape_cast %47 : vector<2x512xf32> to vector<2x1x512xf32>
    %49 = vector.broadcast %48 : vector<2x1x512xf32> to vector<2x8x512xf32>
    %50 = arith.mulf %46, %49 : vector<2x8x512xf32>
    %cst_30 = arith.constant 0.000000e+00 : f32
    %51 = vector.broadcast %cst_30 : f32 to vector<2x8x512xf32>
    %52 = arith.cmpf oge, %50, %51 : vector<2x8x512xf32>
    %cst_31 = arith.constant 0.00999999977 : f32
    %53 = vector.broadcast %cst_31 : f32 to vector<2x8x512xf32>
    %54 = arith.mulf %53, %50 : vector<2x8x512xf32>
    %55 = arith.select %52, %50, %54 : vector<2x8x512xi1>, vector<2x8x512xf32>
    %cst_32 = arith.constant 0.000000e+00 : f32
    %56 = vector.broadcast %cst_32 : f32 to vector<2x1x512xf32>
    %c0_33 = arith.constant 0 : index
    %c0_34 = arith.constant 0 : index
    %c0_35 = arith.constant 0 : index
    %57 = vector.load %arg8[%c0_33, %c0_34, %c0_35] : memref<2x10x512xf32, #tpu.memory_space<vmem>>, vector<2x1x512xf32>
    tpu.vector_store %arg8[%c0_33, %c0_34, %c0_35], %56 {strides = array<i32>} : memref<2x10x512xf32, #tpu.memory_space<vmem>>, vector<2x1x512xf32>,
    %cst_36 = arith.constant 0.000000e+00 : f32
    %58 = vector.broadcast %cst_36 : f32 to vector<2x1x512xf32>
    %c0_37 = arith.constant 0 : index
    %c9_38 = arith.constant 9 : index
    %c0_39 = arith.constant 0 : index
    %59 = vector.load %arg8[%c0_37, %c9_38, %c0_39] : memref<2x10x512xf32, #tpu.memory_space<vmem>>, vector<2x1x512xf32>
    tpu.vector_store %arg8[%c0_37, %c9_38, %c0_39], %58 {strides = array<i32>} : memref<2x10x512xf32, #tpu.memory_space<vmem>>, vector<2x1x512xf32>,
    %c0_40 = arith.constant 0 : index
    %c1_41 = arith.constant 1 : index
    %c0_42 = arith.constant 0 : index
    %60 = vector.load %arg8[%c0_40, %c1_41, %c0_42] : memref<2x10x512xf32, #tpu.memory_space<vmem>>, vector<2x8x512xf32>
    tpu.vector_store %arg8[%c0_40, %c1_41, %c0_42], %55 {strides = array<i32>} : memref<2x10x512xf32, #tpu.memory_space<vmem>>, vector<2x8x512xf32>,
    %c0_43 = arith.constant 0 : index
    %c0_44 = arith.constant 0 : index
    %c0_45 = arith.constant 0 : index
    %61 = vector.load %arg8[%c0_43, %c0_44, %c0_45] : memref<2x10x512xf32, #tpu.memory_space<vmem>>, vector<1x10x512xf32>
    %62 = vector.shape_cast %61 : vector<1x10x512xf32> to vector<10x512xf32>
    %63 = vector.extract_strided_slice %62 {offsets = [0, 0], sizes = [8, 512], strides = [1, 1]} : vector<10x512xf32> to vector<8x512xf32>
    %64 = vector.extract_strided_slice %62 {offsets = [1, 0], sizes = [8, 512], strides = [1, 1]} : vector<10x512xf32> to vector<8x512xf32>
    %65 = vector.extract_strided_slice %62 {offsets = [2, 0], sizes = [8, 512], strides = [1, 1]} : vector<10x512xf32> to vector<8x512xf32>
    %66 = tpu.concatenate %63, %64, %65 in 1 : vector<8x512xf32>, vector<8x512xf32>, vector<8x512xf32> -> vector<8x1536xf32>
    %c1_46 = arith.constant 1 : index
    %c0_47 = arith.constant 0 : index
    %c0_48 = arith.constant 0 : index
    %67 = vector.load %arg8[%c1_46, %c0_47, %c0_48] : memref<2x10x512xf32, #tpu.memory_space<vmem>>, vector<1x10x512xf32>
    %68 = vector.shape_cast %67 : vector<1x10x512xf32> to vector<10x512xf32>
    %69 = vector.extract_strided_slice %68 {offsets = [0, 0], sizes = [8, 512], strides = [1, 1]} : vector<10x512xf32> to vector<8x512xf32>
    %70 = vector.extract_strided_slice %68 {offsets = [1, 0], sizes = [8, 512], strides = [1, 1]} : vector<10x512xf32> to vector<8x512xf32>
    %71 = vector.extract_strided_slice %68 {offsets = [2, 0], sizes = [8, 512], strides = [1, 1]} : vector<10x512xf32> to vector<8x512xf32>
    %72 = tpu.concatenate %69, %70, %71 in 1 : vector<8x512xf32>, vector<8x512xf32>, vector<8x512xf32> -> vector<8x1536xf32>
    %73 = tpu.concatenate %66, %72 in 0 : vector<8x1536xf32>, vector<8x1536xf32> -> vector<16x1536xf32>
    %74 = arith.truncf %73 : vector<16x1536xf32> to vector<16x1536xbf16>
    %c0_49 = arith.constant 0 : index
    %c0_50 = arith.constant 0 : index
    %75 = vector.load %arg3[%c0_49, %c0_50] : memref<1536x512xbf16, #tpu.memory_space<vmem>>, vector<1536x512xbf16>
    %cst_51 = arith.constant dense<0.000000e+00> : vector<16x512xf32>
    %76 = tpu.matmul %74, %75, %cst_51 {dimension_numbers = #tpu.dot_dimension_numbers<[1], [0], [0], [1], [0, 0, 1, 1], [], []>} : vector<16x1536xbf16>, vector<1536x512xbf16>, vector<16x512xf32> -> vector<16x512xf32>
    %77 = vector.shape_cast %76 : vector<16x512xf32> to vector<2x8x512xf32>
    %cst_52 = arith.constant dense<0.000000e+00> : vector<2x512xf32>
    %78 = vector.multi_reduction <add>, %77, %cst_52 [1] : vector<2x8x512xf32> to vector<2x512xf32>
    %79 = arith.mulf %77, %77 : vector<2x8x512xf32>
    %cst_53 = arith.constant dense<0.000000e+00> : vector<2x512xf32>
    %80 = vector.multi_reduction <add>, %79, %cst_53 [1] : vector<2x8x512xf32> to vector<2x512xf32>
    %81 = tpu.concatenate %78, %80 in 0 : vector<2x512xf32>, vector<2x512xf32> -> vector<4x512xf32>
    %c0_54 = arith.constant 0 : index
    %c0_55 = arith.constant 0 : index
    %82 = vector.load %arg4[%c0_54, %c0_55] : memref<512x8xf32, #tpu.memory_space<vmem>>, vector<512x8xf32>
    %cst_56 = arith.constant dense<0.000000e+00> : vector<4x8xf32>
    %83 = tpu.matmul %81, %82, %cst_56 {dimension_numbers = #tpu.dot_dimension_numbers<[1], [0], [0], [1], [0, 0, 1, 1], [], []>} : vector<4x512xf32>, vector<512x8xf32>, vector<4x8xf32> -> vector<4x8xf32>
    %cst_57 = arith.constant 0.001953125 : f32
    %84 = vector.broadcast %cst_57 : f32 to vector<4x8xf32>
    %85 = arith.mulf %83, %84 : vector<4x8xf32>
    %86 = vector.extract_strided_slice %85 {offsets = [0, 0], sizes = [2, 8], strides = [1, 1]} : vector<4x8xf32> to vector<2x8xf32>
    %87 = vector.extract_strided_slice %85 {offsets = [2, 0], sizes = [2, 8], strides = [1, 1]} : vector<4x8xf32> to vector<2x8xf32>
    %88 = arith.mulf %86, %86 : vector<2x8xf32>
    %89 = arith.subf %87, %88 : vector<2x8xf32>
    %cst_58 = arith.constant 0.000000e+00 : f32
    %90 = vector.broadcast %cst_58 : f32 to vector<2x8xf32>
    %91 = arith.maximumf %89, %90 : vector<2x8xf32>
    %cst_59 = arith.constant 9.99999974E-6 : f32
    %92 = vector.broadcast %cst_59 : f32 to vector<2x8xf32>
    %93 = arith.addf %91, %92 : vector<2x8xf32>
    %94 = math.rsqrt %93 : vector<2x8xf32>
    %95 = tpu.concatenate %86, %94 in 0 : vector<2x8xf32>, vector<2x8xf32> -> vector<4x8xf32>
    %c0_60 = arith.constant 0 : index
    %c0_61 = arith.constant 0 : index
    %96 = vector.load %arg5[%c0_60, %c0_61] : memref<8x512xf32, #tpu.memory_space<vmem>>, vector<8x512xf32>
    %cst_62 = arith.constant dense<0.000000e+00> : vector<4x512xf32>
    %97 = tpu.matmul %95, %96, %cst_62 {dimension_numbers = #tpu.dot_dimension_numbers<[1], [0], [0], [1], [0, 0, 1, 1], [], []>} : vector<4x8xf32>, vector<8x512xf32>, vector<4x512xf32> -> vector<4x512xf32>
    %98 = vector.extract_strided_slice %97 {offsets = [0, 0], sizes = [2, 512], strides = [1, 1]} : vector<4x512xf32> to vector<2x512xf32>
    %99 = vector.shape_cast %98 : vector<2x512xf32> to vector<2x1x512xf32>
    %100 = vector.broadcast %99 : vector<2x1x512xf32> to vector<2x8x512xf32>
    %101 = arith.subf %77, %100 : vector<2x8x512xf32>
    %102 = vector.extract_strided_slice %97 {offsets = [2, 0], sizes = [2, 512], strides = [1, 1]} : vector<4x512xf32> to vector<2x512xf32>
    %103 = vector.shape_cast %102 : vector<2x512xf32> to vector<2x1x512xf32>
    %104 = vector.broadcast %103 : vector<2x1x512xf32> to vector<2x8x512xf32>
    %105 = arith.mulf %101, %104 : vector<2x8x512xf32>
    %cst_63 = arith.constant 0.000000e+00 : f32
    %106 = vector.broadcast %cst_63 : f32 to vector<2x8x512xf32>
    %107 = arith.cmpf oge, %105, %106 : vector<2x8x512xf32>
    %cst_64 = arith.constant 0.00999999977 : f32
    %108 = vector.broadcast %cst_64 : f32 to vector<2x8x512xf32>
    %109 = arith.mulf %108, %105 : vector<2x8x512xf32>
    %110 = arith.select %107, %105, %109 : vector<2x8x512xi1>, vector<2x8x512xf32>
    %c0_65 = arith.constant 0 : index
    %c0_66 = arith.constant 0 : index
    %c0_67 = arith.constant 0 : index
    %111 = vector.load %arg6[%c0_65, %c0_66, %c0_67] : memref<2x8x512xf32, #tpu.memory_space<vmem>>, vector<2x8x512xf32>
    tpu.vector_store %arg6[%c0_65, %c0_66, %c0_67], %110 {strides = array<i32>} : memref<2x8x512xf32, #tpu.memory_space<vmem>>, vector<2x8x512xf32>,
    return
  }
  func.func @transform_0(%arg0: i32) -> (i32, i32, i32) {
    %c0_i32 = arith.constant 0 : i32
    %c0_i32_0 = arith.constant 0 : i32
    %c0_i32_1 = arith.constant 0 : i32
    return %arg0, %c0_i32, %c0_i32_0 : i32, i32, i32
  }
  func.func @transform_1(%arg0: i32) -> (i32, i32) {
    %c0_i32 = arith.constant 0 : i32
    %c0_i32_0 = arith.constant 0 : i32
    %c0_i32_1 = arith.constant 0 : i32
    return %c0_i32, %c0_i32_0 : i32, i32
  }
  func.func @transform_2(%arg0: i32) -> (i32, i32) {
    %c0_i32 = arith.constant 0 : i32
    %c0_i32_0 = arith.constant 0 : i32
    %c0_i32_1 = arith.constant 0 : i32
    return %c0_i32, %c0_i32_0 : i32, i32
  }
  func.func @transform_3(%arg0: i32) -> (i32, i32) {
    %c0_i32 = arith.constant 0 : i32
    %c0_i32_0 = arith.constant 0 : i32
    %c0_i32_1 = arith.constant 0 : i32
    return %c0_i32, %c0_i32_0 : i32, i32
  }
  func.func @transform_4(%arg0: i32) -> (i32, i32) {
    %c0_i32 = arith.constant 0 : i32
    %c0_i32_0 = arith.constant 0 : i32
    %c0_i32_1 = arith.constant 0 : i32
    return %c0_i32, %c0_i32_0 : i32, i32
  }
  func.func @transform_5(%arg0: i32) -> (i32, i32, i32) {
    %c0_i32 = arith.constant 0 : i32
    %c0_i32_0 = arith.constant 0 : i32
    %c0_i32_1 = arith.constant 0 : i32
    return %arg0, %c0_i32, %c0_i32_0 : i32, i32, i32
  }
}

</mosaic_0001>

<llo_original>
// kernel: conv_block_forward.1
$region0: #{conv_block_forward.1}
  #allocation0 [shape = 'u32[]', space=smem, size = 0x4, offset = 0x4, fixed_abs, tag = 'smem constant byte address 0x4 - core index']
  #allocation1 [shape = 'u32[144,128]{1,0:T(1,128)}', space=vmem, size = 0x12000, scoped, tag = 'internal scratch']
  #allocation2 [shape = 'f32[2,10,256]{2,1,0:T(8,128)}', space=vmem, size = 0x8000, scoped, tag = 'scratch operand']
  #allocation3 [shape = 'f32[2,10,512]{2,1,0:T(8,128)}', space=vmem, size = 0x10000, scoped, tag = 'scratch operand']
  %s0 = inlined_call_operand.vmem [shape: f32[4,8,256], index: 0, kind: input, shape index: {}]
  %s1 = inlined_call_operand.vmem [shape: bf16[768,512], index: 1, kind: input, shape index: {}]
  %s2 = inlined_call_operand.vmem [shape: bf16[1536,512], index: 2, kind: input, shape index: {}]
  %s3 = inlined_call_operand.vmem [shape: f32[512,8], index: 3, kind: input, shape index: {}]
  %s4 = inlined_call_operand.vmem [shape: f32[8,512], index: 4, kind: input, shape index: {}]
  %s5 = inlined_call_operand.vmem [shape: f32[4,8,512], index: 5, kind: output, shape index: {}]
  %s6 = sld [smem:[#allocation0]]
  $region53: #{conv_block_forward.1} parent=0
    _
  %s8 = ssub.s32 1, %s6
  %s9 = scalar_select 0, %s8, %s6
  loop: start=0, step=1, limit=4
  $region2: #{conv_block_forward.1} parent=0 // loop_pre_header
    _
  $region3: #{conv_block_forward.1} parent=0 // loop_header
    %s11 = sphi 0, %s15
    %p12 = scmp.ge.s32.totalorder %s11, 4
    %s21 = sphi 0, %s23
    %s24 = sphi 0, %s21
    %s25 = sphi 0, %s24
    %s41 = sphi 0, %s25
    %s45 = sphi 0, %s45
    %s47 = sphi 0, %s45
    %s48 = sphi 0, %s47
    %s62 = sphi 0, %s48
    %s66 = sphi 0, %s66
    %s68 = sphi 0, %s66
    %s69 = sphi 0, %s68
    %s83 = sphi 0, %s69
    %s87 = sphi 0, %s87
    %s89 = sphi 0, %s87
    %s90 = sphi 0, %s89
    %s104 = sphi 0, %s90
    %s108 = sphi 0, %s108
    %s110 = sphi 0, %s108
    %s111 = sphi 0, %s110
    %s125 = sphi 0, %s111
    %s131 = sphi 0, %s133
    %s134 = sphi 0, %s131
    %s135 = sphi 0, %s134
    %s151 = sphi 0, %s135
  $region4: #{conv_block_forward.1} parent=0 // loop_header_branch
    %14 = sbr.rel (%p12) target = $region8
  $region5: #{conv_block_forward.1} parent=0 // loop_body
    %s16 = ssub.s32 %s11, 1
    %s17 = ssub.s32 %s11, 2
    %s18 = sadd.s32 %s11, 1
    %s19 = ssub.s32 %s11, %s18
    %p20 = scmp.eq.s32.totalorder %s19, 0
    %s22 = sadd.s32 %s21, 1
    %s23 = scalar_select %p20, %s21, %s22
    %p26 = pneg %p20
    %p27 = scmp.eq.s32.totalorder %s11, 1
    %p28 = por %p26, %p27
    %p29 = scmp.ne.s32.totalorder %s21, %s24
    %p30 = scmp.eq.s32.totalorder %s11, 0
    %p31 = por %p29, %p30
    %p32 = scmp.ne.s32.totalorder %s21, %s24
    %p33 = scmp.eq.s32.totalorder %s16, 1
    %p34 = por %p32, %p33
    %p35 = scmp.ne.s32.totalorder %s24, %s25
    %p36 = scmp.eq.s32.totalorder %s16, 0
    %p37 = por %p35, %p36
    %p38 = scmp.ne.s32.totalorder %s24, %s25
    %p39 = scmp.eq.s32.totalorder %s17, 1
    %p40 = por %p38, %p39
    %p42 = scmp.ne.s32.totalorder %s25, %s41
    %p43 = scmp.eq.s32.totalorder %s17, 0
    %p44 = por %p42, %p43
    %s46 = sadd.s32 %s45, 1
    %p49 = scmp.eq.s32.totalorder %s11, 1
    %p50 = scmp.ne.s32.totalorder %s45, %s47
    %p51 = scmp.eq.s32.totalorder %s11, 0
    %p52 = por %p50, %p51
    %p53 = scmp.ne.s32.totalorder %s45, %s47
    %p54 = scmp.eq.s32.totalorder %s16, 1
    %p55 = por %p53, %p54
    %p56 = scmp.ne.s32.totalorder %s47, %s48
    %p57 = scmp.eq.s32.totalorder %s16, 0
    %p58 = por %p56, %p57
    %p59 = scmp.ne.s32.totalorder %s47, %s48
    %p60 = scmp.eq.s32.totalorder %s17, 1
    %p61 = por %p59, %p60
    %p63 = scmp.ne.s32.totalorder %s48, %s62
    %p64 = scmp.eq.s32.totalorder %s17, 0
    %p65 = por %p63, %p64
    %s67 = sadd.s32 %s66, 1
    %p70 = scmp.eq.s32.totalorder %s11, 1
    %p71 = scmp.ne.s32.totalorder %s66, %s68
    %p72 = scmp.eq.s32.totalorder %s11, 0
    %p73 = por %p71, %p72
    %p74 = scmp.ne.s32.totalorder %s66, %s68
    %p75 = scmp.eq.s32.totalorder %s16, 1
    %p76 = por %p74, %p75
    %p77 = scmp.ne.s32.totalorder %s68, %s69
    %p78 = scmp.eq.s32.totalorder %s16, 0
    %p79 = por %p77, %p78
    %p80 = scmp.ne.s32.totalorder %s68, %s69
    %p81 = scmp.eq.s32.totalorder %s17, 1
    %p82 = por %p80, %p81
    %p84 = scmp.ne.s32.totalorder %s69, %s83
    %p85 = scmp.eq.s32.totalorder %s17, 0
    %p86 = por %p84, %p85
    %s88 = sadd.s32 %s87, 1
    %p91 = scmp.eq.s32.totalorder %s11, 1
    %p92 = scmp.ne.s32.totalorder %s87, %s89
    %p93 = scmp.eq.s32.totalorder %s11, 0
    %p94 = por %p92, %p93
    %p95 = scmp.ne.s32.totalorder %s87, %s89
    %p96 = scmp.eq.s32.totalorder %s16, 1
    %p97 = por %p95, %p96
    %p98 = scmp.ne.s32.totalorder %s89, %s90
    %p99 = scmp.eq.s32.totalorder %s16, 0
    %p100 = por %p98, %p99
    %p101 = scmp.ne.s32.totalorder %s89, %s90
    %p102 = scmp.eq.s32.totalorder %s17, 1
    %p103 = por %p101, %p102
    %p105 = scmp.ne.s32.totalorder %s90, %s104
    %p106 = scmp.eq.s32.totalorder %s17, 0
    %p107 = por %p105, %p106
    %s109 = sadd.s32 %s108, 1
    %p112 = scmp.eq.s32.totalorder %s11, 1
    %p113 = scmp.ne.s32.totalorder %s108, %s110
    %p114 = scmp.eq.s32.totalorder %s11, 0
    %p115 = por %p113, %p114
    %p116 = scmp.ne.s32.totalorder %s108, %s110
    %p117 = scmp.eq.s32.totalorder %s16, 1
    %p118 = por %p116, %p117
    %p119 = scmp.ne.s32.totalorder %s110, %s111
    %p120 = scmp.eq.s32.totalorder %s16, 0
    %p121 = por %p119, %p120
    %p122 = scmp.ne.s32.totalorder %s110, %s111
    %p123 = scmp.eq.s32.totalorder %s17, 1
    %p124 = por %p122, %p123
    %p126 = scmp.ne.s32.totalorder %s111, %s125
    %p127 = scmp.eq.s32.totalorder %s17, 0
    %p128 = por %p126, %p127
    %s129 = ssub.s32 %s11, %s18
    %p130 = scmp.eq.s32.totalorder %s129, 0
    %s132 = sadd.s32 %s131, 1
    %s133 = scalar_select %p130, %s131, %s132
    %p136 = pneg %p130
    %p137 = scmp.eq.s32.totalorder %s11, 1
    %p138 = por %p136, %p137
    %p139 = scmp.ne.s32.totalorder %s131, %s134
    %p140 = scmp.eq.s32.totalorder %s11, 0
    %p141 = por %p139, %p140
    %p142 = scmp.ne.s32.totalorder %s131, %s134
    %p143 = scmp.eq.s32.totalorder %s16, 1
    %p144 = por %p142, %p143
    %p145 = scmp.ne.s32.totalorder %s134, %s135
    %p146 = scmp.eq.s32.totalorder %s16, 0
    %p147 = por %p145, %p146
    %p148 = scmp.ne.s32.totalorder %s134, %s135
    %p149 = scmp.eq.s32.totalorder %s17, 1
    %p150 = por %p148, %p149
    %p152 = scmp.ne.s32.totalorder %s135, %s151
    %p153 = scmp.eq.s32.totalorder %s17, 0
    %p154 = por %p152, %p153
    %p155 = scmp.le.s32.totalorder 1, %s11
    %p156 = scmp.lt.s32.totalorder %s11, 3
    %p157 = pnand %p155, %p156
    %p158 = pneg %p157
    // Predicated region
    $region9: #{conv_block_forward.1} parent=5 // pred_check
      _
    $region10: #{conv_block_forward.1} parent=5 // pred_check_branch
      %160 = sbr.rel (%p157) target = $region12
    $region11: #{conv_block_forward.1} parent=5 // pred_region
      %s161 = ssub.s32 %s11, 1
      // Predicated region
      $region13: #{conv_block_forward.1} parent=11 // pred_check
        %p162 = pneg %p58
      $region14: #{conv_block_forward.1} parent=11 // pred_check_branch
        %164 = sbr.rel (%p162) target = $region16
      $region15: #{conv_block_forward.1} parent=11 // pred_region
        _
      $region16: #{conv_block_forward.1} parent=11 // pred_fallthru
        _
      // Predicated region
      $region17: #{conv_block_forward.1} parent=11 // pred_check
        %p165 = pneg %p79
      $region18: #{conv_block_forward.1} parent=11 // pred_check_branch
        %167 = sbr.rel (%p165) target = $region20
      $region19: #{conv_block_forward.1} parent=11 // pred_region
        _
      $region20: #{conv_block_forward.1} parent=11 // pred_fallthru
        _
      // Predicated region
      $region21: #{conv_block_forward.1} parent=11 // pred_check
        %p168 = pneg %p100
      $region22: #{conv_block_forward.1} parent=11 // pred_check_branch
        %170 = sbr.rel (%p168) target = $region24
      $region23: #{conv_block_forward.1} parent=11 // pred_region
        _
      $region24: #{conv_block_forward.1} parent=11 // pred_fallthru
        _
      // Predicated region
      $region25: #{conv_block_forward.1} parent=11 // pred_check
        %p171 = pneg %p121
      $region26: #{conv_block_forward.1} parent=11 // pred_check_branch
        %173 = sbr.rel (%p171) target = $region28
      $region27: #{conv_block_forward.1} parent=11 // pred_region
        _
      $region28: #{conv_block_forward.1} parent=11 // pred_fallthru
        _
    $region12: #{conv_block_forward.1} parent=5 // pred_fallthru
      _
    %p174 = scmp.lt.s32.totalorder %s11, 2
    // Predicated region
    $region29: #{conv_block_forward.1} parent=5 // pred_check
      %p175 = pneg %p174
    $region30: #{conv_block_forward.1} parent=5 // pred_check_branch
      %177 = sbr.rel (%p175) target = $region32
    $region31: #{conv_block_forward.1} parent=5 // pred_region
      // Predicated region
      $region33: #{conv_block_forward.1} parent=31 // pred_check
        %p178 = pneg %p31
      $region34: #{conv_block_forward.1} parent=31 // pred_check_branch
        %180 = sbr.rel (%p178) target = $region36
      $region35: #{conv_block_forward.1} parent=31 // pred_region
        %s181 = smul.u32 2, %s11
        %p182 = scmp.lt.s32.totalorder %s181, 3
        %s183 = scalar_select %p182, %s181, 3
        %s184 = smul.addr %s183, 2
        %s185 = smul.addr %s184, 8
        %s186 = scalar_lea.vmem %s0, %s185
        %s187 = smul.u32 2, %s11
      $region36: #{conv_block_forward.1} parent=31 // pred_fallthru
        _
    $region32: #{conv_block_forward.1} parent=5 // pred_fallthru
      _
    %p188 = scmp.le.s32.totalorder 1, %s11
    %p189 = scmp.lt.s32.totalorder %s11, 3
    %p190 = pnand %p188, %p189
    %p191 = pneg %p190
    // Predicated region
    $region37: #{conv_block_forward.1} parent=5 // pred_check
      _
    $region38: #{conv_block_forward.1} parent=5 // pred_check_branch
      %193 = sbr.rel (%p190) target = $region40
    $region39: #{conv_block_forward.1} parent=5 // pred_region
      %s194 = ssub.s32 %s11, 1
      %s195 = smul.u32 2, %s16
      %p196 = scmp.lt.s32.totalorder %s195, 3
      %s197 = scalar_select %p196, %s195, 3
      %s198 = smul.addr %s197, 2
      %s199 = smul.addr %s198, 8
      %s200 = scalar_lea.vmem %s0, %s199
      %p201 = pneg %p37
      %p202 = pneg %p34
      %p203 = pneg %p58
      %p204 = pneg %p55
      %p205 = pneg %p79
      %p206 = pneg %p76
      %p207 = pneg %p100
      %p208 = pneg %p97
      %p209 = pneg %p121
      %p210 = pneg %p118
      %p211 = pneg %p147
      %p212 = pneg %p144
      %s213 = smul.u32 2, %s16
      %p214 = scmp.lt.s32.totalorder %s213, 3
      %s215 = scalar_select %p214, %s213, 3
      %s216 = smul.addr %s215, 4
      %s217 = smul.addr %s216, 8
      %s218 = scalar_lea.vmem %s5, %s217
      %s219 = smul.u32 2, %s16
      %p220 = scmp.lt.s32.totalorder %s219, 3
      %s221 = scalar_select %p220, %s219, 3
      %s222 = smul.addr %s221, 2
      %s223 = smul.addr %s222, 8
      %s224 = scalar_lea.vmem %s0, %s223
      %s225 = smul.u32 2, %s16
      %s226 = smul.u32 2, %s16
      %p227 = scmp.lt.s32.totalorder %s226, 3
      %s228 = scalar_select %p227, %s226, 3
      %s229 = smul.addr %s228, 4
      %s230 = smul.addr %s229, 8
      %s231 = scalar_lea.vmem %s5, %s230
      %s232 = smul.u32 2, %s16
      %v233 = vlaneseq
      %vm234 = vcmp.ge.s32.totalorder %v233, 0
      %vm235 = vcmp.lt.s32.totalorder %v233, 256
      %vm236 = vmand %vm234, %vm235
      %237 = vst.msk [vmem:[#allocation2] ss:$8 sm:$0x3] %vm236, 0.0
      %238 = vst.msk [vmem:[#allocation2] ss:$8 sm:$0x0] %vm236, 0.0
      %s239 = scalar_lea.vmem [#allocation2], 32
      %240 = vst.msk [vmem:[%s239] ss:$8 sm:$0x3] %vm236, 0.0
      %241 = vst.msk [vmem:[%s239] ss:$8 sm:$0x0] %vm236, 0.0
      %s242 = scalar_lea.vmem [#allocation2], 17
      %243 = vst.msk [vmem:[%s242] ss:$8 sm:$0x3] %vm236, 0.0
      %244 = vst.msk [vmem:[%s242] ss:$8 sm:$0x0] %vm236, 0.0
      %s245 = scalar_lea.vmem [#allocation2], 49
      %246 = vst.msk [vmem:[%s245] ss:$8 sm:$0x3] %vm236, 0.0
      %247 = vst.msk [vmem:[%s245] ss:$8 sm:$0x0] %vm236, 0.0
      %v248 = vld [vmem:[%s224] sm:$0xff]
      %v249 = vld [vmem:[%s224 + $0x8] sm:$0xff]
      %v250 = vld [vmem:[%s224 + $0x10] sm:$0xff]
      %v251 = vld [vmem:[%s224 + $0x18] sm:$0xff]
      %v256 = vrot.slane %v248, 7
      %v257 = vrot.slane %v249, 7
      %v258 = vrot.slane %v250, 7
      %v259 = vrot.slane %v251, 7
      %264 = vst [vmem:[#allocation2] sm:$0xfe] %v256
      %265 = vst [vmem:[#allocation2 + $0x8] sm:$0xfe] %v257
      %266 = vst [vmem:[#allocation2 + $0x10] sm:$0x1] %v256
      %267 = vst [vmem:[#allocation2 + $0x18] sm:$0x1] %v257
      %268 = vst [vmem:[#allocation2 + $0x20] sm:$0xfe] %v258
      %269 = vst [vmem:[#allocation2 + $0x28] sm:$0xfe] %v259
      %270 = vst [vmem:[#allocation2 + $0x30] sm:$0x1] %v258
      %271 = vst [vmem:[#allocation2 + $0x38] sm:$0x1] %v259
      %v272 = vld [vmem:[#allocation2] sm:$0xff]
      %v273 = vld [vmem:[#allocation2 + $0x8] sm:$0xff]
      %v274 = vld [vmem:[#allocation2 + $0x10] sm:$0x3]
      %v275 = vld [vmem:[#allocation2 + $0x18] sm:$0x3]
      %vm280 = vcmask 1046528
      %v281 = vrot.slane %v272, 1
      %v282 = vrot.slane %v274, 1
      %v283 = vsel %vm280, %v281, %v282
      %v284 = vrot.slane %v273, 1
      %v285 = vrot.slane %v275, 1
      %v286 = vsel %vm280, %v284, %v285
      %vm289 = vcmask 1045504
      %v290 = vrot.slane %v272, 2
      %v291 = vrot.slane %v274, 2
      %v292 = vsel %vm289, %v290, %v291
      %v293 = vrot.slane %v273, 2
      %v294 = vrot.slane %v275, 2
      %v295 = vsel %vm289, %v293, %v294
      %s298 = scalar_lea.vmem [#allocation2], 32
      %v299 = vld [vmem:[%s298] sm:$0xff]
      %v300 = vld [vmem:[%s298 + $0x8] sm:$0xff]
      %v301 = vld [vmem:[%s298 + $0x10] sm:$0x3]
      %v302 = vld [vmem:[%s298 + $0x18] sm:$0x3]
      %v307 = vrot.slane %v299, 1
      %v308 = vrot.slane %v301, 1
      %v309 = vsel %vm280, %v307, %v308
      %v310 = vrot.slane %v300, 1
      %v311 = vrot.slane %v302, 1
      %v312 = vsel %vm280, %v310, %v311
      %v315 = vrot.slane %v299, 2
      %v316 = vrot.slane %v301, 2
      %v317 = vsel %vm289, %v315, %v316
      %v318 = vrot.slane %v300, 2
      %v319 = vrot.slane %v302, 2
      %v320 = vsel %vm289, %v318, %v319
      %v323 = vpack.c.bf16 %v299, %v272
      %v324 = vpack.c.bf16 %v300, %v273
      %v325 = vpack.c.bf16 %v309, %v283
      %v326 = vpack.c.bf16 %v312, %v286
      %v327 = vpack.c.bf16 %v317, %v292
      %v328 = vpack.c.bf16 %v320, %v295
      %v329 = vld [vmem:[%s1] sm:$0xff]
      %v330 = vld [vmem:[%s1 + $0x8] sm:$0xff]
      %v331 = vld [vmem:[%s1 + $0x10] sm:$0xff]
      %v332 = vld [vmem:[%s1 + $0x18] sm:$0xff]
      %v333 = vld [vmem:[%s1 + $0x20] sm:$0xff]
      %v334 = vld [vmem:[%s1 + $0x28] sm:$0xff]
      %v335 = vld [vmem:[%s1 + $0x30] sm:$0xff]
      %v336 = vld [vmem:[%s1 + $0x38] sm:$0xff]
      %v337 = vld [vmem:[%s1 + $0x40] sm:$0xff]
      %v338 = vld [vmem:[%s1 + $0x48] sm:$0xff]
      %v339 = vld [vmem:[%s1 + $0x50] sm:$0xff]
      %v340 = vld [vmem:[%s1 + $0x58] sm:$0xff]
      %v341 = vld [vmem:[%s1 + $0x60] sm:$0xff]
      %v342 = vld [vmem:[%s1 + $0x68] sm:$0xff]
      %v343 = vld [vmem:[%s1 + $0x70] sm:$0xff]
      %v344 = vld [vmem:[%s1 + $0x78] sm:$0xff]
      %v345 = vld [vmem:[%s1 + $0x80] sm:$0xff]
      %v346 = vld [vmem:[%s1 + $0x88] sm:$0xff]
      %v347 = vld [vmem:[%s1 + $0x90] sm:$0xff]
      %v348 = vld [vmem:[%s1 + $0x98] sm:$0xff]
      %v349 = vld [vmem:[%s1 + $0xa0] sm:$0xff]
      %v350 = vld [vmem:[%s1 + $0xa8] sm:$0xff]
      %v351 = vld [vmem:[%s1 + $0xb0] sm:$0xff]
      %v352 = vld [vmem:[%s1 + $0xb8] sm:$0xff]
      %v353 = vld [vmem:[%s1 + $0xc0] sm:$0xff]
      %v354 = vld [vmem:[%s1 + $0xc8] sm:$0xff]
      %v355 = vld [vmem:[%s1 + $0xd0] sm:$0xff]
      %v356 = vld [vmem:[%s1 + $0xd8] sm:$0xff]
      %v357 = vld [vmem:[%s1 + $0xe0] sm:$0xff]
      %v358 = vld [vmem:[%s1 + $0xe8] sm:$0xff]
      %v359 = vld [vmem:[%s1 + $0xf0] sm:$0xff]
      %v360 = vld [vmem:[%s1 + $0xf8] sm:$0xff]
      %v361 = vld [vmem:[%s1 + $0x100] sm:$0xff]
      %v362 = vld [vmem:[%s1 + $0x108] sm:$0xff]
      %v363 = vld [vmem:[%s1 + $0x110] sm:$0xff]
      %v364 = vld [vmem:[%s1 + $0x118] sm:$0xff]
      %v365 = vld [vmem:[%s1 + $0x120] sm:$0xff]
      %v366 = vld [vmem:[%s1 + $0x128] sm:$0xff]
      %v367 = vld [vmem:[%s1 + $0x130] sm:$0xff]
      %v368 = vld [vmem:[%s1 + $0x138] sm:$0xff]
      %v369 = vld [vmem:[%s1 + $0x140] sm:$0xff]
      %v370 = vld [vmem:[%s1 + $0x148] sm:$0xff]
      %v371 = vld [vmem:[%s1 + $0x150] sm:$0xff]
      %v372 = vld [vmem:[%s1 + $0x158] sm:$0xff]
      %v373 = vld [vmem:[%s1 + $0x160] sm:$0xff]
      %v374 = vld [vmem:[%s1 + $0x168] sm:$0xff]
      %v375 = vld [vmem:[%s1 + $0x170] sm:$0xff]
      %v376 = vld [vmem:[%s1 + $0x178] sm:$0xff]
      %v377 = vld [vmem:[%s1 + $0x180] sm:$0xff]
      %v378 = vld [vmem:[%s1 + $0x188] sm:$0xff]
      %v379 = vld [vmem:[%s1 + $0x190] sm:$0xff]
      %v380 = vld [vmem:[%s1 + $0x198] sm:$0xff]
      %v381 = vld [vmem:[%s1 + $0x1a0] sm:$0xff]
      %v382 = vld [vmem:[%s1 + $0x1a8] sm:$0xff]
      %v383 = vld [vmem:[%s1 + $0x1b0] sm:$0xff]
      %v384 = vld [vmem:[%s1 + $0x1b8] sm:$0xff]
      %v385 = vld [vmem:[%s1 + $0x1c0] sm:$0xff]
      %v386 = vld [vmem:[%s1 + $0x1c8] sm:$0xff]
      %v387 = vld [vmem:[%s1 + $0x1d0] sm:$0xff]
      %v388 = vld [vmem:[%s1 + $0x1d8] sm:$0xff]
      %v389 = vld [vmem:[%s1 + $0x1e0] sm:$0xff]
      %v390 = vld [vmem:[%s1 + $0x1e8] sm:$0xff]
      %v391 = vld [vmem:[%s1 + $0x1f0] sm:$0xff]
      %v392 = vld [vmem:[%s1 + $0x1f8] sm:$0xff]
      %v393 = vld [vmem:[%s1 + $0x200] sm:$0xff]
      %v394 = vld [vmem:[%s1 + $0x208] sm:$0xff]
      %v395 = vld [vmem:[%s1 + $0x210] sm:$0xff]
      %v396 = vld [vmem:[%s1 + $0x218] sm:$0xff]
      %v397 = vld [vmem:[%s1 + $0x220] sm:$0xff]
      %v398 = vld [vmem:[%s1 + $0x228] sm:$0xff]
      %v399 = vld [vmem:[%s1 + $0x230] sm:$0xff]
      %v400 = vld [vmem:[%s1 + $0x238] sm:$0xff]
      %v401 = vld [vmem:[%s1 + $0x240] sm:$0xff]
      %v402 = vld [vmem:[%s1 + $0x248] sm:$0xff]
      %v403 = vld [vmem:[%s1 + $0x250] sm:$0xff]
      %v404 = vld [vmem:[%s1 + $0x258] sm:$0xff]
      %v405 = vld [vmem:[%s1 + $0x260] sm:$0xff]
      %v406 = vld [vmem:[%s1 + $0x268] sm:$0xff]
      %v407 = vld [vmem:[%s1 + $0x270] sm:$0xff]
      %v408 = vld [vmem:[%s1 + $0x278] sm:$0xff]
      %v409 = vld [vmem:[%s1 + $0x280] sm:$0xff]
      %v410 = vld [vmem:[%s1 + $0x288] sm:$0xff]
      %v411 = vld [vmem:[%s1 + $0x290] sm:$0xff]
      %v412 = vld [vmem:[%s1 + $0x298] sm:$0xff]
      %v413 = vld [vmem:[%s1 + $0x2a0] sm:$0xff]
      %v414 = vld [vmem:[%s1 + $0x2a8] sm:$0xff]
      %v415 = vld [vmem:[%s1 + $0x2b0] sm:$0xff]
      %v416 = vld [vmem:[%s1 + $0x2b8] sm:$0xff]
      %v417 = vld [vmem:[%s1 + $0x2c0] sm:$0xff]
      %v418 = vld [vmem:[%s1 + $0x2c8] sm:$0xff]
      %v419 = vld [vmem:[%s1 + $0x2d0] sm:$0xff]
      %v420 = vld [vmem:[%s1 + $0x2d8] sm:$0xff]
      %v421 = vld [vmem:[%s1 + $0x2e0] sm:$0xff]
      %v422 = vld [vmem:[%s1 + $0x2e8] sm:$0xff]
      %v423 = vld [vmem:[%s1 + $0x2f0] sm:$0xff]
      %v424 = vld [vmem:[%s1 + $0x2f8] sm:$0xff]
      %v425 = vld [vmem:[%s1 + $0x300] sm:$0xff]
      %v426 = vld [vmem:[%s1 + $0x308] sm:$0xff]
      %v427 = vld [vmem:[%s1 + $0x310] sm:$0xff]
      %v428 = vld [vmem:[%s1 + $0x318] sm:$0xff]
      %v429 = vld [vmem:[%s1 + $0x320] sm:$0xff]
      %v430 = vld [vmem:[%s1 + $0x328] sm:$0xff]
      %v431 = vld [vmem:[%s1 + $0x330] sm:$0xff]
      %v432 = vld [vmem:[%s1 + $0x338] sm:$0xff]
      %v433 = vld [vmem:[%s1 + $0x340] sm:$0xff]
      %v434 = vld [vmem:[%s1 + $0x348] sm:$0xff]
      %v435 = vld [vmem:[%s1 + $0x350] sm:$0xff]
      %v436 = vld [vmem:[%s1 + $0x358] sm:$0xff]
      %v437 = vld [vmem:[%s1 + $0x360] sm:$0xff]
      %v438 = vld [vmem:[%s1 + $0x368] sm:$0xff]
      %v439 = vld [vmem:[%s1 + $0x370] sm:$0xff]
      %v440 = vld [vmem:[%s1 + $0x378] sm:$0xff]
      %v441 = vld [vmem:[%s1 + $0x380] sm:$0xff]
      %v442 = vld [vmem:[%s1 + $0x388] sm:$0xff]
      %v443 = vld [vmem:[%s1 + $0x390] sm:$0xff]
      %v444 = vld [vmem:[%s1 + $0x398] sm:$0xff]
      %v445 = vld [vmem:[%s1 + $0x3a0] sm:$0xff]
      %v446 = vld [vmem:[%s1 + $0x3a8] sm:$0xff]
      %v447 = vld [vmem:[%s1 + $0x3b0] sm:$0xff]
      %v448 = vld [vmem:[%s1 + $0x3b8] sm:$0xff]
      %v449 = vld [vmem:[%s1 + $0x3c0] sm:$0xff]
      %v450 = vld [vmem:[%s1 + $0x3c8] sm:$0xff]
      %v451 = vld [vmem:[%s1 + $0x3d0] sm:$0xff]
      %v452 = vld [vmem:[%s1 + $0x3d8] sm:$0xff]
      %v453 = vld [vmem:[%s1 + $0x3e0] sm:$0xff]
      %v454 = vld [vmem:[%s1 + $0x3e8] sm:$0xff]
      %v455 = vld [vmem:[%s1 + $0x3f0] sm:$0xff]
      %v456 = vld [vmem:[%s1 + $0x3f8] sm:$0xff]
      %v457 = vld [vmem:[%s1 + $0x400] sm:$0xff]
      %v458 = vld [vmem:[%s1 + $0x408] sm:$0xff]
      %v459 = vld [vmem:[%s1 + $0x410] sm:$0xff]
      %v460 = vld [vmem:[%s1 + $0x418] sm:$0xff]
      %v461 = vld [vmem:[%s1 + $0x420] sm:$0xff]
      %v462 = vld [vmem:[%s1 + $0x428] sm:$0xff]
      %v463 = vld [vmem:[%s1 + $0x430] sm:$0xff]
      %v464 = vld [vmem:[%s1 + $0x438] sm:$0xff]
      %v465 = vld [vmem:[%s1 + $0x440] sm:$0xff]
      %v466 = vld [vmem:[%s1 + $0x448] sm:$0xff]
      %v467 = vld [vmem:[%s1 + $0x450] sm:$0xff]
      %v468 = vld [vmem:[%s1 + $0x458] sm:$0xff]
      %v469 = vld [vmem:[%s1 + $0x460] sm:$0xff]
      %v470 = vld [vmem:[%s1 + $0x468] sm:$0xff]
      %v471 = vld [vmem:[%s1 + $0x470] sm:$0xff]
      %v472 = vld [vmem:[%s1 + $0x478] sm:$0xff]
      %v473 = vld [vmem:[%s1 + $0x480] sm:$0xff]
      %v474 = vld [vmem:[%s1 + $0x488] sm:$0xff]
      %v475 = vld [vmem:[%s1 + $0x490] sm:$0xff]
      %v476 = vld [vmem:[%s1 + $0x498] sm:$0xff]
      %v477 = vld [vmem:[%s1 + $0x4a0] sm:$0xff]
      %v478 = vld [vmem:[%s1 + $0x4a8] sm:$0xff]
      %v479 = vld [vmem:[%s1 + $0x4b0] sm:$0xff]
      %v480 = vld [vmem:[%s1 + $0x4b8] sm:$0xff]
      %v481 = vld [vmem:[%s1 + $0x4c0] sm:$0xff]
      %v482 = vld [vmem:[%s1 + $0x4c8] sm:$0xff]
      %v483 = vld [vmem:[%s1 + $0x4d0] sm:$0xff]
      %v484 = vld [vmem:[%s1 + $0x4d8] sm:$0xff]
      %v485 = vld [vmem:[%s1 + $0x4e0] sm:$0xff]
      %v486 = vld [vmem:[%s1 + $0x4e8] sm:$0xff]
      %v487 = vld [vmem:[%s1 + $0x4f0] sm:$0xff]
      %v488 = vld [vmem:[%s1 + $0x4f8] sm:$0xff]
      %v489 = vld [vmem:[%s1 + $0x500] sm:$0xff]
      %v490 = vld [vmem:[%s1 + $0x508] sm:$0xff]
      %v491 = vld [vmem:[%s1 + $0x510] sm:$0xff]
      %v492 = vld [vmem:[%s1 + $0x518] sm:$0xff]
      %v493 = vld [vmem:[%s1 + $0x520] sm:$0xff]
      %v494 = vld [vmem:[%s1 + $0x528] sm:$0xff]
      %v495 = vld [vmem:[%s1 + $0x530] sm:$0xff]
      %v496 = vld [vmem:[%s1 + $0x538] sm:$0xff]
      %v497 = vld [vmem:[%s1 + $0x540] sm:$0xff]
      %v498 = vld [vmem:[%s1 + $0x548] sm:$0xff]
      %v499 = vld [vmem:[%s1 + $0x550] sm:$0xff]
      %v500 = vld [vmem:[%s1 + $0x558] sm:$0xff]
      %v501 = vld [vmem:[%s1 + $0x560] sm:$0xff]
      %v502 = vld [vmem:[%s1 + $0x568] sm:$0xff]
      %v503 = vld [vmem:[%s1 + $0x570] sm:$0xff]
      %v504 = vld [vmem:[%s1 + $0x578] sm:$0xff]
      %v505 = vld [vmem:[%s1 + $0x580] sm:$0xff]
      %v506 = vld [vmem:[%s1 + $0x588] sm:$0xff]
      %v507 = vld [vmem:[%s1 + $0x590] sm:$0xff]
      %v508 = vld [vmem:[%s1 + $0x598] sm:$0xff]
      %v509 = vld [vmem:[%s1 + $0x5a0] sm:$0xff]
      %v510 = vld [vmem:[%s1 + $0x5a8] sm:$0xff]
      %v511 = vld [vmem:[%s1 + $0x5b0] sm:$0xff]
      %v512 = vld [vmem:[%s1 + $0x5b8] sm:$0xff]
      %v513 = vld [vmem:[%s1 + $0x5c0] sm:$0xff]
      %v514 = vld [vmem:[%s1 + $0x5c8] sm:$0xff]
      %v515 = vld [vmem:[%s1 + $0x5d0] sm:$0xff]
      %v516 = vld [vmem:[%s1 + $0x5d8] sm:$0xff]
      %v517 = vld [vmem:[%s1 + $0x5e0] sm:$0xff]
      %v518 = vld [vmem:[%s1 + $0x5e8] sm:$0xff]
      %v519 = vld [vmem:[%s1 + $0x5f0] sm:$0xff]
      %v520 = vld [vmem:[%s1 + $0x5f8] sm:$0xff]
      %v713 = vunpack.c.l.b16 %v329
      %v714 = vunpack.c.h.b16 %v329
      %v715 = vunpack.c.l.b16 %v330
      %v716 = vunpack.c.h.b16 %v330
      %v717 = vunpack.c.l.b16 %v331
      %v718 = vunpack.c.h.b16 %v331
      %v719 = vunpack.c.l.b16 %v332
      %v720 = vunpack.c.h.b16 %v332
      %v721 = vunpack.c.l.b16 %v333
      %v722 = vunpack.c.h.b16 %v333
      %v723 = vunpack.c.l.b16 %v334
      %v724 = vunpack.c.h.b16 %v334
      %v725 = vunpack.c.l.b16 %v335
      %v726 = vunpack.c.h.b16 %v335
      %v727 = vunpack.c.l.b16 %v336
      %v728 = vunpack.c.h.b16 %v336
      %v729 = vunpack.c.l.b16 %v337
      %v730 = vunpack.c.h.b16 %v337
      %v731 = vunpack.c.l.b16 %v338
      %v732 = vunpack.c.h.b16 %v338
      %v733 = vunpack.c.l.b16 %v339
      %v734 = vunpack.c.h.b16 %v339
      %v735 = vunpack.c.l.b16 %v340
      %v736 = vunpack.c.h.b16 %v340
      %v737 = vunpack.c.l.b16 %v341
      %v738 = vunpack.c.h.b16 %v341
      %v739 = vunpack.c.l.b16 %v342
      %v740 = vunpack.c.h.b16 %v342
      %v741 = vunpack.c.l.b16 %v343
      %v742 = vunpack.c.h.b16 %v343
      %v743 = vunpack.c.l.b16 %v344
      %v744 = vunpack.c.h.b16 %v344
      %v745 = vunpack.c.l.b16 %v345
      %v746 = vunpack.c.h.b16 %v345
      %v747 = vunpack.c.l.b16 %v346
      %v748 = vunpack.c.h.b16 %v346
      %v749 = vunpack.c.l.b16 %v347
      %v750 = vunpack.c.h.b16 %v347
      %v751 = vunpack.c.l.b16 %v348
      %v752 = vunpack.c.h.b16 %v348
      %v753 = vunpack.c.l.b16 %v349
      %v754 = vunpack.c.h.b16 %v349
      %v755 = vunpack.c.l.b16 %v350
      %v756 = vunpack.c.h.b16 %v350
      %v757 = vunpack.c.l.b16 %v351
      %v758 = vunpack.c.h.b16 %v351
      %v759 = vunpack.c.l.b16 %v352
      %v760 = vunpack.c.h.b16 %v352
      %v761 = vunpack.c.l.b16 %v353
      %v762 = vunpack.c.h.b16 %v353
      %v763 = vunpack.c.l.b16 %v354
      %v764 = vunpack.c.h.b16 %v354
      %v765 = vunpack.c.l.b16 %v355
      %v766 = vunpack.c.h.b16 %v355
      %v767 = vunpack.c.l.b16 %v356
      %v768 = vunpack.c.h.b16 %v356
      %v769 = vunpack.c.l.b16 %v357
      %v770 = vunpack.c.h.b16 %v357
      %v771 = vunpack.c.l.b16 %v358
      %v772 = vunpack.c.h.b16 %v358
      %v773 = vunpack.c.l.b16 %v359
      %v774 = vunpack.c.h.b16 %v359
      %v775 = vunpack.c.l.b16 %v360
      %v776 = vunpack.c.h.b16 %v360
      %v777 = vunpack.c.l.b16 %v361
      %v778 = vunpack.c.h.b16 %v361
      %v779 = vunpack.c.l.b16 %v362
      %v780 = vunpack.c.h.b16 %v362
      %v781 = vunpack.c.l.b16 %v363
      %v782 = vunpack.c.h.b16 %v363
      %v783 = vunpack.c.l.b16 %v364
      %v784 = vunpack.c.h.b16 %v364
      %v785 = vunpack.c.l.b16 %v365
      %v786 = vunpack.c.h.b16 %v365
      %v787 = vunpack.c.l.b16 %v366
      %v788 = vunpack.c.h.b16 %v366
      %v789 = vunpack.c.l.b16 %v367
      %v790 = vunpack.c.h.b16 %v367
      %v791 = vunpack.c.l.b16 %v368
      %v792 = vunpack.c.h.b16 %v368
      %v793 = vunpack.c.l.b16 %v369
      %v794 = vunpack.c.h.b16 %v369
      %v795 = vunpack.c.l.b16 %v370
      %v796 = vunpack.c.h.b16 %v370
      %v797 = vunpack.c.l.b16 %v371
      %v798 = vunpack.c.h.b16 %v371
      %v799 = vunpack.c.l.b16 %v372
      %v800 = vunpack.c.h.b16 %v372
      %v801 = vunpack.c.l.b16 %v373
      %v802 = vunpack.c.h.b16 %v373
      %v803 = vunpack.c.l.b16 %v374
      %v804 = vunpack.c.h.b16 %v374
      %v805 = vunpack.c.l.b16 %v375
      %v806 = vunpack.c.h.b16 %v375
      %v807 = vunpack.c.l.b16 %v376
      %v808 = vunpack.c.h.b16 %v376
      %v809 = vunpack.c.l.b16 %v377
      %v810 = vunpack.c.h.b16 %v377
      %v811 = vunpack.c.l.b16 %v378
      %v812 = vunpack.c.h.b16 %v378
      %v813 = vunpack.c.l.b16 %v379
      %v814 = vunpack.c.h.b16 %v379
      %v815 = vunpack.c.l.b16 %v380
      %v816 = vunpack.c.h.b16 %v380
      %v817 = vunpack.c.l.b16 %v381
      %v818 = vunpack.c.h.b16 %v381
      %v819 = vunpack.c.l.b16 %v382
      %v820 = vunpack.c.h.b16 %v382
      %v821 = vunpack.c.l.b16 %v383
      %v822 = vunpack.c.h.b16 %v383
      %v823 = vunpack.c.l.b16 %v384
      %v824 = vunpack.c.h.b16 %v384
      %v825 = vunpack.c.l.b16 %v385
      %v826 = vunpack.c.h.b16 %v385
      %v827 = vunpack.c.l.b16 %v386
      %v828 = vunpack.c.h.b16 %v386
      %v829 = vunpack.c.l.b16 %v387
      %v830 = vunpack.c.h.b16 %v387
      %v831 = vunpack.c.l.b16 %v388
      %v832 = vunpack.c.h.b16 %v388
      %v833 = vunpack.c.l.b16 %v389
      %v834 = vunpack.c.h.b16 %v389
      %v835 = vunpack.c.l.b16 %v390
      %v836 = vunpack.c.h.b16 %v390
      %v837 = vunpack.c.l.b16 %v391
      %v838 = vunpack.c.h.b16 %v391
      %v839 = vunpack.c.l.b16 %v392
      %v840 = vunpack.c.h.b16 %v392
      %v841 = vunpack.c.l.b16 %v393
      %v842 = vunpack.c.h.b16 %v393
      %v843 = vunpack.c.l.b16 %v394
      %v844 = vunpack.c.h.b16 %v394
      %v845 = vunpack.c.l.b16 %v395
      %v846 = vunpack.c.h.b16 %v395
      %v847 = vunpack.c.l.b16 %v396
      %v848 = vunpack.c.h.b16 %v396
      %v849 = vunpack.c.l.b16 %v397
      %v850 = vunpack.c.h.b16 %v397
      %v851 = vunpack.c.l.b16 %v398
      %v852 = vunpack.c.h.b16 %v398
      %v853 = vunpack.c.l.b16 %v399
      %v854 = vunpack.c.h.b16 %v399
      %v855 = vunpack.c.l.b16 %v400
      %v856 = vunpack.c.h.b16 %v400
      %v857 = vunpack.c.l.b16 %v401
      %v858 = vunpack.c.h.b16 %v401
      %v859 = vunpack.c.l.b16 %v402
      %v860 = vunpack.c.h.b16 %v402
      %v861 = vunpack.c.l.b16 %v403
      %v862 = vunpack.c.h.b16 %v403
      %v863 = vunpack.c.l.b16 %v404
      %v864 = vunpack.c.h.b16 %v404
      %v865 = vunpack.c.l.b16 %v405
      %v866 = vunpack.c.h.b16 %v405
      %v867 = vunpack.c.l.b16 %v406
      %v868 = vunpack.c.h.b16 %v406
      %v869 = vunpack.c.l.b16 %v407
      %v870 = vunpack.c.h.b16 %v407
      %v871 = vunpack.c.l.b16 %v408
      %v872 = vunpack.c.h.b16 %v408
      %v873 = vunpack.c.l.b16 %v409
      %v874 = vunpack.c.h.b16 %v409
      %v875 = vunpack.c.l.b16 %v410
      %v876 = vunpack.c.h.b16 %v410
      %v877 = vunpack.c.l.b16 %v411
      %v878 = vunpack.c.h.b16 %v411
      %v879 = vunpack.c.l.b16 %v412
      %v880 = vunpack.c.h.b16 %v412
      %v881 = vunpack.c.l.b16 %v413
      %v882 = vunpack.c.h.b16 %v413
      %v883 = vunpack.c.l.b16 %v414
      %v884 = vunpack.c.h.b16 %v414
      %v885 = vunpack.c.l.b16 %v415
      %v886 = vunpack.c.h.b16 %v415
      %v887 = vunpack.c.l.b16 %v416
      %v888 = vunpack.c.h.b16 %v416
      %v889 = vunpack.c.l.b16 %v417
      %v890 = vunpack.c.h.b16 %v417
      %v891 = vunpack.c.l.b16 %v418
      %v892 = vunpack.c.h.b16 %v418
      %v893 = vunpack.c.l.b16 %v419
      %v894 = vunpack.c.h.b16 %v419
      %v895 = vunpack.c.l.b16 %v420
      %v896 = vunpack.c.h.b16 %v420
      %v897 = vunpack.c.l.b16 %v421
      %v898 = vunpack.c.h.b16 %v421
      %v899 = vunpack.c.l.b16 %v422
      %v900 = vunpack.c.h.b16 %v422
      %v901 = vunpack.c.l.b16 %v423
      %v902 = vunpack.c.h.b16 %v423
      %v903 = vunpack.c.l.b16 %v424
      %v904 = vunpack.c.h.b16 %v424
      %v905 = vunpack.c.l.b16 %v425
      %v906 = vunpack.c.h.b16 %v425
      %v907 = vunpack.c.l.b16 %v426
      %v908 = vunpack.c.h.b16 %v426
      %v909 = vunpack.c.l.b16 %v427
      %v910 = vunpack.c.h.b16 %v427
      %v911 = vunpack.c.l.b16 %v428
      %v912 = vunpack.c.h.b16 %v428
      %v913 = vunpack.c.l.b16 %v429
      %v914 = vunpack.c.h.b16 %v429
      %v915 = vunpack.c.l.b16 %v430
      %v916 = vunpack.c.h.b16 %v430
      %v917 = vunpack.c.l.b16 %v431
      %v918 = vunpack.c.h.b16 %v431
      %v919 = vunpack.c.l.b16 %v432
      %v920 = vunpack.c.h.b16 %v432
      %v921 = vunpack.c.l.b16 %v433
      %v922 = vunpack.c.h.b16 %v433
      %v923 = vunpack.c.l.b16 %v434
      %v924 = vunpack.c.h.b16 %v434
      %v925 = vunpack.c.l.b16 %v435
      %v926 = vunpack.c.h.b16 %v435
      %v927 = vunpack.c.l.b16 %v436
      %v928 = vunpack.c.h.b16 %v436
      %v929 = vunpack.c.l.b16 %v437
      %v930 = vunpack.c.h.b16 %v437
      %v931 = vunpack.c.l.b16 %v438
      %v932 = vunpack.c.h.b16 %v438
      %v933 = vunpack.c.l.b16 %v439
      %v934 = vunpack.c.h.b16 %v439
      %v935 = vunpack.c.l.b16 %v440
      %v936 = vunpack.c.h.b16 %v440
      %v937 = vunpack.c.l.b16 %v441
      %v938 = vunpack.c.h.b16 %v441
      %v939 = vunpack.c.l.b16 %v442
      %v940 = vunpack.c.h.b16 %v442
      %v941 = vunpack.c.l.b16 %v443
      %v942 = vunpack.c.h.b16 %v443
      %v943 = vunpack.c.l.b16 %v444
      %v944 = vunpack.c.h.b16 %v444
      %v945 = vunpack.c.l.b16 %v445
      %v946 = vunpack.c.h.b16 %v445
      %v947 = vunpack.c.l.b16 %v446
      %v948 = vunpack.c.h.b16 %v446
      %v949 = vunpack.c.l.b16 %v447
      %v950 = vunpack.c.h.b16 %v447
      %v951 = vunpack.c.l.b16 %v448
      %v952 = vunpack.c.h.b16 %v448
      %v953 = vunpack.c.l.b16 %v449
      %v954 = vunpack.c.h.b16 %v449
      %v955 = vunpack.c.l.b16 %v450
      %v956 = vunpack.c.h.b16 %v450
      %v957 = vunpack.c.l.b16 %v451
      %v958 = vunpack.c.h.b16 %v451
      %v959 = vunpack.c.l.b16 %v452
      %v960 = vunpack.c.h.b16 %v452
      %v961 = vunpack.c.l.b16 %v453
      %v962 = vunpack.c.h.b16 %v453
      %v963 = vunpack.c.l.b16 %v454
      %v964 = vunpack.c.h.b16 %v454
      %v965 = vunpack.c.l.b16 %v455
      %v966 = vunpack.c.h.b16 %v455
      %v967 = vunpack.c.l.b16 %v456
      %v968 = vunpack.c.h.b16 %v456
      %v969 = vunpack.c.l.b16 %v457
      %v970 = vunpack.c.h.b16 %v457
      %v971 = vunpack.c.l.b16 %v458
      %v972 = vunpack.c.h.b16 %v458
      %v973 = vunpack.c.l.b16 %v459
      %v974 = vunpack.c.h.b16 %v459
      %v975 = vunpack.c.l.b16 %v460
      %v976 = vunpack.c.h.b16 %v460
      %v977 = vunpack.c.l.b16 %v461
      %v978 = vunpack.c.h.b16 %v461
      %v979 = vunpack.c.l.b16 %v462
      %v980 = vunpack.c.h.b16 %v462
      %v981 = vunpack.c.l.b16 %v463
      %v982 = vunpack.c.h.b16 %v463
      %v983 = vunpack.c.l.b16 %v464
      %v984 = vunpack.c.h.b16 %v464
      %v985 = vunpack.c.l.b16 %v465
      %v986 = vunpack.c.h.b16 %v465
      %v987 = vunpack.c.l.b16 %v466
      %v988 = vunpack.c.h.b16 %v466
      %v989 = vunpack.c.l.b16 %v467
      %v990 = vunpack.c.h.b16 %v467
      %v991 = vunpack.c.l.b16 %v468
      %v992 = vunpack.c.h.b16 %v468
      %v993 = vunpack.c.l.b16 %v469
      %v994 = vunpack.c.h.b16 %v469
      %v995 = vunpack.c.l.b16 %v470
      %v996 = vunpack.c.h.b16 %v470
      %v997 = vunpack.c.l.b16 %v471
      %v998 = vunpack.c.h.b16 %v471
      %v999 = vunpack.c.l.b16 %v472
      %v1000 = vunpack.c.h.b16 %v472
      %v1001 = vunpack.c.l.b16 %v473
      %v1002 = vunpack.c.h.b16 %v473
      %v1003 = vunpack.c.l.b16 %v474
      %v1004 = vunpack.c.h.b16 %v474
      %v1005 = vunpack.c.l.b16 %v475
      %v1006 = vunpack.c.h.b16 %v475
      %v1007 = vunpack.c.l.b16 %v476
      %v1008 = vunpack.c.h.b16 %v476
      %v1009 = vunpack.c.l.b16 %v477
      %v1010 = vunpack.c.h.b16 %v477
      %v1011 = vunpack.c.l.b16 %v478
      %v1012 = vunpack.c.h.b16 %v478
      %v1013 = vunpack.c.l.b16 %v479
      %v1014 = vunpack.c.h.b16 %v479
      %v1015 = vunpack.c.l.b16 %v480
      %v1016 = vunpack.c.h.b16 %v480
      %v1017 = vunpack.c.l.b16 %v481
      %v1018 = vunpack.c.h.b16 %v481
      %v1019 = vunpack.c.l.b16 %v482
      %v1020 = vunpack.c.h.b16 %v482
      %v1021 = vunpack.c.l.b16 %v483
      %v1022 = vunpack.c.h.b16 %v483
      %v1023 = vunpack.c.l.b16 %v484
      %v1024 = vunpack.c.h.b16 %v484
      %v1025 = vunpack.c.l.b16 %v485
      %v1026 = vunpack.c.h.b16 %v485
      %v1027 = vunpack.c.l.b16 %v486
      %v1028 = vunpack.c.h.b16 %v486
      %v1029 = vunpack.c.l.b16 %v487
      %v1030 = vunpack.c.h.b16 %v487
      %v1031 = vunpack.c.l.b16 %v488
      %v1032 = vunpack.c.h.b16 %v488
      %v1033 = vunpack.c.l.b16 %v489
      %v1034 = vunpack.c.h.b16 %v489
      %v1035 = vunpack.c.l.b16 %v490
      %v1036 = vunpack.c.h.b16 %v490
      %v1037 = vunpack.c.l.b16 %v491
      %v1038 = vunpack.c.h.b16 %v491
      %v1039 = vunpack.c.l.b16 %v492
      %v1040 = vunpack.c.h.b16 %v492
      %v1041 = vunpack.c.l.b16 %v493
      %v1042 = vunpack.c.h.b16 %v493
      %v1043 = vunpack.c.l.b16 %v494
      %v1044 = vunpack.c.h.b16 %v494
      %v1045 = vunpack.c.l.b16 %v495
      %v1046 = vunpack.c.h.b16 %v495
      %v1047 = vunpack.c.l.b16 %v496
      %v1048 = vunpack.c.h.b16 %v496
      %v1049 = vunpack.c.l.b16 %v497
      %v1050 = vunpack.c.h.b16 %v497
      %v1051 = vunpack.c.l.b16 %v498
      %v1052 = vunpack.c.h.b16 %v498
      %v1053 = vunpack.c.l.b16 %v499
      %v1054 = vunpack.c.h.b16 %v499
      %v1055 = vunpack.c.l.b16 %v500
      %v1056 = vunpack.c.h.b16 %v500
      %v1057 = vunpack.c.l.b16 %v501
      %v1058 = vunpack.c.h.b16 %v501
      %v1059 = vunpack.c.l.b16 %v502
      %v1060 = vunpack.c.h.b16 %v502
      %v1061 = vunpack.c.l.b16 %v503
      %v1062 = vunpack.c.h.b16 %v503
      %v1063 = vunpack.c.l.b16 %v504
      %v1064 = vunpack.c.h.b16 %v504
      %v1065 = vunpack.c.l.b16 %v505
      %v1066 = vunpack.c.h.b16 %v505
      %v1067 = vunpack.c.l.b16 %v506
      %v1068 = vunpack.c.h.b16 %v506
      %v1069 = vunpack.c.l.b16 %v507
      %v1070 = vunpack.c.h.b16 %v507
      %v1071 = vunpack.c.l.b16 %v508
      %v1072 = vunpack.c.h.b16 %v508
      %v1073 = vunpack.c.l.b16 %v509
      %v1074 = vunpack.c.h.b16 %v509
      %v1075 = vunpack.c.l.b16 %v510
      %v1076 = vunpack.c.h.b16 %v510
      %v1077 = vunpack.c.l.b16 %v511
      %v1078 = vunpack.c.h.b16 %v511
      %v1079 = vunpack.c.l.b16 %v512
      %v1080 = vunpack.c.h.b16 %v512
      %v1081 = vunpack.c.l.b16 %v513
      %v1082 = vunpack.c.h.b16 %v513
      %v1083 = vunpack.c.l.b16 %v514
      %v1084 = vunpack.c.h.b16 %v514
      %v1085 = vunpack.c.l.b16 %v515
      %v1086 = vunpack.c.h.b16 %v515
      %v1087 = vunpack.c.l.b16 %v516
      %v1088 = vunpack.c.h.b16 %v516
      %v1089 = vunpack.c.l.b16 %v517
      %v1090 = vunpack.c.h.b16 %v517
      %v1091 = vunpack.c.l.b16 %v518
      %v1092 = vunpack.c.h.b16 %v518
      %v1093 = vunpack.c.l.b16 %v519
      %v1094 = vunpack.c.h.b16 %v519
      %v1095 = vunpack.c.l.b16 %v520
      %v1096 = vunpack.c.h.b16 %v520
      %v1097 = vpack.c.b16 %v717, %v713
      %v1098 = vpack.c.b16 %v718, %v714
      %v1099 = vpack.c.b16 %v719, %v715
      %v1100 = vpack.c.b16 %v720, %v716
      %v1101 = vpack.c.b16 %v725, %v721
      %v1102 = vpack.c.b16 %v726, %v722
      %v1103 = vpack.c.b16 %v727, %v723
      %v1104 = vpack.c.b16 %v728, %v724
      %v1105 = vpack.c.b16 %v733, %v729
      %v1106 = vpack.c.b16 %v734, %v730
      %v1107 = vpack.c.b16 %v735, %v731
      %v1108 = vpack.c.b16 %v736, %v732
      %v1109 = vpack.c.b16 %v741, %v737
      %v1110 = vpack.c.b16 %v742, %v738
      %v1111 = vpack.c.b16 %v743, %v739
      %v1112 = vpack.c.b16 %v744, %v740
      %v1113 = vpack.c.b16 %v749, %v745
      %v1114 = vpack.c.b16 %v750, %v746
      %v1115 = vpack.c.b16 %v751, %v747
      %v1116 = vpack.c.b16 %v752, %v748
      %v1117 = vpack.c.b16 %v757, %v753
      %v1118 = vpack.c.b16 %v758, %v754
      %v1119 = vpack.c.b16 %v759, %v755
      %v1120 = vpack.c.b16 %v760, %v756
      %v1121 = vpack.c.b16 %v765, %v761
      %v1122 = vpack.c.b16 %v766, %v762
      %v1123 = vpack.c.b16 %v767, %v763
      %v1124 = vpack.c.b16 %v768, %v764
      %v1125 = vpack.c.b16 %v773, %v769
      %v1126 = vpack.c.b16 %v774, %v770
      %v1127 = vpack.c.b16 %v775, %v771
      %v1128 = vpack.c.b16 %v776, %v772
      %v1129 = vpack.c.b16 %v781, %v777
      %v1130 = vpack.c.b16 %v782, %v778
      %v1131 = vpack.c.b16 %v783, %v779
      %v1132 = vpack.c.b16 %v784, %v780
      %v1133 = vpack.c.b16 %v789, %v785
      %v1134 = vpack.c.b16 %v790, %v786
      %v1135 = vpack.c.b16 %v791, %v787
      %v1136 = vpack.c.b16 %v792, %v788
      %v1137 = vpack.c.b16 %v797, %v793
      %v1138 = vpack.c.b16 %v798, %v794
      %v1139 = vpack.c.b16 %v799, %v795
      %v1140 = vpack.c.b16 %v800, %v796
      %v1141 = vpack.c.b16 %v805, %v801
      %v1142 = vpack.c.b16 %v806, %v802
      %v1143 = vpack.c.b16 %v807, %v803
      %v1144 = vpack.c.b16 %v808, %v804
      %v1145 = vpack.c.b16 %v813, %v809
      %v1146 = vpack.c.b16 %v814, %v810
      %v1147 = vpack.c.b16 %v815, %v811
      %v1148 = vpack.c.b16 %v816, %v812
      %v1149 = vpack.c.b16 %v821, %v817
      %v1150 = vpack.c.b16 %v822, %v818
      %v1151 = vpack.c.b16 %v823, %v819
      %v1152 = vpack.c.b16 %v824, %v820
      %v1153 = vpack.c.b16 %v829, %v825
      %v1154 = vpack.c.b16 %v830, %v826
      %v1155 = vpack.c.b16 %v831, %v827
      %v1156 = vpack.c.b16 %v832, %v828
      %v1157 = vpack.c.b16 %v837, %v833
      %v1158 = vpack.c.b16 %v838, %v834
      %v1159 = vpack.c.b16 %v839, %v835
      %v1160 = vpack.c.b16 %v840, %v836
      %v1161 = vpack.c.b16 %v845, %v841
      %v1162 = vpack.c.b16 %v846, %v842
      %v1163 = vpack.c.b16 %v847, %v843
      %v1164 = vpack.c.b16 %v848, %v844
      %v1165 = vpack.c.b16 %v853, %v849
      %v1166 = vpack.c.b16 %v854, %v850
      %v1167 = vpack.c.b16 %v855, %v851
      %v1168 = vpack.c.b16 %v856, %v852
      %v1169 = vpack.c.b16 %v861, %v857
      %v1170 = vpack.c.b16 %v862, %v858
      %v1171 = vpack.c.b16 %v863, %v859
      %v1172 = vpack.c.b16 %v864, %v860
      %v1173 = vpack.c.b16 %v869, %v865
      %v1174 = vpack.c.b16 %v870, %v866
      %v1175 = vpack.c.b16 %v871, %v867
      %v1176 = vpack.c.b16 %v872, %v868
      %v1177 = vpack.c.b16 %v877, %v873
      %v1178 = vpack.c.b16 %v878, %v874
      %v1179 = vpack.c.b16 %v879, %v875
      %v1180 = vpack.c.b16 %v880, %v876
      %v1181 = vpack.c.b16 %v885, %v881
      %v1182 = vpack.c.b16 %v886, %v882
      %v1183 = vpack.c.b16 %v887, %v883
      %v1184 = vpack.c.b16 %v888, %v884
      %v1185 = vpack.c.b16 %v893, %v889
      %v1186 = vpack.c.b16 %v894, %v890
      %v1187 = vpack.c.b16 %v895, %v891
      %v1188 = vpack.c.b16 %v896, %v892
      %v1189 = vpack.c.b16 %v901, %v897
      %v1190 = vpack.c.b16 %v902, %v898
      %v1191 = vpack.c.b16 %v903, %v899
      %v1192 = vpack.c.b16 %v904, %v900
      %v1193 = vpack.c.b16 %v909, %v905
      %v1194 = vpack.c.b16 %v910, %v906
      %v1195 = vpack.c.b16 %v911, %v907
      %v1196 = vpack.c.b16 %v912, %v908
      %v1197 = vpack.c.b16 %v917, %v913
      %v1198 = vpack.c.b16 %v918, %v914
      %v1199 = vpack.c.b16 %v919, %v915
      %v1200 = vpack.c.b16 %v920, %v916
      %v1201 = vpack.c.b16 %v925, %v921
      %v1202 = vpack.c.b16 %v926, %v922
      %v1203 = vpack.c.b16 %v927, %v923
      %v1204 = vpack.c.b16 %v928, %v924
      %v1205 = vpack.c.b16 %v933, %v929
      %v1206 = vpack.c.b16 %v934, %v930
      %v1207 = vpack.c.b16 %v935, %v931
      %v1208 = vpack.c.b16 %v936, %v932
      %v1209 = vpack.c.b16 %v941, %v937
      %v1210 = vpack.c.b16 %v942, %v938
      %v1211 = vpack.c.b16 %v943, %v939
      %v1212 = vpack.c.b16 %v944, %v940
      %v1213 = vpack.c.b16 %v949, %v945
      %v1214 = vpack.c.b16 %v950, %v946
      %v1215 = vpack.c.b16 %v951, %v947
      %v1216 = vpack.c.b16 %v952, %v948
      %v1217 = vpack.c.b16 %v957, %v953
      %v1218 = vpack.c.b16 %v958, %v954
      %v1219 = vpack.c.b16 %v959, %v955
      %v1220 = vpack.c.b16 %v960, %v956
      %v1221 = vpack.c.b16 %v965, %v961
      %v1222 = vpack.c.b16 %v966, %v962
      %v1223 = vpack.c.b16 %v967, %v963
      %v1224 = vpack.c.b16 %v968, %v964
      %v1225 = vpack.c.b16 %v973, %v969
      %v1226 = vpack.c.b16 %v974, %v970
      %v1227 = vpack.c.b16 %v975, %v971
      %v1228 = vpack.c.b16 %v976, %v972
      %v1229 = vpack.c.b16 %v981, %v977
      %v1230 = vpack.c.b16 %v982, %v978
      %v1231 = vpack.c.b16 %v983, %v979
      %v1232 = vpack.c.b16 %v984, %v980
      %v1233 = vpack.c.b16 %v989, %v985
      %v1234 = vpack.c.b16 %v990, %v986
      %v1235 = vpack.c.b16 %v991, %v987
      %v1236 = vpack.c.b16 %v992, %v988
      %v1237 = vpack.c.b16 %v997, %v993
      %v1238 = vpack.c.b16 %v998, %v994
      %v1239 = vpack.c.b16 %v999, %v995
      %v1240 = vpack.c.b16 %v1000, %v996
      %v1241 = vpack.c.b16 %v1005, %v1001
      %v1242 = vpack.c.b16 %v1006, %v1002
      %v1243 = vpack.c.b16 %v1007, %v1003
      %v1244 = vpack.c.b16 %v1008, %v1004
      %v1245 = vpack.c.b16 %v1013, %v1009
      %v1246 = vpack.c.b16 %v1014, %v1010
      %v1247 = vpack.c.b16 %v1015, %v1011
      %v1248 = vpack.c.b16 %v1016, %v1012
      %v1249 = vpack.c.b16 %v1021, %v1017
      %v1250 = vpack.c.b16 %v1022, %v1018
      %v1251 = vpack.c.b16 %v1023, %v1019
      %v1252 = vpack.c.b16 %v1024, %v1020
      %v1253 = vpack.c.b16 %v1029, %v1025
      %v1254 = vpack.c.b16 %v1030, %v1026
      %v1255 = vpack.c.b16 %v1031, %v1027
      %v1256 = vpack.c.b16 %v1032, %v1028
      %v1257 = vpack.c.b16 %v1037, %v1033
      %v1258 = vpack.c.b16 %v1038, %v1034
      %v1259 = vpack.c.b16 %v1039, %v1035
      %v1260 = vpack.c.b16 %v1040, %v1036
      %v1261 = vpack.c.b16 %v1045, %v1041
      %v1262 = vpack.c.b16 %v1046, %v1042
      %v1263 = vpack.c.b16 %v1047, %v1043
      %v1264 = vpack.c.b16 %v1048, %v1044
      %v1265 = vpack.c.b16 %v1053, %v1049
      %v1266 = vpack.c.b16 %v1054, %v1050
      %v1267 = vpack.c.b16 %v1055, %v1051
      %v1268 = vpack.c.b16 %v1056, %v1052
      %v1269 = vpack.c.b16 %v1061, %v1057
      %v1270 = vpack.c.b16 %v1062, %v1058
      %v1271 = vpack.c.b16 %v1063, %v1059
      %v1272 = vpack.c.b16 %v1064, %v1060
      %v1273 = vpack.c.b16 %v1069, %v1065
      %v1274 = vpack.c.b16 %v1070, %v1066
      %v1275 = vpack.c.b16 %v1071, %v1067
      %v1276 = vpack.c.b16 %v1072, %v1068
      %v1277 = vpack.c.b16 %v1077, %v1073
      %v1278 = vpack.c.b16 %v1078, %v1074
      %v1279 = vpack.c.b16 %v1079, %v1075
      %v1280 = vpack.c.b16 %v1080, %v1076
      %v1281 = vpack.c.b16 %v1085, %v1081
      %v1282 = vpack.c.b16 %v1086, %v1082
      %v1283 = vpack.c.b16 %v1087, %v1083
      %v1284 = vpack.c.b16 %v1088, %v1084
      %v1285 = vpack.c.b16 %v1093, %v1089
      %v1286 = vpack.c.b16 %v1094, %v1090
      %v1287 = vpack.c.b16 %v1095, %v1091
      %v1288 = vpack.c.b16 %v1096, %v1092
      %1481 = vmatprep.subr.bf16.mxu0 %v1126
      %1482 = vmatpush1.bf16.msra.mxu0 %v1125
      %1483 = vmatprep.subr.bf16.mxu0 %v1122
      %1484 = vmatpush1.bf16.msra.mxu0 %v1121
      %1485 = vmatprep.subr.bf16.mxu0 %v1118
      %1486 = vmatpush1.bf16.msra.mxu0 %v1117
      %1487 = vmatprep.subr.bf16.mxu0 %v1114
      %1488 = vmatpush1.bf16.msra.mxu0 %v1113
      %1489 = vmatprep.subr.bf16.mxu0 %v1110
      %1490 = vmatpush1.bf16.msra.mxu0 %v1109
      %1491 = vmatprep.subr.bf16.mxu0 %v1106
      %1492 = vmatpush1.bf16.msra.mxu0 %v1105
      %1493 = vmatprep.subr.bf16.mxu0 %v1102
      %1494 = vmatpush1.bf16.msra.mxu0 %v1101
      %1495 = vmatprep.subr.bf16.mxu0 %v1098
      %1496 = vmatpush1.bf16.msra.mxu0 %v1097
      %1497 = vmatprep.subr.bf16.mxu0 %v1158
      %1498 = vmatpush2.bf16.msra.mxu0 %v1157
      %1499 = vmatprep.subr.bf16.mxu0 %v1154
      %1500 = vmatpush2.bf16.msra.mxu0 %v1153
      %1501 = vmatprep.subr.bf16.mxu0 %v1150
      %1502 = vmatpush2.bf16.msra.mxu0 %v1149
      %1503 = vmatprep.subr.bf16.mxu0 %v1146
      %1504 = vmatpush2.bf16.msra.mxu0 %v1145
      %1505 = vmatprep.subr.bf16.mxu0 %v1142
      %1506 = vmatpush2.bf16.msra.mxu0 %v1141
      %1507 = vmatprep.subr.bf16.mxu0 %v1138
      %1508 = vmatpush2.bf16.msra.mxu0 %v1137
      %1509 = vmatprep.subr.bf16.mxu0 %v1134
      %1510 = vmatpush2.bf16.msra.mxu0 %v1133
      %1511 = vmatprep.subr.bf16.mxu0 %v1130
      %1512 = vmatpush2.bf16.msra.mxu0 %v1129
      %1513 = vmatprep.mubr.bf16.mxu0 %v324
      %1514 = vmatmul.mubr.bf16.gmra.mxu0 %v323
      %v1515 = vpop.f32.mrf.mxu0
      %v1516 = vadd.f32 0.0, %v1515
      %v1517 = vpop.f32.mrf.mxu0
      %v1518 = vadd.f32 0.0, %v1517
      %v1519 = vpop.f32.mrf.mxu0
      %v1520 = vadd.f32 0.0, %v1519
      %v1521 = vpop.f32.mrf.mxu0
      %v1522 = vadd.f32 0.0, %v1521
      %1523 = vdwg.mxu0
      %1524 = vmatprep.subr.bf16.mxu0 %v1190
      %1525 = vmatpush1.bf16.msra.mxu0 %v1189
      %1526 = vmatprep.subr.bf16.mxu0 %v1186
      %1527 = vmatpush1.bf16.msra.mxu0 %v1185
      %1528 = vmatprep.subr.bf16.mxu0 %v1182
      %1529 = vmatpush1.bf16.msra.mxu0 %v1181
      %1530 = vmatprep.subr.bf16.mxu0 %v1178
      %1531 = vmatpush1.bf16.msra.mxu0 %v1177
      %1532 = vmatprep.subr.bf16.mxu0 %v1174
      %1533 = vmatpush1.bf16.msra.mxu0 %v1173
      %1534 = vmatprep.subr.bf16.mxu0 %v1170
      %1535 = vmatpush1.bf16.msra.mxu0 %v1169
      %1536 = vmatprep.subr.bf16.mxu0 %v1166
      %1537 = vmatpush1.bf16.msra.mxu0 %v1165
      %1538 = vmatprep.subr.bf16.mxu0 %v1162
      %1539 = vmatpush1.bf16.msra.mxu0 %v1161
      %1540 = vmatprep.subr.bf16.mxu0 %v1222
      %1541 = vmatpush2.bf16.msra.mxu0 %v1221
      %1542 = vmatprep.subr.bf16.mxu0 %v1218
      %1543 = vmatpush2.bf16.msra.mxu0 %v1217
      %1544 = vmatprep.subr.bf16.mxu0 %v1214
      %1545 = vmatpush2.bf16.msra.mxu0 %v1213
      %1546 = vmatprep.subr.bf16.mxu0 %v1210
      %1547 = vmatpush2.bf16.msra.mxu0 %v1209
      %1548 = vmatprep.subr.bf16.mxu0 %v1206
      %1549 = vmatpush2.bf16.msra.mxu0 %v1205
      %1550 = vmatprep.subr.bf16.mxu0 %v1202
      %1551 = vmatpush2.bf16.msra.mxu0 %v1201
      %1552 = vmatprep.subr.bf16.mxu0 %v1198
      %1553 = vmatpush2.bf16.msra.mxu0 %v1197
      %1554 = vmatprep.subr.bf16.mxu0 %v1194
      %1555 = vmatpush2.bf16.msra.mxu0 %v1193
      %1556 = vmatprep.mubr.bf16.mxu0 %v326
      %1557 = vmatmul.mubr.bf16.gmra.mxu0 %v325
      %v1558 = vpop.f32.mrf.mxu0
      %v1559 = vadd.f32 %v1516, %v1558
      %v1560 = vpop.f32.mrf.mxu0
      %v1561 = vadd.f32 %v1518, %v1560
      %v1562 = vpop.f32.mrf.mxu0
      %v1563 = vadd.f32 %v1520, %v1562
      %v1564 = vpop.f32.mrf.mxu0
      %v1565 = vadd.f32 %v1522, %v1564
      %1566 = vdwg.mxu0
      %1567 = vmatprep.subr.bf16.mxu0 %v1254
      %1568 = vmatpush1.bf16.msra.mxu0 %v1253
      %1569 = vmatprep.subr.bf16.mxu0 %v1250
      %1570 = vmatpush1.bf16.msra.mxu0 %v1249
      %1571 = vmatprep.subr.bf16.mxu0 %v1246
      %1572 = vmatpush1.bf16.msra.mxu0 %v1245
      %1573 = vmatprep.subr.bf16.mxu0 %v1242
      %1574 = vmatpush1.bf16.msra.mxu0 %v1241
      %1575 = vmatprep.subr.bf16.mxu0 %v1238
      %1576 = vmatpush1.bf16.msra.mxu0 %v1237
      %1577 = vmatprep.subr.bf16.mxu0 %v1234
      %1578 = vmatpush1.bf16.msra.mxu0 %v1233
      %1579 = vmatprep.subr.bf16.mxu0 %v1230
      %1580 = vmatpush1.bf16.msra.mxu0 %v1229
      %1581 = vmatprep.subr.bf16.mxu0 %v1226
      %1582 = vmatpush1.bf16.msra.mxu0 %v1225
      %1583 = vmatprep.subr.bf16.mxu0 %v1286
      %1584 = vmatpush2.bf16.msra.mxu0 %v1285
      %1585 = vmatprep.subr.bf16.mxu0 %v1282
      %1586 = vmatpush2.bf16.msra.mxu0 %v1281
      %1587 = vmatprep.subr.bf16.mxu0 %v1278
      %1588 = vmatpush2.bf16.msra.mxu0 %v1277
      %1589 = vmatprep.subr.bf16.mxu0 %v1274
      %1590 = vmatpush2.bf16.msra.mxu0 %v1273
      %1591 = vmatprep.subr.bf16.mxu0 %v1270
      %1592 = vmatpush2.bf16.msra.mxu0 %v1269
      %1593 = vmatprep.subr.bf16.mxu0 %v1266
      %1594 = vmatpush2.bf16.msra.mxu0 %v1265
      %1595 = vmatprep.subr.bf16.mxu0 %v1262
      %1596 = vmatpush2.bf16.msra.mxu0 %v1261
      %1597 = vmatprep.subr.bf16.mxu0 %v1258
      %1598 = vmatpush2.bf16.msra.mxu0 %v1257
      %1599 = vmatprep.mubr.bf16.mxu0 %v328
      %1600 = vmatmul.mubr.bf16.gmra.mxu0 %v327
      %v1601 = vpop.f32.mrf.mxu0
      %v1602 = vadd.f32 %v1559, %v1601
      %v1603 = vpop.f32.mrf.mxu0
      %v1604 = vadd.f32 %v1561, %v1603
      %v1605 = vpop.f32.mrf.mxu0
      %v1606 = vadd.f32 %v1563, %v1605
      %v1607 = vpop.f32.mrf.mxu0
      %v1608 = vadd.f32 %v1565, %v1607
      %1609 = vdwg.mxu0
      %1610 = vmatprep.subr.bf16.mxu0 %v1128
      %1611 = vmatpush1.bf16.msra.mxu0 %v1127
      %1612 = vmatprep.subr.bf16.mxu0 %v1124
      %1613 = vmatpush1.bf16.msra.mxu0 %v1123
      %1614 = vmatprep.subr.bf16.mxu0 %v1120
      %1615 = vmatpush1.bf16.msra.mxu0 %v1119
      %1616 = vmatprep.subr.bf16.mxu0 %v1116
      %1617 = vmatpush1.bf16.msra.mxu0 %v1115
      %1618 = vmatprep.subr.bf16.mxu0 %v1112
      %1619 = vmatpush1.bf16.msra.mxu0 %v1111
      %1620 = vmatprep.subr.bf16.mxu0 %v1108
      %1621 = vmatpush1.bf16.msra.mxu0 %v1107
      %1622 = vmatprep.subr.bf16.mxu0 %v1104
      %1623 = vmatpush1.bf16.msra.mxu0 %v1103
      %1624 = vmatprep.subr.bf16.mxu0 %v1100
      %1625 = vmatpush1.bf16.msra.mxu0 %v1099
      %1626 = vmatprep.subr.bf16.mxu0 %v1160
      %1627 = vmatpush2.bf16.msra.mxu0 %v1159
      %1628 = vmatprep.subr.bf16.mxu0 %v1156
      %1629 = vmatpush2.bf16.msra.mxu0 %v1155
      %1630 = vmatprep.subr.bf16.mxu0 %v1152
      %1631 = vmatpush2.bf16.msra.mxu0 %v1151
      %1632 = vmatprep.subr.bf16.mxu0 %v1148
      %1633 = vmatpush2.bf16.msra.mxu0 %v1147
      %1634 = vmatprep.subr.bf16.mxu0 %v1144
      %1635 = vmatpush2.bf16.msra.mxu0 %v1143
      %1636 = vmatprep.subr.bf16.mxu0 %v1140
      %1637 = vmatpush2.bf16.msra.mxu0 %v1139
      %1638 = vmatprep.subr.bf16.mxu0 %v1136
      %1639 = vmatpush2.bf16.msra.mxu0 %v1135
      %1640 = vmatprep.subr.bf16.mxu0 %v1132
      %1641 = vmatpush2.bf16.msra.mxu0 %v1131
      %1642 = vmatprep.mubr.bf16.mxu0 %v324
      %1643 = vmatmul.mubr.bf16.gmra.mxu0 %v323
      %v1644 = vpop.f32.mrf.mxu0
      %v1645 = vadd.f32 0.0, %v1644
      %v1646 = vpop.f32.mrf.mxu0
      %v1647 = vadd.f32 0.0, %v1646
      %v1648 = vpop.f32.mrf.mxu0
      %v1649 = vadd.f32 0.0, %v1648
      %v1650 = vpop.f32.mrf.mxu0
      %v1651 = vadd.f32 0.0, %v1650
      %1652 = vdwg.mxu0
      %1653 = vmatprep.subr.bf16.mxu0 %v1192
      %1654 = vmatpush1.bf16.msra.mxu0 %v1191
      %1655 = vmatprep.subr.bf16.mxu0 %v1188
      %1656 = vmatpush1.bf16.msra.mxu0 %v1187
      %1657 = vmatprep.subr.bf16.mxu0 %v1184
      %1658 = vmatpush1.bf16.msra.mxu0 %v1183
      %1659 = vmatprep.subr.bf16.mxu0 %v1180
      %1660 = vmatpush1.bf16.msra.mxu0 %v1179
      %1661 = vmatprep.subr.bf16.mxu0 %v1176
      %1662 = vmatpush1.bf16.msra.mxu0 %v1175
      %1663 = vmatprep.subr.bf16.mxu0 %v1172
      %1664 = vmatpush1.bf16.msra.mxu0 %v1171
      %1665 = vmatprep.subr.bf16.mxu0 %v1168
      %1666 = vmatpush1.bf16.msra.mxu0 %v1167
      %1667 = vmatprep.subr.bf16.mxu0 %v1164
      %1668 = vmatpush1.bf16.msra.mxu0 %v1163
      %1669 = vmatprep.subr.bf16.mxu0 %v1224
      %1670 = vmatpush2.bf16.msra.mxu0 %v1223
      %1671 = vmatprep.subr.bf16.mxu0 %v1220
      %1672 = vmatpush2.bf16.msra.mxu0 %v1219
      %1673 = vmatprep.subr.bf16.mxu0 %v1216
      %1674 = vmatpush2.bf16.msra.mxu0 %v1215
      %1675 = vmatprep.subr.bf16.mxu0 %v1212
      %1676 = vmatpush2.bf16.msra.mxu0 %v1211
      %1677 = vmatprep.subr.bf16.mxu0 %v1208
      %1678 = vmatpush2.bf16.msra.mxu0 %v1207
      %1679 = vmatprep.subr.bf16.mxu0 %v1204
      %1680 = vmatpush2.bf16.msra.mxu0 %v1203
      %1681 = vmatprep.subr.bf16.mxu0 %v1200
      %1682 = vmatpush2.bf16.msra.mxu0 %v1199
      %1683 = vmatprep.subr.bf16.mxu0 %v1196
      %1684 = vmatpush2.bf16.msra.mxu0 %v1195
      %1685 = vmatprep.mubr.bf16.mxu0 %v326
      %1686 = vmatmul.mubr.bf16.gmra.mxu0 %v325
      %v1687 = vpop.f32.mrf.mxu0
      %v1688 = vadd.f32 %v1645, %v1687
      %v1689 = vpop.f32.mrf.mxu0
      %v1690 = vadd.f32 %v1647, %v1689
      %v1691 = vpop.f32.mrf.mxu0
      %v1692 = vadd.f32 %v1649, %v1691
      %v1693 = vpop.f32.mrf.mxu0
      %v1694 = vadd.f32 %v1651, %v1693
      %1695 = vdwg.mxu0
      %1696 = vmatprep.subr.bf16.mxu0 %v1256
      %1697 = vmatpush1.bf16.msra.mxu0 %v1255
      %1698 = vmatprep.subr.bf16.mxu0 %v1252
      %1699 = vmatpush1.bf16.msra.mxu0 %v1251
      %1700 = vmatprep.subr.bf16.mxu0 %v1248
      %1701 = vmatpush1.bf16.msra.mxu0 %v1247
      %1702 = vmatprep.subr.bf16.mxu0 %v1244
      %1703 = vmatpush1.bf16.msra.mxu0 %v1243
      %1704 = vmatprep.subr.bf16.mxu0 %v1240
      %1705 = vmatpush1.bf16.msra.mxu0 %v1239
      %1706 = vmatprep.subr.bf16.mxu0 %v1236
      %1707 = vmatpush1.bf16.msra.mxu0 %v1235
      %1708 = vmatprep.subr.bf16.mxu0 %v1232
      %1709 = vmatpush1.bf16.msra.mxu0 %v1231
      %1710 = vmatprep.subr.bf16.mxu0 %v1228
      %1711 = vmatpush1.bf16.msra.mxu0 %v1227
      %1712 = vmatprep.subr.bf16.mxu0 %v1288
      %1713 = vmatpush2.bf16.msra.mxu0 %v1287
      %1714 = vmatprep.subr.bf16.mxu0 %v1284
      %1715 = vmatpush2.bf16.msra.mxu0 %v1283
      %1716 = vmatprep.subr.bf16.mxu0 %v1280
      %1717 = vmatpush2.bf16.msra.mxu0 %v1279
      %1718 = vmatprep.subr.bf16.mxu0 %v1276
      %1719 = vmatpush2.bf16.msra.mxu0 %v1275
      %1720 = vmatprep.subr.bf16.mxu0 %v1272
      %1721 = vmatpush2.bf16.msra.mxu0 %v1271
      %1722 = vmatprep.subr.bf16.mxu0 %v1268
      %1723 = vmatpush2.bf16.msra.mxu0 %v1267
      %1724 = vmatprep.subr.bf16.mxu0 %v1264
      %1725 = vmatpush2.bf16.msra.mxu0 %v1263
      %1726 = vmatprep.subr.bf16.mxu0 %v1260
      %1727 = vmatpush2.bf16.msra.mxu0 %v1259
      %1728 = vmatprep.mubr.bf16.mxu0 %v328
      %1729 = vmatmul.mubr.bf16.gmra.mxu0 %v327
      %v1730 = vpop.f32.mrf.mxu0
      %v1731 = vadd.f32 %v1688, %v1730
      %v1732 = vpop.f32.mrf.mxu0
      %v1733 = vadd.f32 %v1690, %v1732
      %v1734 = vpop.f32.mrf.mxu0
      %v1735 = vadd.f32 %v1692, %v1734
      %v1736 = vpop.f32.mrf.mxu0
      %v1737 = vadd.f32 %v1694, %v1736
      %1738 = vdwg.mxu0
      %v1739 = vrot.slane %v1602, 4
      %v1740 = vadd.f32 %v1602, %v1739
      %v1741 = vrot.slane %v1740, 2
      %v1742 = vadd.f32 %v1740, %v1741
      %v1743 = vrot.slane %v1742, 1
      %v1744 = vadd.f32 %v1742, %v1743
      %v1745 = vrot.slane %v1604, 4
      %v1746 = vadd.f32 %v1604, %v1745
      %v1747 = vrot.slane %v1746, 2
      %v1748 = vadd.f32 %v1746, %v1747
      %v1749 = vrot.slane %v1748, 1
      %v1750 = vadd.f32 %v1748, %v1749
      %v1751 = vrot.slane %v1731, 4
      %v1752 = vadd.f32 %v1731, %v1751
      %v1753 = vrot.slane %v1752, 2
      %v1754 = vadd.f32 %v1752, %v1753
      %v1755 = vrot.slane %v1754, 1
      %v1756 = vadd.f32 %v1754, %v1755
      %v1757 = vrot.slane %v1733, 4
      %v1758 = vadd.f32 %v1733, %v1757
      %v1759 = vrot.slane %v1758, 2
      %v1760 = vadd.f32 %v1758, %v1759
      %v1761 = vrot.slane %v1760, 1
      %v1762 = vadd.f32 %v1760, %v1761
      %v1763 = vrot.slane %v1606, 4
      %v1764 = vadd.f32 %v1606, %v1763
      %v1765 = vrot.slane %v1764, 2
      %v1766 = vadd.f32 %v1764, %v1765
      %v1767 = vrot.slane %v1766, 1
      %v1768 = vadd.f32 %v1766, %v1767
      %v1769 = vrot.slane %v1608, 4
      %v1770 = vadd.f32 %v1608, %v1769
      %v1771 = vrot.slane %v1770, 2
      %v1772 = vadd.f32 %v1770, %v1771
      %v1773 = vrot.slane %v1772, 1
      %v1774 = vadd.f32 %v1772, %v1773
      %v1775 = vrot.slane %v1735, 4
      %v1776 = vadd.f32 %v1735, %v1775
      %v1777 = vrot.slane %v1776, 2
      %v1778 = vadd.f32 %v1776, %v1777
      %v1779 = vrot.slane %v1778, 1
      %v1780 = vadd.f32 %v1778, %v1779
      %v1781 = vrot.slane %v1737, 4
      %v1782 = vadd.f32 %v1737, %v1781
      %v1783 = vrot.slane %v1782, 2
      %v1784 = vadd.f32 %v1782, %v1783
      %v1785 = vrot.slane %v1784, 1
      %v1786 = vadd.f32 %v1784, %v1785
      %v1787 = vmul.f32 %v1602, %v1602
      %v1788 = vmul.f32 %v1604, %v1604
      %v1789 = vmul.f32 %v1731, %v1731
      %v1790 = vmul.f32 %v1733, %v1733
      %v1791 = vmul.f32 %v1606, %v1606
      %v1792 = vmul.f32 %v1608, %v1608
      %v1793 = vmul.f32 %v1735, %v1735
      %v1794 = vmul.f32 %v1737, %v1737
      %v1795 = vrot.slane %v1787, 4
      %v1796 = vadd.f32 %v1787, %v1795
      %v1797 = vrot.slane %v1796, 2
      %v1798 = vadd.f32 %v1796, %v1797
      %v1799 = vrot.slane %v1798, 1
      %v1800 = vadd.f32 %v1798, %v1799
      %v1801 = vrot.slane %v1788, 4
      %v1802 = vadd.f32 %v1788, %v1801
      %v1803 = vrot.slane %v1802, 2
      %v1804 = vadd.f32 %v1802, %v1803
      %v1805 = vrot.slane %v1804, 1
      %v1806 = vadd.f32 %v1804, %v1805
      %v1807 = vrot.slane %v1789, 4
      %v1808 = vadd.f32 %v1789, %v1807
      %v1809 = vrot.slane %v1808, 2
      %v1810 = vadd.f32 %v1808, %v1809
      %v1811 = vrot.slane %v1810, 1
      %v1812 = vadd.f32 %v1810, %v1811
      %v1813 = vrot.slane %v1790, 4
      %v1814 = vadd.f32 %v1790, %v1813
      %v1815 = vrot.slane %v1814, 2
      %v1816 = vadd.f32 %v1814, %v1815
      %v1817 = vrot.slane %v1816, 1
      %v1818 = vadd.f32 %v1816, %v1817
      %v1819 = vrot.slane %v1791, 4
      %v1820 = vadd.f32 %v1791, %v1819
      %v1821 = vrot.slane %v1820, 2
      %v1822 = vadd.f32 %v1820, %v1821
      %v1823 = vrot.slane %v1822, 1
      %v1824 = vadd.f32 %v1822, %v1823
      %v1825 = vrot.slane %v1792, 4
      %v1826 = vadd.f32 %v1792, %v1825
      %v1827 = vrot.slane %v1826, 2
      %v1828 = vadd.f32 %v1826, %v1827
      %v1829 = vrot.slane %v1828, 1
      %v1830 = vadd.f32 %v1828, %v1829
      %v1831 = vrot.slane %v1793, 4
      %v1832 = vadd.f32 %v1793, %v1831
      %v1833 = vrot.slane %v1832, 2
      %v1834 = vadd.f32 %v1832, %v1833
      %v1835 = vrot.slane %v1834, 1
      %v1836 = vadd.f32 %v1834, %v1835
      %v1837 = vrot.slane %v1794, 4
      %v1838 = vadd.f32 %v1794, %v1837
      %v1839 = vrot.slane %v1838, 2
      %v1840 = vadd.f32 %v1838, %v1839
      %v1841 = vrot.slane %v1840, 1
      %v1842 = vadd.f32 %v1840, %v1841
      %vm1851 = vcmask 1041409
      %v1852 = vsel %vm1851, %v1768, %v1744
      %v1853 = vsel %vm1851, %v1774, %v1750
      %v1854 = vsel %vm1851, %v1780, %v1756
      %v1855 = vsel %vm1851, %v1786, %v1762
      %vm1868 = vcmask 1043459
      %v1869 = vsel %vm1868, %v1824, %v1800
      %v1870 = vsel %vm1868, %v1830, %v1806
      %v1871 = vsel %vm1868, %v1836, %v1812
      %v1872 = vsel %vm1868, %v1842, %v1818
      %vm1877 = vcmask 1041408
      %v1878 = vsel %vm1877, %v1852, %v1869
      %v1879 = vsel %vm1877, %v1853, %v1870
      %v1880 = vsel %vm1877, %v1854, %v1871
      %v1881 = vsel %vm1877, %v1855, %v1872
      %v1882 = vld [vmem:[%s3] sm:$0xff]
      %v1883 = vld [vmem:[%s3 + $0x8] sm:$0xff]
      %v1884 = vld [vmem:[%s3 + $0x10] sm:$0xff]
      %v1885 = vld [vmem:[%s3 + $0x18] sm:$0xff]
      %v1886 = vld [vmem:[%s3 + $0x20] sm:$0xff]
      %v1887 = vld [vmem:[%s3 + $0x28] sm:$0xff]
      %v1888 = vld [vmem:[%s3 + $0x30] sm:$0xff]
      %v1889 = vld [vmem:[%s3 + $0x38] sm:$0xff]
      %v1890 = vld [vmem:[%s3 + $0x40] sm:$0xff]
      %v1891 = vld [vmem:[%s3 + $0x48] sm:$0xff]
      %v1892 = vld [vmem:[%s3 + $0x50] sm:$0xff]
      %v1893 = vld [vmem:[%s3 + $0x58] sm:$0xff]
      %v1894 = vld [vmem:[%s3 + $0x60] sm:$0xff]
      %v1895 = vld [vmem:[%s3 + $0x68] sm:$0xff]
      %v1896 = vld [vmem:[%s3 + $0x70] sm:$0xff]
      %v1897 = vld [vmem:[%s3 + $0x78] sm:$0xff]
      %v1898 = vld [vmem:[%s3 + $0x80] sm:$0xff]
      %v1899 = vld [vmem:[%s3 + $0x88] sm:$0xff]
      %v1900 = vld [vmem:[%s3 + $0x90] sm:$0xff]
      %v1901 = vld [vmem:[%s3 + $0x98] sm:$0xff]
      %v1902 = vld [vmem:[%s3 + $0xa0] sm:$0xff]
      %v1903 = vld [vmem:[%s3 + $0xa8] sm:$0xff]
      %v1904 = vld [vmem:[%s3 + $0xb0] sm:$0xff]
      %v1905 = vld [vmem:[%s3 + $0xb8] sm:$0xff]
      %v1906 = vld [vmem:[%s3 + $0xc0] sm:$0xff]
      %v1907 = vld [vmem:[%s3 + $0xc8] sm:$0xff]
      %v1908 = vld [vmem:[%s3 + $0xd0] sm:$0xff]
      %v1909 = vld [vmem:[%s3 + $0xd8] sm:$0xff]
      %v1910 = vld [vmem:[%s3 + $0xe0] sm:$0xff]
      %v1911 = vld [vmem:[%s3 + $0xe8] sm:$0xff]
      %v1912 = vld [vmem:[%s3 + $0xf0] sm:$0xff]
      %v1913 = vld [vmem:[%s3 + $0xf8] sm:$0xff]
      %v1914 = vld [vmem:[%s3 + $0x100] sm:$0xff]
      %v1915 = vld [vmem:[%s3 + $0x108] sm:$0xff]
      %v1916 = vld [vmem:[%s3 + $0x110] sm:$0xff]
      %v1917 = vld [vmem:[%s3 + $0x118] sm:$0xff]
      %v1918 = vld [vmem:[%s3 + $0x120] sm:$0xff]
      %v1919 = vld [vmem:[%s3 + $0x128] sm:$0xff]
      %v1920 = vld [vmem:[%s3 + $0x130] sm:$0xff]
      %v1921 = vld [vmem:[%s3 + $0x138] sm:$0xff]
      %v1922 = vld [vmem:[%s3 + $0x140] sm:$0xff]
      %v1923 = vld [vmem:[%s3 + $0x148] sm:$0xff]
      %v1924 = vld [vmem:[%s3 + $0x150] sm:$0xff]
      %v1925 = vld [vmem:[%s3 + $0x158] sm:$0xff]
      %v1926 = vld [vmem:[%s3 + $0x160] sm:$0xff]
      %v1927 = vld [vmem:[%s3 + $0x168] sm:$0xff]
      %v1928 = vld [vmem:[%s3 + $0x170] sm:$0xff]
      %v1929 = vld [vmem:[%s3 + $0x178] sm:$0xff]
      %v1930 = vld [vmem:[%s3 + $0x180] sm:$0xff]
      %v1931 = vld [vmem:[%s3 + $0x188] sm:$0xff]
      %v1932 = vld [vmem:[%s3 + $0x190] sm:$0xff]
      %v1933 = vld [vmem:[%s3 + $0x198] sm:$0xff]
      %v1934 = vld [vmem:[%s3 + $0x1a0] sm:$0xff]
      %v1935 = vld [vmem:[%s3 + $0x1a8] sm:$0xff]
      %v1936 = vld [vmem:[%s3 + $0x1b0] sm:$0xff]
      %v1937 = vld [vmem:[%s3 + $0x1b8] sm:$0xff]
      %v1938 = vld [vmem:[%s3 + $0x1c0] sm:$0xff]
      %v1939 = vld [vmem:[%s3 + $0x1c8] sm:$0xff]
      %v1940 = vld [vmem:[%s3 + $0x1d0] sm:$0xff]
      %v1941 = vld [vmem:[%s3 + $0x1d8] sm:$0xff]
      %v1942 = vld [vmem:[%s3 + $0x1e0] sm:$0xff]
      %v1943 = vld [vmem:[%s3 + $0x1e8] sm:$0xff]
      %v1944 = vld [vmem:[%s3 + $0x1f0] sm:$0xff]
      %v1945 = vld [vmem:[%s3 + $0x1f8] sm:$0xff]
      %1946 = vmatprep.subr.mxu0 0.0
      %1947 = vmatpush1.msra.mxu0 %v1897
      %1948 = vmatprep.subr.mxu0 0.0
      %1949 = vmatpush1.msra.mxu0 %v1896
      %1950 = vmatprep.subr.mxu0 0.0
      %1951 = vmatpush1.msra.mxu0 %v1895
      %1952 = vmatprep.subr.mxu0 0.0
      %1953 = vmatpush1.msra.mxu0 %v1894
      %1954 = vmatprep.subr.mxu0 0.0
      %1955 = vmatpush1.msra.mxu0 %v1893
      %1956 = vmatprep.subr.mxu0 0.0
      %1957 = vmatpush1.msra.mxu0 %v1892
      %1958 = vmatprep.subr.mxu0 0.0
      %1959 = vmatpush1.msra.mxu0 %v1891
      %1960 = vmatprep.subr.mxu0 0.0
      %1961 = vmatpush1.msra.mxu0 %v1890
      %1962 = vmatprep.subr.mxu0 0.0
      %1963 = vmatpush1.msra.mxu0 %v1889
      %1964 = vmatprep.subr.mxu0 0.0
      %1965 = vmatpush1.msra.mxu0 %v1888
      %1966 = vmatprep.subr.mxu0 0.0
      %1967 = vmatpush1.msra.mxu0 %v1887
      %1968 = vmatprep.subr.mxu0 0.0
      %1969 = vmatpush1.msra.mxu0 %v1886
      %1970 = vmatprep.subr.mxu0 0.0
      %1971 = vmatpush1.msra.mxu0 %v1885
      %1972 = vmatprep.subr.mxu0 0.0
      %1973 = vmatpush1.msra.mxu0 %v1884
      %1974 = vmatprep.subr.mxu0 0.0
      %1975 = vmatpush1.msra.mxu0 %v1883
      %1976 = vmatprep.subr.mxu0 0.0
      %1977 = vmatpush1.msra.mxu0 %v1882
      %1978 = vmatprep.subr.mxu0 0.0
      %1979 = vmatpush2.msra.mxu0 %v1913
      %1980 = vmatprep.subr.mxu0 0.0
      %1981 = vmatpush2.msra.mxu0 %v1912
      %1982 = vmatprep.subr.mxu0 0.0
      %1983 = vmatpush2.msra.mxu0 %v1911
      %1984 = vmatprep.subr.mxu0 0.0
      %1985 = vmatpush2.msra.mxu0 %v1910
      %1986 = vmatprep.subr.mxu0 0.0
      %1987 = vmatpush2.msra.mxu0 %v1909
      %1988 = vmatprep.subr.mxu0 0.0
      %1989 = vmatpush2.msra.mxu0 %v1908
      %1990 = vmatprep.subr.mxu0 0.0
      %1991 = vmatpush2.msra.mxu0 %v1907
      %1992 = vmatprep.subr.mxu0 0.0
      %1993 = vmatpush2.msra.mxu0 %v1906
      %1994 = vmatprep.subr.mxu0 0.0
      %1995 = vmatpush2.msra.mxu0 %v1905
      %1996 = vmatprep.subr.mxu0 0.0
      %1997 = vmatpush2.msra.mxu0 %v1904
      %1998 = vmatprep.subr.mxu0 0.0
      %1999 = vmatpush2.msra.mxu0 %v1903
      %2000 = vmatprep.subr.mxu0 0.0
      %2001 = vmatpush2.msra.mxu0 %v1902
      %2002 = vmatprep.subr.mxu0 0.0
      %2003 = vmatpush2.msra.mxu0 %v1901
      %2004 = vmatprep.subr.mxu0 0.0
      %2005 = vmatpush2.msra.mxu0 %v1900
      %2006 = vmatprep.subr.mxu0 0.0
      %2007 = vmatpush2.msra.mxu0 %v1899
      %2008 = vmatprep.subr.mxu0 0.0
      %2009 = vmatpush2.msra.mxu0 %v1898
      %2010 = vmatprep.mubr.f32.mxu0 %v1879
      %2011 = vmatmul.mubr.f32.gmra.mxu0 %v1878
      %v2012 = vpop.f32.mrf.mxu0
      %v2013 = vadd.f32 0.0, %v2012
      %v2014 = vpop.f32.mrf.mxu0
      %2015 = vdwg.mxu0
      %2016 = vmatprep.subr.mxu0 0.0
      %2017 = vmatpush1.msra.mxu0 %v1929
      %2018 = vmatprep.subr.mxu0 0.0
      %2019 = vmatpush1.msra.mxu0 %v1928
      %2020 = vmatprep.subr.mxu0 0.0
      %2021 = vmatpush1.msra.mxu0 %v1927
      %2022 = vmatprep.subr.mxu0 0.0
      %2023 = vmatpush1.msra.mxu0 %v1926
      %2024 = vmatprep.subr.mxu0 0.0
      %2025 = vmatpush1.msra.mxu0 %v1925
      %2026 = vmatprep.subr.mxu0 0.0
      %2027 = vmatpush1.msra.mxu0 %v1924
      %2028 = vmatprep.subr.mxu0 0.0
      %2029 = vmatpush1.msra.mxu0 %v1923
      %2030 = vmatprep.subr.mxu0 0.0
      %2031 = vmatpush1.msra.mxu0 %v1922
      %2032 = vmatprep.subr.mxu0 0.0
      %2033 = vmatpush1.msra.mxu0 %v1921
      %2034 = vmatprep.subr.mxu0 0.0
      %2035 = vmatpush1.msra.mxu0 %v1920
      %2036 = vmatprep.subr.mxu0 0.0
      %2037 = vmatpush1.msra.mxu0 %v1919
      %2038 = vmatprep.subr.mxu0 0.0
      %2039 = vmatpush1.msra.mxu0 %v1918
      %2040 = vmatprep.subr.mxu0 0.0
      %2041 = vmatpush1.msra.mxu0 %v1917
      %2042 = vmatprep.subr.mxu0 0.0
      %2043 = vmatpush1.msra.mxu0 %v1916
      %2044 = vmatprep.subr.mxu0 0.0
      %2045 = vmatpush1.msra.mxu0 %v1915
      %2046 = vmatprep.subr.mxu0 0.0
      %2047 = vmatpush1.msra.mxu0 %v1914
      %2048 = vmatprep.subr.mxu0 0.0
      %2049 = vmatpush2.msra.mxu0 %v1945
      %2050 = vmatprep.subr.mxu0 0.0
      %2051 = vmatpush2.msra.mxu0 %v1944
      %2052 = vmatprep.subr.mxu0 0.0
      %2053 = vmatpush2.msra.mxu0 %v1943
      %2054 = vmatprep.subr.mxu0 0.0
      %2055 = vmatpush2.msra.mxu0 %v1942
      %2056 = vmatprep.subr.mxu0 0.0
      %2057 = vmatpush2.msra.mxu0 %v1941
      %2058 = vmatprep.subr.mxu0 0.0
      %2059 = vmatpush2.msra.mxu0 %v1940
      %2060 = vmatprep.subr.mxu0 0.0
      %2061 = vmatpush2.msra.mxu0 %v1939
      %2062 = vmatprep.subr.mxu0 0.0
      %2063 = vmatpush2.msra.mxu0 %v1938
      %2064 = vmatprep.subr.mxu0 0.0
      %2065 = vmatpush2.msra.mxu0 %v1937
      %2066 = vmatprep.subr.mxu0 0.0
      %2067 = vmatpush2.msra.mxu0 %v1936
      %2068 = vmatprep.subr.mxu0 0.0
      %2069 = vmatpush2.msra.mxu0 %v1935
      %2070 = vmatprep.subr.mxu0 0.0
      %2071 = vmatpush2.msra.mxu0 %v1934
      %2072 = vmatprep.subr.mxu0 0.0
      %2073 = vmatpush2.msra.mxu0 %v1933
      %2074 = vmatprep.subr.mxu0 0.0
      %2075 = vmatpush2.msra.mxu0 %v1932
      %2076 = vmatprep.subr.mxu0 0.0
      %2077 = vmatpush2.msra.mxu0 %v1931
      %2078 = vmatprep.subr.mxu0 0.0
      %2079 = vmatpush2.msra.mxu0 %v1930
      %2080 = vmatprep.mubr.f32.mxu0 %v1881
      %2081 = vmatmul.mubr.f32.gmra.mxu0 %v1880
      %v2082 = vpop.f32.mrf.mxu0
      %v2083 = vadd.f32 %v2013, %v2082
      %v2084 = vpop.f32.mrf.mxu0
      %2085 = vdwg.mxu0
      %v2086 = vmul.f32 %v2083, 0.001953125
      %v2087 = vmul.f32 %v2086, %v2086
      %v2089 = vrot.slane %v2087, 6
      %v2091 = vsub.f32 %v2086, %v2089
      %v2092 = vmax.f32 %v2091, 0.0
      %v2093 = vadd.f32 %v2092, 1e-05
      %v2094 = vrsqrt.pop %v2093
      %v2095 = vsel %vm1877, %v2086, %v2094
      %v2096 = vld [vmem:[%s4] sm:$0xff]
      %v2097 = vld [vmem:[%s4 + $0x8] sm:$0xff]
      %v2098 = vld [vmem:[%s4 + $0x10] sm:$0xff]
      %v2099 = vld [vmem:[%s4 + $0x18] sm:$0xff]
      %vm2100 = vcmask 64512
      %v2102 = vsel %vm2100, %v2095, 0
      %2104 = vmatprep.subr.mxu0 0.0
      %2105 = vmatpush1.msra.mxu0 0.0
      %2106 = vmatprep.subr.mxu0 0.0
      %2107 = vmatpush1.msra.mxu0 0.0
      %2108 = vmatprep.subr.mxu0 0.0
      %2109 = vmatpush1.msra.mxu0 0.0
      %2110 = vmatprep.subr.mxu0 0.0
      %2111 = vmatpush1.msra.mxu0 0.0
      %2112 = vmatprep.subr.mxu0 0.0
      %2113 = vmatpush1.msra.mxu0 0.0
      %2114 = vmatprep.subr.mxu0 0.0
      %2115 = vmatpush1.msra.mxu0 0.0
      %2116 = vmatprep.subr.mxu0 0.0
      %2117 = vmatpush1.msra.mxu0 0.0
      %2118 = vmatprep.subr.mxu0 0.0
      %2119 = vmatpush1.msra.mxu0 0.0
      %2120 = vmatprep.subr.mxu0 0.0
      %2121 = vmatpush1.msra.mxu0 0.0
      %2122 = vmatprep.subr.mxu0 0.0
      %2123 = vmatpush1.msra.mxu0 0.0
      %2124 = vmatprep.subr.mxu0 0.0
      %2125 = vmatpush1.msra.mxu0 0.0
      %2126 = vmatprep.subr.mxu0 0.0
      %2127 = vmatpush1.msra.mxu0 0.0
      %2128 = vmatprep.subr.mxu0 0.0
      %2129 = vmatpush1.msra.mxu0 0.0
      %2130 = vmatprep.subr.mxu0 0.0
      %2131 = vmatpush1.msra.mxu0 0.0
      %2132 = vmatprep.subr.mxu0 0.0
      %2133 = vmatpush1.msra.mxu0 0.0
      %2134 = vmatprep.subr.mxu0 %v2097
      %2135 = vmatpush1.msra.mxu0 %v2096
      %2136 = vmatprep.subr.mxu0 0.0
      %2137 = vmatpush2.msra.mxu0 0.0
      %2138 = vmatprep.subr.mxu0 0.0
      %2139 = vmatpush2.msra.mxu0 0.0
      %2140 = vmatprep.subr.mxu0 0.0
      %2141 = vmatpush2.msra.mxu0 0.0
      %2142 = vmatprep.subr.mxu0 0.0
      %2143 = vmatpush2.msra.mxu0 0.0
      %2144 = vmatprep.subr.mxu0 0.0
      %2145 = vmatpush2.msra.mxu0 0.0
      %2146 = vmatprep.subr.mxu0 0.0
      %2147 = vmatpush2.msra.mxu0 0.0
      %2148 = vmatprep.subr.mxu0 0.0
      %2149 = vmatpush2.msra.mxu0 0.0
      %2150 = vmatprep.subr.mxu0 0.0
      %2151 = vmatpush2.msra.mxu0 0.0
      %2152 = vmatprep.subr.mxu0 0.0
      %2153 = vmatpush2.msra.mxu0 0.0
      %2154 = vmatprep.subr.mxu0 0.0
      %2155 = vmatpush2.msra.mxu0 0.0
      %2156 = vmatprep.subr.mxu0 0.0
      %2157 = vmatpush2.msra.mxu0 0.0
      %2158 = vmatprep.subr.mxu0 0.0
      %2159 = vmatpush2.msra.mxu0 0.0
      %2160 = vmatprep.subr.mxu0 0.0
      %2161 = vmatpush2.msra.mxu0 0.0
      %2162 = vmatprep.subr.mxu0 0.0
      %2163 = vmatpush2.msra.mxu0 0.0
      %2164 = vmatprep.subr.mxu0 0.0
      %2165 = vmatpush2.msra.mxu0 0.0
      %2166 = vmatprep.subr.mxu0 0.0
      %2167 = vmatpush2.msra.mxu0 0.0
      %2168 = vmatprep.mubr.f32.mxu0 0.0
      %2169 = vmatmul.mubr.f32.gmra.mxu0 %v2102
      %v2170 = vpop.f32.mrf.mxu0
      %v2171 = vadd.f32 0.0, %v2170
      %v2172 = vpop.f32.mrf.mxu0
      %v2173 = vadd.f32 0.0, %v2172
      %2174 = vdwg.mxu0
      %2175 = vmatprep.subr.mxu0 0.0
      %2176 = vmatpush1.msra.mxu0 0.0
      %2177 = vmatprep.subr.mxu0 0.0
      %2178 = vmatpush1.msra.mxu0 0.0
      %2179 = vmatprep.subr.mxu0 0.0
      %2180 = vmatpush1.msra.mxu0 0.0
      %2181 = vmatprep.subr.mxu0 0.0
      %2182 = vmatpush1.msra.mxu0 0.0
      %2183 = vmatprep.subr.mxu0 0.0
      %2184 = vmatpush1.msra.mxu0 0.0
      %2185 = vmatprep.subr.mxu0 0.0
      %2186 = vmatpush1.msra.mxu0 0.0
      %2187 = vmatprep.subr.mxu0 0.0
      %2188 = vmatpush1.msra.mxu0 0.0
      %2189 = vmatprep.subr.mxu0 0.0
      %2190 = vmatpush1.msra.mxu0 0.0
      %2191 = vmatprep.subr.mxu0 0.0
      %2192 = vmatpush1.msra.mxu0 0.0
      %2193 = vmatprep.subr.mxu0 0.0
      %2194 = vmatpush1.msra.mxu0 0.0
      %2195 = vmatprep.subr.mxu0 0.0
      %2196 = vmatpush1.msra.mxu0 0.0
      %2197 = vmatprep.subr.mxu0 0.0
      %2198 = vmatpush1.msra.mxu0 0.0
      %2199 = vmatprep.subr.mxu0 0.0
      %2200 = vmatpush1.msra.mxu0 0.0
      %2201 = vmatprep.subr.mxu0 0.0
      %2202 = vmatpush1.msra.mxu0 0.0
      %2203 = vmatprep.subr.mxu0 0.0
      %2204 = vmatpush1.msra.mxu0 0.0
      %2205 = vmatprep.subr.mxu0 %v2099
      %2206 = vmatpush1.msra.mxu0 %v2098
      %2207 = vmatprep.subr.mxu0 0.0
      %2208 = vmatpush2.msra.mxu0 0.0
      %2209 = vmatprep.subr.mxu0 0.0
      %2210 = vmatpush2.msra.mxu0 0.0
      %2211 = vmatprep.subr.mxu0 0.0
      %2212 = vmatpush2.msra.mxu0 0.0
      %2213 = vmatprep.subr.mxu0 0.0
      %2214 = vmatpush2.msra.mxu0 0.0
      %2215 = vmatprep.subr.mxu0 0.0
      %2216 = vmatpush2.msra.mxu0 0.0
      %2217 = vmatprep.subr.mxu0 0.0
      %2218 = vmatpush2.msra.mxu0 0.0
      %2219 = vmatprep.subr.mxu0 0.0
      %2220 = vmatpush2.msra.mxu0 0.0
      %2221 = vmatprep.subr.mxu0 0.0
      %2222 = vmatpush2.msra.mxu0 0.0
      %2223 = vmatprep.subr.mxu0 0.0
      %2224 = vmatpush2.msra.mxu0 0.0
      %2225 = vmatprep.subr.mxu0 0.0
      %2226 = vmatpush2.msra.mxu0 0.0
      %2227 = vmatprep.subr.mxu0 0.0
      %2228 = vmatpush2.msra.mxu0 0.0
      %2229 = vmatprep.subr.mxu0 0.0
      %2230 = vmatpush2.msra.mxu0 0.0
      %2231 = vmatprep.subr.mxu0 0.0
      %2232 = vmatpush2.msra.mxu0 0.0
      %2233 = vmatprep.subr.mxu0 0.0
      %2234 = vmatpush2.msra.mxu0 0.0
      %2235 = vmatprep.subr.mxu0 0.0
      %2236 = vmatpush2.msra.mxu0 0.0
      %2237 = vmatprep.subr.mxu0 0.0
      %2238 = vmatpush2.msra.mxu0 0.0
      %2239 = vmatprep.mubr.f32.mxu0 0.0
      %2240 = vmatmul.mubr.f32.gmra.mxu0 %v2102
      %v2241 = vpop.f32.mrf.mxu0
      %v2242 = vadd.f32 0.0, %v2241
      %v2243 = vpop.f32.mrf.mxu0
      %v2244 = vadd.f32 0.0, %v2243
      %2245 = vdwg.mxu0
      %v2250 = vcombine.low %v2171, %v2173
      %v2251 = vcombine.low %v2242, %v2244
      %v2253 = vunpack.c.l.s4 1966171168
      %v2254 = vunpack.c.0.s8 %v2253
      %v2255 = vlaneseq
      %v2256 = vshrl.u32 %v2255, 7
      %v2257 = vsub.s32 %v2254, %v2256
      %v2258 = vrot.slane %v2250, %v2257
      %v2260 = vunpack.c.l.s4 1966171168
      %v2261 = vunpack.c.0.s8 %v2260
      %v2262 = vlaneseq
      %v2263 = vshrl.u32 %v2262, 7
      %v2264 = vsub.s32 %v2261, %v2263
      %v2265 = vrot.slane %v2251, %v2264
      %v2266 = vcombine.low %v2258, %v2265
      %v2267 = vcombine.high %v2258, %v2265
      %v2269 = vunpack.c.l.s4 1966171168
      %v2270 = vunpack.c.0.s8 %v2269
      %v2271 = vlaneseq
      %v2272 = vshrl.u32 %v2271, 7
      %v2273 = vsub.s32 %v2270, %v2272
      %v2274 = vrot.slane %v2266, %v2273
      %v2276 = vunpack.c.l.s4 1966171168
      %v2277 = vunpack.c.0.s8 %v2276
      %v2278 = vlaneseq
      %v2279 = vshrl.u32 %v2278, 7
      %v2280 = vsub.s32 %v2277, %v2279
      %v2281 = vrot.slane %v2267, %v2280
      %v2282 = vlaneseq
      %v2283 = vshrl.u32 %v2282, 7
      %v2284 = vsub.s32 0, %v2283
      %v2285 = vrot.slane %v2274, %v2284
      %v2286 = vlaneseq
      %v2287 = vshrl.u32 %v2286, 7
      %v2288 = vsub.s32 1, %v2287
      %v2289 = vrot.slane %v2274, %v2288
      %v2290 = vlaneseq
      %v2291 = vshrl.u32 %v2290, 7
      %v2292 = vsub.s32 2, %v2291
      %v2293 = vrot.slane %v2274, %v2292
      %v2294 = vlaneseq
      %v2295 = vshrl.u32 %v2294, 7
      %v2296 = vsub.s32 3, %v2295
      %v2297 = vrot.slane %v2274, %v2296
      %v2298 = vlaneseq
      %v2299 = vshrl.u32 %v2298, 7
      %v2300 = vsub.s32 0, %v2299
      %v2301 = vrot.slane %v2281, %v2300
      %v2302 = vlaneseq
      %v2303 = vshrl.u32 %v2302, 7
      %v2304 = vsub.s32 1, %v2303
      %v2305 = vrot.slane %v2281, %v2304
      %v2306 = vlaneseq
      %v2307 = vshrl.u32 %v2306, 7
      %v2308 = vsub.s32 2, %v2307
      %v2309 = vrot.slane %v2281, %v2308
      %v2310 = vlaneseq
      %v2311 = vshrl.u32 %v2310, 7
      %v2312 = vsub.s32 3, %v2311
      %v2313 = vrot.slane %v2281, %v2312
      %v2322 = vsub.f32 %v1602, %v2285
      %v2323 = vsub.f32 %v1604, %v2289
      %v2324 = vsub.f32 %v1731, %v2293
      %v2325 = vsub.f32 %v1733, %v2297
      %v2326 = vsub.f32 %v1606, %v2301
      %v2327 = vsub.f32 %v1608, %v2305
      %v2328 = vsub.f32 %v1735, %v2309
      %v2329 = vsub.f32 %v1737, %v2313
      %v2330 = vcombine.high %v2274, %v2274
      %v2331 = vcombine.high %v2281, %v2281
      %v2332 = vlaneseq
      %v2333 = vshrl.u32 %v2332, 7
      %v2334 = vsub.s32 0, %v2333
      %v2335 = vrot.slane %v2330, %v2334
      %v2336 = vlaneseq
      %v2337 = vshrl.u32 %v2336, 7
      %v2338 = vsub.s32 1, %v2337
      %v2339 = vrot.slane %v2330, %v2338
      %v2340 = vlaneseq
      %v2341 = vshrl.u32 %v2340, 7
      %v2342 = vsub.s32 2, %v2341
      %v2343 = vrot.slane %v2330, %v2342
      %v2344 = vlaneseq
      %v2345 = vshrl.u32 %v2344, 7
      %v2346 = vsub.s32 3, %v2345
      %v2347 = vrot.slane %v2330, %v2346
      %v2348 = vlaneseq
      %v2349 = vshrl.u32 %v2348, 7
      %v2350 = vsub.s32 0, %v2349
      %v2351 = vrot.slane %v2331, %v2350
      %v2352 = vlaneseq
      %v2353 = vshrl.u32 %v2352, 7
      %v2354 = vsub.s32 1, %v2353
      %v2355 = vrot.slane %v2331, %v2354
      %v2356 = vlaneseq
      %v2357 = vshrl.u32 %v2356, 7
      %v2358 = vsub.s32 2, %v2357
      %v2359 = vrot.slane %v2331, %v2358
      %v2360 = vlaneseq
      %v2361 = vshrl.u32 %v2360, 7
      %v2362 = vsub.s32 3, %v2361
      %v2363 = vrot.slane %v2331, %v2362
      %v2372 = vmul.f32 %v2322, %v2335
      %v2373 = vmul.f32 %v2323, %v2339
      %v2374 = vmul.f32 %v2324, %v2343
      %v2375 = vmul.f32 %v2325, %v2347
      %v2376 = vmul.f32 %v2326, %v2351
      %v2377 = vmul.f32 %v2327, %v2355
      %v2378 = vmul.f32 %v2328, %v2359
      %v2379 = vmul.f32 %v2329, %v2363
      %vm2380 = vcmp.ge.f32.partialorder %v2372, 0.0
      %vm2381 = vcmp.ge.f32.partialorder %v2373, 0.0
      %vm2382 = vcmp.ge.f32.partialorder %v2374, 0.0
      %vm2383 = vcmp.ge.f32.partialorder %v2375, 0.0
      %vm2384 = vcmp.ge.f32.partialorder %v2376, 0.0
      %vm2385 = vcmp.ge.f32.partialorder %v2377, 0.0
      %vm2386 = vcmp.ge.f32.partialorder %v2378, 0.0
      %vm2387 = vcmp.ge.f32.partialorder %v2379, 0.0
      %v2388 = vmul.f32 %v2372, 0.01
      %v2389 = vmul.f32 %v2373, 0.01
      %v2390 = vmul.f32 %v2374, 0.01
      %v2391 = vmul.f32 %v2375, 0.01
      %v2392 = vmul.f32 %v2376, 0.01
      %v2393 = vmul.f32 %v2377, 0.01
      %v2394 = vmul.f32 %v2378, 0.01
      %v2395 = vmul.f32 %v2379, 0.01
      %v2396 = vsel %vm2380, %v2372, %v2388
      %v2397 = vsel %vm2381, %v2373, %v2389
      %v2398 = vsel %vm2382, %v2374, %v2390
      %v2399 = vsel %vm2383, %v2375, %v2391
      %v2400 = vsel %vm2384, %v2376, %v2392
      %v2401 = vsel %vm2385, %v2377, %v2393
      %v2402 = vsel %vm2386, %v2378, %v2394
      %v2403 = vsel %vm2387, %v2379, %v2395
      %vm2404 = vcmp.lt.s32.totalorder %v233, 512
      %vm2405 = vmand %vm234, %vm2404
      %2406 = vst.msk [vmem:[#allocation3] ss:$8 sm:$0xf] %vm2405, 0.0
      %2407 = vst.msk [vmem:[#allocation3] ss:$8 sm:$0x0] %vm2405, 0.0
      %s2408 = scalar_lea.vmem [#allocation3], 64
      %2409 = vst.msk [vmem:[%s2408] ss:$8 sm:$0xf] %vm2405, 0.0
      %2410 = vst.msk [vmem:[%s2408] ss:$8 sm:$0x0] %vm2405, 0.0
      %s2411 = scalar_lea.vmem [#allocation3], 33
      %2412 = vst.msk [vmem:[%s2411] ss:$8 sm:$0xf] %vm2405, 0.0
      %2413 = vst.msk [vmem:[%s2411] ss:$8 sm:$0x0] %vm2405, 0.0
      %s2414 = scalar_lea.vmem [#allocation3], 97
      %2415 = vst.msk [vmem:[%s2414] ss:$8 sm:$0xf] %vm2405, 0.0
      %2416 = vst.msk [vmem:[%s2414] ss:$8 sm:$0x0] %vm2405, 0.0
      %v2425 = vrot.slane %v2396, 7
      %v2426 = vrot.slane %v2397, 7
      %v2427 = vrot.slane %v2398, 7
      %v2428 = vrot.slane %v2399, 7
      %v2429 = vrot.slane %v2400, 7
      %v2430 = vrot.slane %v2401, 7
      %v2431 = vrot.slane %v2402, 7
      %v2432 = vrot.slane %v2403, 7
      %2441 = vst [vmem:[#allocation3] sm:$0xfe] %v2425
      %2442 = vst [vmem:[#allocation3 + $0x8] sm:$0xfe] %v2426
      %2443 = vst [vmem:[#allocation3 + $0x10] sm:$0xfe] %v2427
      %2444 = vst [vmem:[#allocation3 + $0x18] sm:$0xfe] %v2428
      %2445 = vst [vmem:[#allocation3 + $0x20] sm:$0x1] %v2425
      %2446 = vst [vmem:[#allocation3 + $0x28] sm:$0x1] %v2426
      %2447 = vst [vmem:[#allocation3 + $0x30] sm:$0x1] %v2427
      %2448 = vst [vmem:[#allocation3 + $0x38] sm:$0x1] %v2428
      %2449 = vst [vmem:[#allocation3 + $0x40] sm:$0xfe] %v2429
      %2450 = vst [vmem:[#allocation3 + $0x48] sm:$0xfe] %v2430
      %2451 = vst [vmem:[#allocation3 + $0x50] sm:$0xfe] %v2431
      %2452 = vst [vmem:[#allocation3 + $0x58] sm:$0xfe] %v2432
      %2453 = vst [vmem:[#allocation3 + $0x60] sm:$0x1] %v2429
      %2454 = vst [vmem:[#allocation3 + $0x68] sm:$0x1] %v2430
      %2455 = vst [vmem:[#allocation3 + $0x70] sm:$0x1] %v2431
      %2456 = vst [vmem:[#allocation3 + $0x78] sm:$0x1] %v2432
      %v2457 = vld [vmem:[#allocation3] sm:$0xff]
      %v2458 = vld [vmem:[#allocation3 + $0x8] sm:$0xff]
      %v2459 = vld [vmem:[#allocation3 + $0x10] sm:$0xff]
      %v2460 = vld [vmem:[#allocation3 + $0x18] sm:$0xff]
      %v2461 = vld [vmem:[#allocation3 + $0x20] sm:$0x3]
      %v2462 = vld [vmem:[#allocation3 + $0x28] sm:$0x3]
      %v2463 = vld [vmem:[#allocation3 + $0x30] sm:$0x3]
      %v2464 = vld [vmem:[#allocation3 + $0x38] sm:$0x3]
      %v2473 = vrot.slane %v2457, 1
      %v2474 = vrot.slane %v2461, 1
      %v2475 = vsel %vm280, %v2473, %v2474
      %v2476 = vrot.slane %v2458, 1
      %v2477 = vrot.slane %v2462, 1
      %v2478 = vsel %vm280, %v2476, %v2477
      %v2479 = vrot.slane %v2459, 1
      %v2480 = vrot.slane %v2463, 1
      %v2481 = vsel %vm280, %v2479, %v2480
      %v2482 = vrot.slane %v2460, 1
      %v2483 = vrot.slane %v2464, 1
      %v2484 = vsel %vm280, %v2482, %v2483
      %v2489 = vrot.slane %v2457, 2
      %v2490 = vrot.slane %v2461, 2
      %v2491 = vsel %vm289, %v2489, %v2490
      %v2492 = vrot.slane %v2458, 2
      %v2493 = vrot.slane %v2462, 2
      %v2494 = vsel %vm289, %v2492, %v2493
      %v2495 = vrot.slane %v2459, 2
      %v2496 = vrot.slane %v2463, 2
      %v2497 = vsel %vm289, %v2495, %v2496
      %v2498 = vrot.slane %v2460, 2
      %v2499 = vrot.slane %v2464, 2
      %v2500 = vsel %vm289, %v2498, %v2499
      %s2505 = scalar_lea.vmem [#allocation3], 64
      %v2506 = vld [vmem:[%s2505] sm:$0xff]
      %v2507 = vld [vmem:[%s2505 + $0x8] sm:$0xff]
      %v2508 = vld [vmem:[%s2505 + $0x10] sm:$0xff]
      %v2509 = vld [vmem:[%s2505 + $0x18] sm:$0xff]
      %v2510 = vld [vmem:[%s2505 + $0x20] sm:$0x3]
      %v2511 = vld [vmem:[%s2505 + $0x28] sm:$0x3]
      %v2512 = vld [vmem:[%s2505 + $0x30] sm:$0x3]
      %v2513 = vld [vmem:[%s2505 + $0x38] sm:$0x3]
      %v2522 = vrot.slane %v2506, 1
      %v2523 = vrot.slane %v2510, 1
      %v2524 = vsel %vm280, %v2522, %v2523
      %v2525 = vrot.slane %v2507, 1
      %v2526 = vrot.slane %v2511, 1
      %v2527 = vsel %vm280, %v2525, %v2526
      %v2528 = vrot.slane %v2508, 1
      %v2529 = vrot.slane %v2512, 1
      %v2530 = vsel %vm280, %v2528, %v2529
      %v2531 = vrot.slane %v2509, 1
      %v2532 = vrot.slane %v2513, 1
      %v2533 = vsel %vm280, %v2531, %v2532
      %v2538 = vrot.slane %v2506, 2
      %v2539 = vrot.slane %v2510, 2
      %v2540 = vsel %vm289, %v2538, %v2539
      %v2541 = vrot.slane %v2507, 2
      %v2542 = vrot.slane %v2511, 2
      %v2543 = vsel %vm289, %v2541, %v2542
      %v2544 = vrot.slane %v2508, 2
      %v2545 = vrot.slane %v2512, 2
      %v2546 = vsel %vm289, %v2544, %v2545
      %v2547 = vrot.slane %v2509, 2
      %v2548 = vrot.slane %v2513, 2
      %v2549 = vsel %vm289, %v2547, %v2548
      %v2554 = vpack.c.bf16 %v2506, %v2457
      %v2555 = vpack.c.bf16 %v2507, %v2458
      %v2556 = vpack.c.bf16 %v2508, %v2459
      %v2557 = vpack.c.bf16 %v2509, %v2460
      %v2558 = vpack.c.bf16 %v2524, %v2475
      %v2559 = vpack.c.bf16 %v2527, %v2478
      %v2560 = vpack.c.bf16 %v2530, %v2481
      %v2561 = vpack.c.bf16 %v2533, %v2484
      %v2562 = vpack.c.bf16 %v2540, %v2491
      %v2563 = vpack.c.bf16 %v2543, %v2494
      %v2564 = vpack.c.bf16 %v2546, %v2497
      %v2565 = vpack.c.bf16 %v2549, %v2500
      %v2566 = vld [vmem:[%s2] sm:$0xff]
      %v2567 = vld [vmem:[%s2 + $0x8] sm:$0xff]
      %v2568 = vld [vmem:[%s2 + $0x10] sm:$0xff]
      %v2569 = vld [vmem:[%s2 + $0x18] sm:$0xff]
      %v2570 = vld [vmem:[%s2 + $0x20] sm:$0xff]
      %v2571 = vld [vmem:[%s2 + $0x28] sm:$0xff]
      %v2572 = vld [vmem:[%s2 + $0x30] sm:$0xff]
      %v2573 = vld [vmem:[%s2 + $0x38] sm:$0xff]
      %v2574 = vld [vmem:[%s2 + $0x40] sm:$0xff]
      %v2575 = vld [vmem:[%s2 + $0x48] sm:$0xff]
      %v2576 = vld [vmem:[%s2 + $0x50] sm:$0xff]
      %v2577 = vld [vmem:[%s2 + $0x58] sm:$0xff]
      %v2578 = vld [vmem:[%s2 + $0x60] sm:$0xff]
      %v2579 = vld [vmem:[%s2 + $0x68] sm:$0xff]
      %v2580 = vld [vmem:[%s2 + $0x70] sm:$0xff]
      %v2581 = vld [vmem:[%s2 + $0x78] sm:$0xff]
      %v2582 = vld [vmem:[%s2 + $0x80] sm:$0xff]
      %v2583 = vld [vmem:[%s2 + $0x88] sm:$0xff]
      %v2584 = vld [vmem:[%s2 + $0x90] sm:$0xff]
      %v2585 = vld [vmem:[%s2 + $0x98] sm:$0xff]
      %v2586 = vld [vmem:[%s2 + $0xa0] sm:$0xff]
      %v2587 = vld [vmem:[%s2 + $0xa8] sm:$0xff]
      %v2588 = vld [vmem:[%s2 + $0xb0] sm:$0xff]
      %v2589 = vld [vmem:[%s2 + $0xb8] sm:$0xff]
      %v2590 = vld [vmem:[%s2 + $0xc0] sm:$0xff]
      %v2591 = vld [vmem:[%s2 + $0xc8] sm:$0xff]
      %v2592 = vld [vmem:[%s2 + $0xd0] sm:$0xff]
      %v2593 = vld [vmem:[%s2 + $0xd8] sm:$0xff]
      %v2594 = vld [vmem:[%s2 + $0xe0] sm:$0xff]
      %v2595 = vld [vmem:[%s2 + $0xe8] sm:$0xff]
      %v2596 = vld [vmem:[%s2 + $0xf0] sm:$0xff]
      %v2597 = vld [vmem:[%s2 + $0xf8] sm:$0xff]
      %v2598 = vld [vmem:[%s2 + $0x100] sm:$0xff]
      %v2599 = vld [vmem:[%s2 + $0x108] sm:$0xff]
      %v2600 = vld [vmem:[%s2 + $0x110] sm:$0xff]
      %v2601 = vld [vmem:[%s2 + $0x118] sm:$0xff]
      %v2602 = vld [vmem:[%s2 + $0x120] sm:$0xff]
      %v2603 = vld [vmem:[%s2 + $0x128] sm:$0xff]
      %v2604 = vld [vmem:[%s2 + $0x130] sm:$0xff]
      %v2605 = vld [vmem:[%s2 + $0x138] sm:$0xff]
      %v2606 = vld [vmem:[%s2 + $0x140] sm:$0xff]
      %v2607 = vld [vmem:[%s2 + $0x148] sm:$0xff]
      %v2608 = vld [vmem:[%s2 + $0x150] sm:$0xff]
      %v2609 = vld [vmem:[%s2 + $0x158] sm:$0xff]
      %v2610 = vld [vmem:[%s2 + $0x160] sm:$0xff]
      %v2611 = vld [vmem:[%s2 + $0x168] sm:$0xff]
      %v2612 = vld [vmem:[%s2 + $0x170] sm:$0xff]
      %v2613 = vld [vmem:[%s2 + $0x178] sm:$0xff]
      %v2614 = vld [vmem:[%s2 + $0x180] sm:$0xff]
      %v2615 = vld [vmem:[%s2 + $0x188] sm:$0xff]
      %v2616 = vld [vmem:[%s2 + $0x190] sm:$0xff]
      %v2617 = vld [vmem:[%s2 + $0x198] sm:$0xff]
      %v2618 = vld [vmem:[%s2 + $0x1a0] sm:$0xff]
      %v2619 = vld [vmem:[%s2 + $0x1a8] sm:$0xff]
      %v2620 = vld [vmem:[%s2 + $0x1b0] sm:$0xff]
      %v2621 = vld [vmem:[%s2 + $0x1b8] sm:$0xff]
      %v2622 = vld [vmem:[%s2 + $0x1c0] sm:$0xff]
      %v2623 = vld [vmem:[%s2 + $0x1c8] sm:$0xff]
      %v2624 = vld [vmem:[%s2 + $0x1d0] sm:$0xff]
      %v2625 = vld [vmem:[%s2 + $0x1d8] sm:$0xff]
      %v2626 = vld [vmem:[%s2 + $0x1e0] sm:$0xff]
      %v2627 = vld [vmem:[%s2 + $0x1e8] sm:$0xff]
      %v2628 = vld [vmem:[%s2 + $0x1f0] sm:$0xff]
      %v2629 = vld [vmem:[%s2 + $0x1f8] sm:$0xff]
      %v2630 = vld [vmem:[%s2 + $0x200] sm:$0xff]
      %v2631 = vld [vmem:[%s2 + $0x208] sm:$0xff]
      %v2632 = vld [vmem:[%s2 + $0x210] sm:$0xff]
      %v2633 = vld [vmem:[%s2 + $0x218] sm:$0xff]
      %v2634 = vld [vmem:[%s2 + $0x220] sm:$0xff]
      %v2635 = vld [vmem:[%s2 + $0x228] sm:$0xff]
      %v2636 = vld [vmem:[%s2 + $0x230] sm:$0xff]
      %v2637 = vld [vmem:[%s2 + $0x238] sm:$0xff]
      %v2638 = vld [vmem:[%s2 + $0x240] sm:$0xff]
      %v2639 = vld [vmem:[%s2 + $0x248] sm:$0xff]
      %v2640 = vld [vmem:[%s2 + $0x250] sm:$0xff]
      %v2641 = vld [vmem:[%s2 + $0x258] sm:$0xff]
      %v2642 = vld [vmem:[%s2 + $0x260] sm:$0xff]
      %v2643 = vld [vmem:[%s2 + $0x268] sm:$0xff]
      %v2644 = vld [vmem:[%s2 + $0x270] sm:$0xff]
      %v2645 = vld [vmem:[%s2 + $0x278] sm:$0xff]
      %v2646 = vld [vmem:[%s2 + $0x280] sm:$0xff]
      %v2647 = vld [vmem:[%s2 + $0x288] sm:$0xff]
      %v2648 = vld [vmem:[%s2 + $0x290] sm:$0xff]
      %v2649 = vld [vmem:[%s2 + $0x298] sm:$0xff]
      %v2650 = vld [vmem:[%s2 + $0x2a0] sm:$0xff]
      %v2651 = vld [vmem:[%s2 + $0x2a8] sm:$0xff]
      %v2652 = vld [vmem:[%s2 + $0x2b0] sm:$0xff]
      %v2653 = vld [vmem:[%s2 + $0x2b8] sm:$0xff]
      %v2654 = vld [vmem:[%s2 + $0x2c0] sm:$0xff]
      %v2655 = vld [vmem:[%s2 + $0x2c8] sm:$0xff]
      %v2656 = vld [vmem:[%s2 + $0x2d0] sm:$0xff]
      %v2657 = vld [vmem:[%s2 + $0x2d8] sm:$0xff]
      %v2658 = vld [vmem:[%s2 + $0x2e0] sm:$0xff]
      %v2659 = vld [vmem:[%s2 + $0x2e8] sm:$0xff]
      %v2660 = vld [vmem:[%s2 + $0x2f0] sm:$0xff]
      %v2661 = vld [vmem:[%s2 + $0x2f8] sm:$0xff]
      %v2662 = vld [vmem:[%s2 + $0x300] sm:$0xff]
      %v2663 = vld [vmem:[%s2 + $0x308] sm:$0xff]
      %v2664 = vld [vmem:[%s2 + $0x310] sm:$0xff]
      %v2665 = vld [vmem:[%s2 + $0x318] sm:$0xff]
      %v2666 = vld [vmem:[%s2 + $0x320] sm:$0xff]
      %v2667 = vld [vmem:[%s2 + $0x328] sm:$0xff]
      %v2668 = vld [vmem:[%s2 + $0x330] sm:$0xff]
      %v2669 = vld [vmem:[%s2 + $0x338] sm:$0xff]
      %v2670 = vld [vmem:[%s2 + $0x340] sm:$0xff]
      %v2671 = vld [vmem:[%s2 + $0x348] sm:$0xff]
      %v2672 = vld [vmem:[%s2 + $0x350] sm:$0xff]
      %v2673 = vld [vmem:[%s2 + $0x358] sm:$0xff]
      %v2674 = vld [vmem:[%s2 + $0x360] sm:$0xff]
      %v2675 = vld [vmem:[%s2 + $0x368] sm:$0xff]
      %v2676 = vld [vmem:[%s2 + $0x370] sm:$0xff]
      %v2677 = vld [vmem:[%s2 + $0x378] sm:$0xff]
      %v2678 = vld [vmem:[%s2 + $0x380] sm:$0xff]
      %v2679 = vld [vmem:[%s2 + $0x388] sm:$0xff]
      %v2680 = vld [vmem:[%s2 + $0x390] sm:$0xff]
      %v2681 = vld [vmem:[%s2 + $0x398] sm:$0xff]
      %v2682 = vld [vmem:[%s2 + $0x3a0] sm:$0xff]
      %v2683 = vld [vmem:[%s2 + $0x3a8] sm:$0xff]
      %v2684 = vld [vmem:[%s2 + $0x3b0] sm:$0xff]
      %v2685 = vld [vmem:[%s2 + $0x3b8] sm:$0xff]
      %v2686 = vld [vmem:[%s2 + $0x3c0] sm:$0xff]
      %v2687 = vld [vmem:[%s2 + $0x3c8] sm:$0xff]
      %v2688 = vld [vmem:[%s2 + $0x3d0] sm:$0xff]
      %v2689 = vld [vmem:[%s2 + $0x3d8] sm:$0xff]
      %v2690 = vld [vmem:[%s2 + $0x3e0] sm:$0xff]
      %v2691 = vld [vmem:[%s2 + $0x3e8] sm:$0xff]
      %v2692 = vld [vmem:[%s2 + $0x3f0] sm:$0xff]
      %v2693 = vld [vmem:[%s2 + $0x3f8] sm:$0xff]
      %v2694 = vld [vmem:[%s2 + $0x400] sm:$0xff]
      %v2695 = vld [vmem:[%s2 + $0x408] sm:$0xff]
      %v2696 = vld [vmem:[%s2 + $0x410] sm:$0xff]
      %v2697 = vld [vmem:[%s2 + $0x418] sm:$0xff]
      %v2698 = vld [vmem:[%s2 + $0x420] sm:$0xff]
      %v2699 = vld [vmem:[%s2 + $0x428] sm:$0xff]
      %v2700 = vld [vmem:[%s2 + $0x430] sm:$0xff]
      %v2701 = vld [vmem:[%s2 + $0x438] sm:$0xff]
      %v2702 = vld [vmem:[%s2 + $0x440] sm:$0xff]
      %v2703 = vld [vmem:[%s2 + $0x448] sm:$0xff]
      %v2704 = vld [vmem:[%s2 + $0x450] sm:$0xff]
      %v2705 = vld [vmem:[%s2 + $0x458] sm:$0xff]
      %v2706 = vld [vmem:[%s2 + $0x460] sm:$0xff]
      %v2707 = vld [vmem:[%s2 + $0x468] sm:$0xff]
      %v2708 = vld [vmem:[%s2 + $0x470] sm:$0xff]
      %v2709 = vld [vmem:[%s2 + $0x478] sm:$0xff]
      %v2710 = vld [vmem:[%s2 + $0x480] sm:$0xff]
      %v2711 = vld [vmem:[%s2 + $0x488] sm:$0xff]
      %v2712 = vld [vmem:[%s2 + $0x490] sm:$0xff]
      %v2713 = vld [vmem:[%s2 + $0x498] sm:$0xff]
      %v2714 = vld [vmem:[%s2 + $0x4a0] sm:$0xff]
      %v2715 = vld [vmem:[%s2 + $0x4a8] sm:$0xff]
      %v2716 = vld [vmem:[%s2 + $0x4b0] sm:$0xff]
      %v2717 = vld [vmem:[%s2 + $0x4b8] sm:$0xff]
      %v2718 = vld [vmem:[%s2 + $0x4c0] sm:$0xff]
      %v2719 = vld [vmem:[%s2 + $0x4c8] sm:$0xff]
      %v2720 = vld [vmem:[%s2 + $0x4d0] sm:$0xff]
      %v2721 = vld [vmem:[%s2 + $0x4d8] sm:$0xff]
      %v2722 = vld [vmem:[%s2 + $0x4e0] sm:$0xff]
      %v2723 = vld [vmem:[%s2 + $0x4e8] sm:$0xff]
      %v2724 = vld [vmem:[%s2 + $0x4f0] sm:$0xff]
      %v2725 = vld [vmem:[%s2 + $0x4f8] sm:$0xff]
      %v2726 = vld [vmem:[%s2 + $0x500] sm:$0xff]
      %v2727 = vld [vmem:[%s2 + $0x508] sm:$0xff]
      %v2728 = vld [vmem:[%s2 + $0x510] sm:$0xff]
      %v2729 = vld [vmem:[%s2 + $0x518] sm:$0xff]
      %v2730 = vld [vmem:[%s2 + $0x520] sm:$0xff]
      %v2731 = vld [vmem:[%s2 + $0x528] sm:$0xff]
      %v2732 = vld [vmem:[%s2 + $0x530] sm:$0xff]
      %v2733 = vld [vmem:[%s2 + $0x538] sm:$0xff]
      %v2734 = vld [vmem:[%s2 + $0x540] sm:$0xff]
      %v2735 = vld [vmem:[%s2 + $0x548] sm:$0xff]
      %v2736 = vld [vmem:[%s2 + $0x550] sm:$0xff]
      %v2737 = vld [vmem:[%s2 + $0x558] sm:$0xff]
      %v2738 = vld [vmem:[%s2 + $0x560] sm:$0xff]
      %v2739 = vld [vmem:[%s2 + $0x568] sm:$0xff]
      %v2740 = vld [vmem:[%s2 + $0x570] sm:$0xff]
      %v2741 = vld [vmem:[%s2 + $0x578] sm:$0xff]
      %v2742 = vld [vmem:[%s2 + $0x580] sm:$0xff]
      %v2743 = vld [vmem:[%s2 + $0x588] sm:$0xff]
      %v2744 = vld [vmem:[%s2 + $0x590] sm:$0xff]
      %v2745 = vld [vmem:[%s2 + $0x598] sm:$0xff]
      %v2746 = vld [vmem:[%s2 + $0x5a0] sm:$0xff]
      %v2747 = vld [vmem:[%s2 + $0x5a8] sm:$0xff]
      %v2748 = vld [vmem:[%s2 + $0x5b0] sm:$0xff]
      %v2749 = vld [vmem:[%s2 + $0x5b8] sm:$0xff]
      %v2750 = vld [vmem:[%s2 + $0x5c0] sm:$0xff]
      %v2751 = vld [vmem:[%s2 + $0x5c8] sm:$0xff]
      %v2752 = vld [vmem:[%s2 + $0x5d0] sm:$0xff]
      %v2753 = vld [vmem:[%s2 + $0x5d8] sm:$0xff]
      %v2754 = vld [vmem:[%s2 + $0x5e0] sm:$0xff]
      %v2755 = vld [vmem:[%s2 + $0x5e8] sm:$0xff]
      %v2756 = vld [vmem:[%s2 + $0x5f0] sm:$0xff]
      %v2757 = vld [vmem:[%s2 + $0x5f8] sm:$0xff]
      %v2758 = vld [vmem:[%s2 + $0x600] sm:$0xff]
      %v2759 = vld [vmem:[%s2 + $0x608] sm:$0xff]
      %v2760 = vld [vmem:[%s2 + $0x610] sm:$0xff]
      %v2761 = vld [vmem:[%s2 + $0x618] sm:$0xff]
      %v2762 = vld [vmem:[%s2 + $0x620] sm:$0xff]
      %v2763 = vld [vmem:[%s2 + $0x628] sm:$0xff]
      %v2764 = vld [vmem:[%s2 + $0x630] sm:$0xff]
      %v2765 = vld [vmem:[%s2 + $0x638] sm:$0xff]
      %v2766 = vld [vmem:[%s2 + $0x640] sm:$0xff]
      %v2767 = vld [vmem:[%s2 + $0x648] sm:$0xff]
      %v2768 = vld [vmem:[%s2 + $0x650] sm:$0xff]
      %v2769 = vld [vmem:[%s2 + $0x658] sm:$0xff]
      %v2770 = vld [vmem:[%s2 + $0x660] sm:$0xff]
      %v2771 = vld [vmem:[%s2 + $0x668] sm:$0xff]
      %v2772 = vld [vmem:[%s2 + $0x670] sm:$0xff]
      %v2773 = vld [vmem:[%s2 + $0x678] sm:$0xff]
      %v2774 = vld [vmem:[%s2 + $0x680] sm:$0xff]
      %v2775 = vld [vmem:[%s2 + $0x688] sm:$0xff]
      %v2776 = vld [vmem:[%s2 + $0x690] sm:$0xff]
      %v2777 = vld [vmem:[%s2 + $0x698] sm:$0xff]
      %v2778 = vld [vmem:[%s2 + $0x6a0] sm:$0xff]
      %v2779 = vld [vmem:[%s2 + $0x6a8] sm:$0xff]
      %v2780 = vld [vmem:[%s2 + $0x6b0] sm:$0xff]
      %v2781 = vld [vmem:[%s2 + $0x6b8] sm:$0xff]
      %v2782 = vld [vmem:[%s2 + $0x6c0] sm:$0xff]
      %v2783 = vld [vmem:[%s2 + $0x6c8] sm:$0xff]
      %v2784 = vld [vmem:[%s2 + $0x6d0] sm:$0xff]
      %v2785 = vld [vmem:[%s2 + $0x6d8] sm:$0xff]
      %v2786 = vld [vmem:[%s2 + $0x6e0] sm:$0xff]
      %v2787 = vld [vmem:[%s2 + $0x6e8] sm:$0xff]
      %v2788 = vld [vmem:[%s2 + $0x6f0] sm:$0xff]
      %v2789 = vld [vmem:[%s2 + $0x6f8] sm:$0xff]
      %v2790 = vld [vmem:[%s2 + $0x700] sm:$0xff]
      %v2791 = vld [vmem:[%s2 + $0x708] sm:$0xff]
      %v2792 = vld [vmem:[%s2 + $0x710] sm:$0xff]
      %v2793 = vld [vmem:[%s2 + $0x718] sm:$0xff]
      %v2794 = vld [vmem:[%s2 + $0x720] sm:$0xff]
      %v2795 = vld [vmem:[%s2 + $0x728] sm:$0xff]
      %v2796 = vld [vmem:[%s2 + $0x730] sm:$0xff]
      %v2797 = vld [vmem:[%s2 + $0x738] sm:$0xff]
      %v2798 = vld [vmem:[%s2 + $0x740] sm:$0xff]
      %v2799 = vld [vmem:[%s2 + $0x748] sm:$0xff]
      %v2800 = vld [vmem:[%s2 + $0x750] sm:$0xff]
      %v2801 = vld [vmem:[%s2 + $0x758] sm:$0xff]
      %v2802 = vld [vmem:[%s2 + $0x760] sm:$0xff]
      %v2803 = vld [vmem:[%s2 + $0x768] sm:$0xff]
      %v2804 = vld [vmem:[%s2 + $0x770] sm:$0xff]
      %v2805 = vld [vmem:[%s2 + $0x778] sm:$0xff]
      %v2806 = vld [vmem:[%s2 + $0x780] sm:$0xff]
      %v2807 = vld [vmem:[%s2 + $0x788] sm:$0xff]
      %v2808 = vld [vmem:[%s2 + $0x790] sm:$0xff]
      %v2809 = vld [vmem:[%s2 + $0x798] sm:$0xff]
      %v2810 = vld [vmem:[%s2 + $0x7a0] sm:$0xff]
      %v2811 = vld [vmem:[%s2 + $0x7a8] sm:$0xff]
      %v2812 = vld [vmem:[%s2 + $0x7b0] sm:$0xff]
      %v2813 = vld [vmem:[%s2 + $0x7b8] sm:$0xff]
      %v2814 = vld [vmem:[%s2 + $0x7c0] sm:$0xff]
      %v2815 = vld [vmem:[%s2 + $0x7c8] sm:$0xff]
      %v2816 = vld [vmem:[%s2 + $0x7d0] sm:$0xff]
      %v2817 = vld [vmem:[%s2 + $0x7d8] sm:$0xff]
      %v2818 = vld [vmem:[%s2 + $0x7e0] sm:$0xff]
      %v2819 = vld [vmem:[%s2 + $0x7e8] sm:$0xff]
      %v2820 = vld [vmem:[%s2 + $0x7f0] sm:$0xff]
      %v2821 = vld [vmem:[%s2 + $0x7f8] sm:$0xff]
      %v2822 = vld [vmem:[%s2 + $0x800] sm:$0xff]
      %v2823 = vld [vmem:[%s2 + $0x808] sm:$0xff]
      %v2824 = vld [vmem:[%s2 + $0x810] sm:$0xff]
      %v2825 = vld [vmem:[%s2 + $0x818] sm:$0xff]
      %v2826 = vld [vmem:[%s2 + $0x820] sm:$0xff]
      %v2827 = vld [vmem:[%s2 + $0x828] sm:$0xff]
      %v2828 = vld [vmem:[%s2 + $0x830] sm:$0xff]
      %v2829 = vld [vmem:[%s2 + $0x838] sm:$0xff]
      %v2830 = vld [vmem:[%s2 + $0x840] sm:$0xff]
      %v2831 = vld [vmem:[%s2 + $0x848] sm:$0xff]
      %v2832 = vld [vmem:[%s2 + $0x850] sm:$0xff]
      %v2833 = vld [vmem:[%s2 + $0x858] sm:$0xff]
      %v2834 = vld [vmem:[%s2 + $0x860] sm:$0xff]
      %v2835 = vld [vmem:[%s2 + $0x868] sm:$0xff]
      %v2836 = vld [vmem:[%s2 + $0x870] sm:$0xff]
      %v2837 = vld [vmem:[%s2 + $0x878] sm:$0xff]
      %v2838 = vld [vmem:[%s2 + $0x880] sm:$0xff]
      %v2839 = vld [vmem:[%s2 + $0x888] sm:$0xff]
      %v2840 = vld [vmem:[%s2 + $0x890] sm:$0xff]
      %v2841 = vld [vmem:[%s2 + $0x898] sm:$0xff]
      %v2842 = vld [vmem:[%s2 + $0x8a0] sm:$0xff]
      %v2843 = vld [vmem:[%s2 + $0x8a8] sm:$0xff]
      %v2844 = vld [vmem:[%s2 + $0x8b0] sm:$0xff]
      %v2845 = vld [vmem:[%s2 + $0x8b8] sm:$0xff]
      %v2846 = vld [vmem:[%s2 + $0x8c0] sm:$0xff]
      %v2847 = vld [vmem:[%s2 + $0x8c8] sm:$0xff]
      %v2848 = vld [vmem:[%s2 + $0x8d0] sm:$0xff]
      %v2849 = vld [vmem:[%s2 + $0x8d8] sm:$0xff]
      %v2850 = vld [vmem:[%s2 + $0x8e0] sm:$0xff]
      %v2851 = vld [vmem:[%s2 + $0x8e8] sm:$0xff]
      %v2852 = vld [vmem:[%s2 + $0x8f0] sm:$0xff]
      %v2853 = vld [vmem:[%s2 + $0x8f8] sm:$0xff]
      %v2854 = vld [vmem:[%s2 + $0x900] sm:$0xff]
      %v2855 = vld [vmem:[%s2 + $0x908] sm:$0xff]
      %v2856 = vld [vmem:[%s2 + $0x910] sm:$0xff]
      %v2857 = vld [vmem:[%s2 + $0x918] sm:$0xff]
      %v2858 = vld [vmem:[%s2 + $0x920] sm:$0xff]
      %v2859 = vld [vmem:[%s2 + $0x928] sm:$0xff]
      %v2860 = vld [vmem:[%s2 + $0x930] sm:$0xff]
      %v2861 = vld [vmem:[%s2 + $0x938] sm:$0xff]
      %v2862 = vld [vmem:[%s2 + $0x940] sm:$0xff]
      %v2863 = vld [vmem:[%s2 + $0x948] sm:$0xff]
      %v2864 = vld [vmem:[%s2 + $0x950] sm:$0xff]
      %v2865 = vld [vmem:[%s2 + $0x958] sm:$0xff]
      %v2866 = vld [vmem:[%s2 + $0x960] sm:$0xff]
      %v2867 = vld [vmem:[%s2 + $0x968] sm:$0xff]
      %v2868 = vld [vmem:[%s2 + $0x970] sm:$0xff]
      %v2869 = vld [vmem:[%s2 + $0x978] sm:$0xff]
      %v2870 = vld [vmem:[%s2 + $0x980] sm:$0xff]
      %v2871 = vld [vmem:[%s2 + $0x988] sm:$0xff]
      %v2872 = vld [vmem:[%s2 + $0x990] sm:$0xff]
      %v2873 = vld [vmem:[%s2 + $0x998] sm:$0xff]
      %v2874 = vld [vmem:[%s2 + $0x9a0] sm:$0xff]
      %v2875 = vld [vmem:[%s2 + $0x9a8] sm:$0xff]
      %v2876 = vld [vmem:[%s2 + $0x9b0] sm:$0xff]
      %v2877 = vld [vmem:[%s2 + $0x9b8] sm:$0xff]
      %v2878 = vld [vmem:[%s2 + $0x9c0] sm:$0xff]
      %v2879 = vld [vmem:[%s2 + $0x9c8] sm:$0xff]
      %v2880 = vld [vmem:[%s2 + $0x9d0] sm:$0xff]
      %v2881 = vld [vmem:[%s2 + $0x9d8] sm:$0xff]
      %v2882 = vld [vmem:[%s2 + $0x9e0] sm:$0xff]
      %v2883 = vld [vmem:[%s2 + $0x9e8] sm:$0xff]
      %v2884 = vld [vmem:[%s2 + $0x9f0] sm:$0xff]
      %v2885 = vld [vmem:[%s2 + $0x9f8] sm:$0xff]
      %v2886 = vld [vmem:[%s2 + $0xa00] sm:$0xff]
      %v2887 = vld [vmem:[%s2 + $0xa08] sm:$0xff]
      %v2888 = vld [vmem:[%s2 + $0xa10] sm:$0xff]
      %v2889 = vld [vmem:[%s2 + $0xa18] sm:$0xff]
      %v2890 = vld [vmem:[%s2 + $0xa20] sm:$0xff]
      %v2891 = vld [vmem:[%s2 + $0xa28] sm:$0xff]
      %v2892 = vld [vmem:[%s2 + $0xa30] sm:$0xff]
      %v2893 = vld [vmem:[%s2 + $0xa38] sm:$0xff]
      %v2894 = vld [vmem:[%s2 + $0xa40] sm:$0xff]
      %v2895 = vld [vmem:[%s2 + $0xa48] sm:$0xff]
      %v2896 = vld [vmem:[%s2 + $0xa50] sm:$0xff]
      %v2897 = vld [vmem:[%s2 + $0xa58] sm:$0xff]
      %v2898 = vld [vmem:[%s2 + $0xa60] sm:$0xff]
      %v2899 = vld [vmem:[%s2 + $0xa68] sm:$0xff]
      %v2900 = vld [vmem:[%s2 + $0xa70] sm:$0xff]
      %v2901 = vld [vmem:[%s2 + $0xa78] sm:$0xff]
      %v2902 = vld [vmem:[%s2 + $0xa80] sm:$0xff]
      %v2903 = vld [vmem:[%s2 + $0xa88] sm:$0xff]
      %v2904 = vld [vmem:[%s2 + $0xa90] sm:$0xff]
      %v2905 = vld [vmem:[%s2 + $0xa98] sm:$0xff]
      %v2906 = vld [vmem:[%s2 + $0xaa0] sm:$0xff]
      %v2907 = vld [vmem:[%s2 + $0xaa8] sm:$0xff]
      %v2908 = vld [vmem:[%s2 + $0xab0] sm:$0xff]
      %v2909 = vld [vmem:[%s2 + $0xab8] sm:$0xff]
      %v2910 = vld [vmem:[%s2 + $0xac0] sm:$0xff]
      %v2911 = vld [vmem:[%s2 + $0xac8] sm:$0xff]
      %v2912 = vld [vmem:[%s2 + $0xad0] sm:$0xff]
      %v2913 = vld [vmem:[%s2 + $0xad8] sm:$0xff]
      %v2914 = vld [vmem:[%s2 + $0xae0] sm:$0xff]
      %v2915 = vld [vmem:[%s2 + $0xae8] sm:$0xff]
      %v2916 = vld [vmem:[%s2 + $0xaf0] sm:$0xff]
      %v2917 = vld [vmem:[%s2 + $0xaf8] sm:$0xff]
      %v2918 = vld [vmem:[%s2 + $0xb00] sm:$0xff]
      %v2919 = vld [vmem:[%s2 + $0xb08] sm:$0xff]
      %v2920 = vld [vmem:[%s2 + $0xb10] sm:$0xff]
      %v2921 = vld [vmem:[%s2 + $0xb18] sm:$0xff]
      %v2922 = vld [vmem:[%s2 + $0xb20] sm:$0xff]
      %v2923 = vld [vmem:[%s2 + $0xb28] sm:$0xff]
      %v2924 = vld [vmem:[%s2 + $0xb30] sm:$0xff]
      %v2925 = vld [vmem:[%s2 + $0xb38] sm:$0xff]
      %v2926 = vld [vmem:[%s2 + $0xb40] sm:$0xff]
      %v2927 = vld [vmem:[%s2 + $0xb48] sm:$0xff]
      %v2928 = vld [vmem:[%s2 + $0xb50] sm:$0xff]
      %v2929 = vld [vmem:[%s2 + $0xb58] sm:$0xff]
      %v2930 = vld [vmem:[%s2 + $0xb60] sm:$0xff]
      %v2931 = vld [vmem:[%s2 + $0xb68] sm:$0xff]
      %v2932 = vld [vmem:[%s2 + $0xb70] sm:$0xff]
      %v2933 = vld [vmem:[%s2 + $0xb78] sm:$0xff]
      %v2934 = vld [vmem:[%s2 + $0xb80] sm:$0xff]
      %v2935 = vld [vmem:[%s2 + $0xb88] sm:$0xff]
      %v2936 = vld [vmem:[%s2 + $0xb90] sm:$0xff]
      %v2937 = vld [vmem:[%s2 + $0xb98] sm:$0xff]
      %v2938 = vld [vmem:[%s2 + $0xba0] sm:$0xff]
      %v2939 = vld [vmem:[%s2 + $0xba8] sm:$0xff]
      %v2940 = vld [vmem:[%s2 + $0xbb0] sm:$0xff]
      %v2941 = vld [vmem:[%s2 + $0xbb8] sm:$0xff]
      %v2942 = vld [vmem:[%s2 + $0xbc0] sm:$0xff]
      %v2943 = vld [vmem:[%s2 + $0xbc8] sm:$0xff]
      %v2944 = vld [vmem:[%s2 + $0xbd0] sm:$0xff]
      %v2945 = vld [vmem:[%s2 + $0xbd8] sm:$0xff]
      %v2946 = vld [vmem:[%s2 + $0xbe0] sm:$0xff]
      %v2947 = vld [vmem:[%s2 + $0xbe8] sm:$0xff]
      %v2948 = vld [vmem:[%s2 + $0xbf0] sm:$0xff]
      %v2949 = vld [vmem:[%s2 + $0xbf8] sm:$0xff]
      %v3334 = vunpack.c.l.b16 %v2566
      %v3335 = vunpack.c.h.b16 %v2566
      %v3336 = vunpack.c.l.b16 %v2567
      %v3337 = vunpack.c.h.b16 %v2567
      %v3338 = vunpack.c.l.b16 %v2568
      %v3339 = vunpack.c.h.b16 %v2568
      %v3340 = vunpack.c.l.b16 %v2569
      %v3341 = vunpack.c.h.b16 %v2569
      %v3342 = vunpack.c.l.b16 %v2570
      %v3343 = vunpack.c.h.b16 %v2570
      %v3344 = vunpack.c.l.b16 %v2571
      %v3345 = vunpack.c.h.b16 %v2571
      %v3346 = vunpack.c.l.b16 %v2572
      %v3347 = vunpack.c.h.b16 %v2572
      %v3348 = vunpack.c.l.b16 %v2573
      %v3349 = vunpack.c.h.b16 %v2573
      %v3350 = vunpack.c.l.b16 %v2574
      %v3351 = vunpack.c.h.b16 %v2574
      %v3352 = vunpack.c.l.b16 %v2575
      %v3353 = vunpack.c.h.b16 %v2575
      %v3354 = vunpack.c.l.b16 %v2576
      %v3355 = vunpack.c.h.b16 %v2576
      %v3356 = vunpack.c.l.b16 %v2577
      %v3357 = vunpack.c.h.b16 %v2577
      %v3358 = vunpack.c.l.b16 %v2578
      %v3359 = vunpack.c.h.b16 %v2578
      %v3360 = vunpack.c.l.b16 %v2579
      %v3361 = vunpack.c.h.b16 %v2579
      %v3362 = vunpack.c.l.b16 %v2580
      %v3363 = vunpack.c.h.b16 %v2580
      %v3364 = vunpack.c.l.b16 %v2581
      %v3365 = vunpack.c.h.b16 %v2581
      %v3366 = vunpack.c.l.b16 %v2582
      %v3367 = vunpack.c.h.b16 %v2582
      %v3368 = vunpack.c.l.b16 %v2583
      %v3369 = vunpack.c.h.b16 %v2583
      %v3370 = vunpack.c.l.b16 %v2584
      %v3371 = vunpack.c.h.b16 %v2584
      %v3372 = vunpack.c.l.b16 %v2585
      %v3373 = vunpack.c.h.b16 %v2585
      %v3374 = vunpack.c.l.b16 %v2586
      %v3375 = vunpack.c.h.b16 %v2586
      %v3376 = vunpack.c.l.b16 %v2587
      %v3377 = vunpack.c.h.b16 %v2587
      %v3378 = vunpack.c.l.b16 %v2588
      %v3379 = vunpack.c.h.b16 %v2588
      %v3380 = vunpack.c.l.b16 %v2589
      %v3381 = vunpack.c.h.b16 %v2589
      %v3382 = vunpack.c.l.b16 %v2590
      %v3383 = vunpack.c.h.b16 %v2590
      %v3384 = vunpack.c.l.b16 %v2591
      %v3385 = vunpack.c.h.b16 %v2591
      %v3386 = vunpack.c.l.b16 %v2592
      %v3387 = vunpack.c.h.b16 %v2592
      %v3388 = vunpack.c.l.b16 %v2593
      %v3389 = vunpack.c.h.b16 %v2593
      %v3390 = vunpack.c.l.b16 %v2594
      %v3391 = vunpack.c.h.b16 %v2594
      %v3392 = vunpack.c.l.b16 %v2595
      %v3393 = vunpack.c.h.b16 %v2595
      %v3394 = vunpack.c.l.b16 %v2596
      %v3395 = vunpack.c.h.b16 %v2596
      %v3396 = vunpack.c.l.b16 %v2597
      %v3397 = vunpack.c.h.b16 %v2597
      %v3398 = vunpack.c.l.b16 %v2598
      %v3399 = vunpack.c.h.b16 %v2598
      %v3400 = vunpack.c.l.b16 %v2599
      %v3401 = vunpack.c.h.b16 %v2599
      %v3402 = vunpack.c.l.b16 %v2600
      %v3403 = vunpack.c.h.b16 %v2600
      %v3404 = vunpack.c.l.b16 %v2601
      %v3405 = vunpack.c.h.b16 %v2601
      %v3406 = vunpack.c.l.b16 %v2602
      %v3407 = vunpack.c.h.b16 %v2602
      %v3408 = vunpack.c.l.b16 %v2603
      %v3409 = vunpack.c.h.b16 %v2603
      %v3410 = vunpack.c.l.b16 %v2604
      %v3411 = vunpack.c.h.b16 %v2604
      %v3412 = vunpack.c.l.b16 %v2605
      %v3413 = vunpack.c.h.b16 %v2605
      %v3414 = vunpack.c.l.b16 %v2606
      %v3415 = vunpack.c.h.b16 %v2606
      %v3416 = vunpack.c.l.b16 %v2607
      %v3417 = vunpack.c.h.b16 %v2607
      %v3418 = vunpack.c.l.b16 %v2608
      %v3419 = vunpack.c.h.b16 %v2608
      %v3420 = vunpack.c.l.b16 %v2609
      %v3421 = vunpack.c.h.b16 %v2609
      %v3422 = vunpack.c.l.b16 %v2610
      %v3423 = vunpack.c.h.b16 %v2610
      %v3424 = vunpack.c.l.b16 %v2611
      %v3425 = vunpack.c.h.b16 %v2611
      %v3426 = vunpack.c.l.b16 %v2612
      %v3427 = vunpack.c.h.b16 %v2612
      %v3428 = vunpack.c.l.b16 %v2613
      %v3429 = vunpack.c.h.b16 %v2613
      %v3430 = vunpack.c.l.b16 %v2614
      %v3431 = vunpack.c.h.b16 %v2614
      %v3432 = vunpack.c.l.b16 %v2615
      %v3433 = vunpack.c.h.b16 %v2615
      %v3434 = vunpack.c.l.b16 %v2616
      %v3435 = vunpack.c.h.b16 %v2616
      %v3436 = vunpack.c.l.b16 %v2617
      %v3437 = vunpack.c.h.b16 %v2617
      %v3438 = vunpack.c.l.b16 %v2618
      %v3439 = vunpack.c.h.b16 %v2618
      %v3440 = vunpack.c.l.b16 %v2619
      %v3441 = vunpack.c.h.b16 %v2619
      %v3442 = vunpack.c.l.b16 %v2620
      %v3443 = vunpack.c.h.b16 %v2620
      %v3444 = vunpack.c.l.b16 %v2621
      %v3445 = vunpack.c.h.b16 %v2621
      %v3446 = vunpack.c.l.b16 %v2622
      %v3447 = vunpack.c.h.b16 %v2622
      %v3448 = vunpack.c.l.b16 %v2623
      %v3449 = vunpack.c.h.b16 %v2623
      %v3450 = vunpack.c.l.b16 %v2624
      %v3451 = vunpack.c.h.b16 %v2624
      %v3452 = vunpack.c.l.b16 %v2625
      %v3453 = vunpack.c.h.b16 %v2625
      %v3454 = vunpack.c.l.b16 %v2626
      %v3455 = vunpack.c.h.b16 %v2626
      %v3456 = vunpack.c.l.b16 %v2627
      %v3457 = vunpack.c.h.b16 %v2627
      %v3458 = vunpack.c.l.b16 %v2628
      %v3459 = vunpack.c.h.b16 %v2628
      %v3460 = vunpack.c.l.b16 %v2629
      %v3461 = vunpack.c.h.b16 %v2629
      %v3462 = vunpack.c.l.b16 %v2630
      %v3463 = vunpack.c.h.b16 %v2630
      %v3464 = vunpack.c.l.b16 %v2631
      %v3465 = vunpack.c.h.b16 %v2631
      %v3466 = vunpack.c.l.b16 %v2632
      %v3467 = vunpack.c.h.b16 %v2632
      %v3468 = vunpack.c.l.b16 %v2633
      %v3469 = vunpack.c.h.b16 %v2633
      %v3470 = vunpack.c.l.b16 %v2634
      %v3471 = vunpack.c.h.b16 %v2634
      %v3472 = vunpack.c.l.b16 %v2635
      %v3473 = vunpack.c.h.b16 %v2635
      %v3474 = vunpack.c.l.b16 %v2636
      %v3475 = vunpack.c.h.b16 %v2636
      %v3476 = vunpack.c.l.b16 %v2637
      %v3477 = vunpack.c.h.b16 %v2637
      %v3478 = vunpack.c.l.b16 %v2638
      %v3479 = vunpack.c.h.b16 %v2638
      %v3480 = vunpack.c.l.b16 %v2639
      %v3481 = vunpack.c.h.b16 %v2639
      %v3482 = vunpack.c.l.b16 %v2640
      %v3483 = vunpack.c.h.b16 %v2640
      %v3484 = vunpack.c.l.b16 %v2641
      %v3485 = vunpack.c.h.b16 %v2641
      %v3486 = vunpack.c.l.b16 %v2642
      %v3487 = vunpack.c.h.b16 %v2642
      %v3488 = vunpack.c.l.b16 %v2643
      %v3489 = vunpack.c.h.b16 %v2643
      %v3490 = vunpack.c.l.b16 %v2644
      %v3491 = vunpack.c.h.b16 %v2644
      %v3492 = vunpack.c.l.b16 %v2645
      %v3493 = vunpack.c.h.b16 %v2645
      %v3494 = vunpack.c.l.b16 %v2646
      %v3495 = vunpack.c.h.b16 %v2646
      %v3496 = vunpack.c.l.b16 %v2647
      %v3497 = vunpack.c.h.b16 %v2647
      %v3498 = vunpack.c.l.b16 %v2648
      %v3499 = vunpack.c.h.b16 %v2648
      %v3500 = vunpack.c.l.b16 %v2649
      %v3501 = vunpack.c.h.b16 %v2649
      %v3502 = vunpack.c.l.b16 %v2650
      %v3503 = vunpack.c.h.b16 %v2650
      %v3504 = vunpack.c.l.b16 %v2651
      %v3505 = vunpack.c.h.b16 %v2651
      %v3506 = vunpack.c.l.b16 %v2652
      %v3507 = vunpack.c.h.b16 %v2652
      %v3508 = vunpack.c.l.b16 %v2653
      %v3509 = vunpack.c.h.b16 %v2653
      %v3510 = vunpack.c.l.b16 %v2654
      %v3511 = vunpack.c.h.b16 %v2654
      %v3512 = vunpack.c.l.b16 %v2655
      %v3513 = vunpack.c.h.b16 %v2655
      %v3514 = vunpack.c.l.b16 %v2656
      %v3515 = vunpack.c.h.b16 %v2656
      %v3516 = vunpack.c.l.b16 %v2657
      %v3517 = vunpack.c.h.b16 %v2657
      %v3518 = vunpack.c.l.b16 %v2658
      %v3519 = vunpack.c.h.b16 %v2658
      %v3520 = vunpack.c.l.b16 %v2659
      %v3521 = vunpack.c.h.b16 %v2659
      %v3522 = vunpack.c.l.b16 %v2660
      %v3523 = vunpack.c.h.b16 %v2660
      %v3524 = vunpack.c.l.b16 %v2661
      %v3525 = vunpack.c.h.b16 %v2661
      %v3526 = vunpack.c.l.b16 %v2662
      %v3527 = vunpack.c.h.b16 %v2662
      %v3528 = vunpack.c.l.b16 %v2663
      %v3529 = vunpack.c.h.b16 %v2663
      %v3530 = vunpack.c.l.b16 %v2664
      %v3531 = vunpack.c.h.b16 %v2664
      %v3532 = vunpack.c.l.b16 %v2665
      %v3533 = vunpack.c.h.b16 %v2665
      %v3534 = vunpack.c.l.b16 %v2666
      %v3535 = vunpack.c.h.b16 %v2666
      %v3536 = vunpack.c.l.b16 %v2667
      %v3537 = vunpack.c.h.b16 %v2667
      %v3538 = vunpack.c.l.b16 %v2668
      %v3539 = vunpack.c.h.b16 %v2668
      %v3540 = vunpack.c.l.b16 %v2669
      %v3541 = vunpack.c.h.b16 %v2669
      %v3542 = vunpack.c.l.b16 %v2670
      %v3543 = vunpack.c.h.b16 %v2670
      %v3544 = vunpack.c.l.b16 %v2671
      %v3545 = vunpack.c.h.b16 %v2671
      %v3546 = vunpack.c.l.b16 %v2672
      %v3547 = vunpack.c.h.b16 %v2672
      %v3548 = vunpack.c.l.b16 %v2673
      %v3549 = vunpack.c.h.b16 %v2673
      %v3550 = vunpack.c.l.b16 %v2674
      %v3551 = vunpack.c.h.b16 %v2674
      %v3552 = vunpack.c.l.b16 %v2675
      %v3553 = vunpack.c.h.b16 %v2675
      %v3554 = vunpack.c.l.b16 %v2676
      %v3555 = vunpack.c.h.b16 %v2676
      %v3556 = vunpack.c.l.b16 %v2677
      %v3557 = vunpack.c.h.b16 %v2677
      %v3558 = vunpack.c.l.b16 %v2678
      %v3559 = vunpack.c.h.b16 %v2678
      %v3560 = vunpack.c.l.b16 %v2679
      %v3561 = vunpack.c.h.b16 %v2679
      %v3562 = vunpack.c.l.b16 %v2680
      %v3563 = vunpack.c.h.b16 %v2680
      %v3564 = vunpack.c.l.b16 %v2681
      %v3565 = vunpack.c.h.b16 %v2681
      %v3566 = vunpack.c.l.b16 %v2682
      %v3567 = vunpack.c.h.b16 %v2682
      %v3568 = vunpack.c.l.b16 %v2683
      %v3569 = vunpack.c.h.b16 %v2683
      %v3570 = vunpack.c.l.b16 %v2684
      %v3571 = vunpack.c.h.b16 %v2684
      %v3572 = vunpack.c.l.b16 %v2685
      %v3573 = vunpack.c.h.b16 %v2685
      %v3574 = vunpack.c.l.b16 %v2686
      %v3575 = vunpack.c.h.b16 %v2686
      %v3576 = vunpack.c.l.b16 %v2687
      %v3577 = vunpack.c.h.b16 %v2687
      %v3578 = vunpack.c.l.b16 %v2688
      %v3579 = vunpack.c.h.b16 %v2688
      %v3580 = vunpack.c.l.b16 %v2689
      %v3581 = vunpack.c.h.b16 %v2689
      %v3582 = vunpack.c.l.b16 %v2690
      %v3583 = vunpack.c.h.b16 %v2690
      %v3584 = vunpack.c.l.b16 %v2691
      %v3585 = vunpack.c.h.b16 %v2691
      %v3586 = vunpack.c.l.b16 %v2692
      %v3587 = vunpack.c.h.b16 %v2692
      %v3588 = vunpack.c.l.b16 %v2693
      %v3589 = vunpack.c.h.b16 %v2693
      %v3590 = vunpack.c.l.b16 %v2694
      %v3591 = vunpack.c.h.b16 %v2694
      %v3592 = vunpack.c.l.b16 %v2695
      %v3593 = vunpack.c.h.b16 %v2695
      %v3594 = vunpack.c.l.b16 %v2696
      %v3595 = vunpack.c.h.b16 %v2696
      %v3596 = vunpack.c.l.b16 %v2697
      %v3597 = vunpack.c.h.b16 %v2697
      %v3598 = vunpack.c.l.b16 %v2698
      %v3599 = vunpack.c.h.b16 %v2698
      %v3600 = vunpack.c.l.b16 %v2699
      %v3601 = vunpack.c.h.b16 %v2699
      %v3602 = vunpack.c.l.b16 %v2700
      %v3603 = vunpack.c.h.b16 %v2700
      %v3604 = vunpack.c.l.b16 %v2701
      %v3605 = vunpack.c.h.b16 %v2701
      %v3606 = vunpack.c.l.b16 %v2702
      %v3607 = vunpack.c.h.b16 %v2702
      %v3608 = vunpack.c.l.b16 %v2703
      %v3609 = vunpack.c.h.b16 %v2703
      %v3610 = vunpack.c.l.b16 %v2704
      %v3611 = vunpack.c.h.b16 %v2704
      %v3612 = vunpack.c.l.b16 %v2705
      %v3613 = vunpack.c.h.b16 %v2705
      %v3614 = vunpack.c.l.b16 %v2706
      %v3615 = vunpack.c.h.b16 %v2706
      %v3616 = vunpack.c.l.b16 %v2707
      %v3617 = vunpack.c.h.b16 %v2707
      %v3618 = vunpack.c.l.b16 %v2708
      %v3619 = vunpack.c.h.b16 %v2708
      %v3620 = vunpack.c.l.b16 %v2709
      %v3621 = vunpack.c.h.b16 %v2709
      %v3622 = vunpack.c.l.b16 %v2710
      %v3623 = vunpack.c.h.b16 %v2710
      %v3624 = vunpack.c.l.b16 %v2711
      %v3625 = vunpack.c.h.b16 %v2711
      %v3626 = vunpack.c.l.b16 %v2712
      %v3627 = vunpack.c.h.b16 %v2712
      %v3628 = vunpack.c.l.b16 %v2713
      %v3629 = vunpack.c.h.b16 %v2713
      %v3630 = vunpack.c.l.b16 %v2714
      %v3631 = vunpack.c.h.b16 %v2714
      %v3632 = vunpack.c.l.b16 %v2715
      %v3633 = vunpack.c.h.b16 %v2715
      %v3634 = vunpack.c.l.b16 %v2716
      %v3635 = vunpack.c.h.b16 %v2716
      %v3636 = vunpack.c.l.b16 %v2717
      %v3637 = vunpack.c.h.b16 %v2717
      %v3638 = vunpack.c.l.b16 %v2718
      %v3639 = vunpack.c.h.b16 %v2718
      %v3640 = vunpack.c.l.b16 %v2719
      %v3641 = vunpack.c.h.b16 %v2719
      %v3642 = vunpack.c.l.b16 %v2720
      %v3643 = vunpack.c.h.b16 %v2720
      %v3644 = vunpack.c.l.b16 %v2721
      %v3645 = vunpack.c.h.b16 %v2721
      %v3646 = vunpack.c.l.b16 %v2722
      %v3647 = vunpack.c.h.b16 %v2722
      %v3648 = vunpack.c.l.b16 %v2723
      %v3649 = vunpack.c.h.b16 %v2723
      %v3650 = vunpack.c.l.b16 %v2724
      %v3651 = vunpack.c.h.b16 %v2724
      %v3652 = vunpack.c.l.b16 %v2725
      %v3653 = vunpack.c.h.b16 %v2725
      %v3654 = vunpack.c.l.b16 %v2726
      %v3655 = vunpack.c.h.b16 %v2726
      %v3656 = vunpack.c.l.b16 %v2727
      %v3657 = vunpack.c.h.b16 %v2727
      %v3658 = vunpack.c.l.b16 %v2728
      %v3659 = vunpack.c.h.b16 %v2728
      %v3660 = vunpack.c.l.b16 %v2729
      %v3661 = vunpack.c.h.b16 %v2729
      %v3662 = vunpack.c.l.b16 %v2730
      %v3663 = vunpack.c.h.b16 %v2730
      %v3664 = vunpack.c.l.b16 %v2731
      %v3665 = vunpack.c.h.b16 %v2731
      %v3666 = vunpack.c.l.b16 %v2732
      %v3667 = vunpack.c.h.b16 %v2732
      %v3668 = vunpack.c.l.b16 %v2733
      %v3669 = vunpack.c.h.b16 %v2733
      %v3670 = vunpack.c.l.b16 %v2734
      %v3671 = vunpack.c.h.b16 %v2734
      %v3672 = vunpack.c.l.b16 %v2735
      %v3673 = vunpack.c.h.b16 %v2735
      %v3674 = vunpack.c.l.b16 %v2736
      %v3675 = vunpack.c.h.b16 %v2736
      %v3676 = vunpack.c.l.b16 %v2737
      %v3677 = vunpack.c.h.b16 %v2737
      %v3678 = vunpack.c.l.b16 %v2738
      %v3679 = vunpack.c.h.b16 %v2738
      %v3680 = vunpack.c.l.b16 %v2739
      %v3681 = vunpack.c.h.b16 %v2739
      %v3682 = vunpack.c.l.b16 %v2740
      %v3683 = vunpack.c.h.b16 %v2740
      %v3684 = vunpack.c.l.b16 %v2741
      %v3685 = vunpack.c.h.b16 %v2741
      %v3686 = vunpack.c.l.b16 %v2742
      %v3687 = vunpack.c.h.b16 %v2742
      %v3688 = vunpack.c.l.b16 %v2743
      %v3689 = vunpack.c.h.b16 %v2743
      %v3690 = vunpack.c.l.b16 %v2744
      %v3691 = vunpack.c.h.b16 %v2744
      %v3692 = vunpack.c.l.b16 %v2745
      %v3693 = vunpack.c.h.b16 %v2745
      %v3694 = vunpack.c.l.b16 %v2746
      %v3695 = vunpack.c.h.b16 %v2746
      %v3696 = vunpack.c.l.b16 %v2747
      %v3697 = vunpack.c.h.b16 %v2747
      %v3698 = vunpack.c.l.b16 %v2748
      %v3699 = vunpack.c.h.b16 %v2748
      %v3700 = vunpack.c.l.b16 %v2749
      %v3701 = vunpack.c.h.b16 %v2749
      %v3702 = vunpack.c.l.b16 %v2750
      %v3703 = vunpack.c.h.b16 %v2750
      %v3704 = vunpack.c.l.b16 %v2751
      %v3705 = vunpack.c.h.b16 %v2751
      %v3706 = vunpack.c.l.b16 %v2752
      %v3707 = vunpack.c.h.b16 %v2752
      %v3708 = vunpack.c.l.b16 %v2753
      %v3709 = vunpack.c.h.b16 %v2753
      %v3710 = vunpack.c.l.b16 %v2754
      %v3711 = vunpack.c.h.b16 %v2754
      %v3712 = vunpack.c.l.b16 %v2755
      %v3713 = vunpack.c.h.b16 %v2755
      %v3714 = vunpack.c.l.b16 %v2756
      %v3715 = vunpack.c.h.b16 %v2756
      %v3716 = vunpack.c.l.b16 %v2757
      %v3717 = vunpack.c.h.b16 %v2757
      %v3718 = vunpack.c.l.b16 %v2758
      %v3719 = vunpack.c.h.b16 %v2758
      %v3720 = vunpack.c.l.b16 %v2759
      %v3721 = vunpack.c.h.b16 %v2759
      %v3722 = vunpack.c.l.b16 %v2760
      %v3723 = vunpack.c.h.b16 %v2760
      %v3724 = vunpack.c.l.b16 %v2761
      %v3725 = vunpack.c.h.b16 %v2761
      %v3726 = vunpack.c.l.b16 %v2762
      %v3727 = vunpack.c.h.b16 %v2762
      %v3728 = vunpack.c.l.b16 %v2763
      %v3729 = vunpack.c.h.b16 %v2763
      %v3730 = vunpack.c.l.b16 %v2764
      %v3731 = vunpack.c.h.b16 %v2764
      %v3732 = vunpack.c.l.b16 %v2765
      %v3733 = vunpack.c.h.b16 %v2765
      %v3734 = vunpack.c.l.b16 %v2766
      %v3735 = vunpack.c.h.b16 %v2766
      %v3736 = vunpack.c.l.b16 %v2767
      %v3737 = vunpack.c.h.b16 %v2767
      %v3738 = vunpack.c.l.b16 %v2768
      %v3739 = vunpack.c.h.b16 %v2768
      %v3740 = vunpack.c.l.b16 %v2769
      %v3741 = vunpack.c.h.b16 %v2769
      %v3742 = vunpack.c.l.b16 %v2770
      %v3743 = vunpack.c.h.b16 %v2770
      %v3744 = vunpack.c.l.b16 %v2771
      %v3745 = vunpack.c.h.b16 %v2771
      %v3746 = vunpack.c.l.b16 %v2772
      %v3747 = vunpack.c.h.b16 %v2772
      %v3748 = vunpack.c.l.b16 %v2773
      %v3749 = vunpack.c.h.b16 %v2773
      %v3750 = vunpack.c.l.b16 %v2774
      %v3751 = vunpack.c.h.b16 %v2774
      %v3752 = vunpack.c.l.b16 %v2775
      %v3753 = vunpack.c.h.b16 %v2775
      %v3754 = vunpack.c.l.b16 %v2776
      %v3755 = vunpack.c.h.b16 %v2776
      %v3756 = vunpack.c.l.b16 %v2777
      %v3757 = vunpack.c.h.b16 %v2777
      %v3758 = vunpack.c.l.b16 %v2778
      %v3759 = vunpack.c.h.b16 %v2778
      %v3760 = vunpack.c.l.b16 %v2779
      %v3761 = vunpack.c.h.b16 %v2779
      %v3762 = vunpack.c.l.b16 %v2780
      %v3763 = vunpack.c.h.b16 %v2780
      %v3764 = vunpack.c.l.b16 %v2781
      %v3765 = vunpack.c.h.b16 %v2781
      %v3766 = vunpack.c.l.b16 %v2782
      %v3767 = vunpack.c.h.b16 %v2782
      %v3768 = vunpack.c.l.b16 %v2783
      %v3769 = vunpack.c.h.b16 %v2783
      %v3770 = vunpack.c.l.b16 %v2784
      %v3771 = vunpack.c.h.b16 %v2784
      %v3772 = vunpack.c.l.b16 %v2785
      %v3773 = vunpack.c.h.b16 %v2785
      %v3774 = vunpack.c.l.b16 %v2786
      %v3775 = vunpack.c.h.b16 %v2786
      %v3776 = vunpack.c.l.b16 %v2787
      %v3777 = vunpack.c.h.b16 %v2787
      %v3778 = vunpack.c.l.b16 %v2788
      %v3779 = vunpack.c.h.b16 %v2788
      %v3780 = vunpack.c.l.b16 %v2789
      %v3781 = vunpack.c.h.b16 %v2789
      %v3782 = vunpack.c.l.b16 %v2790
      %v3783 = vunpack.c.h.b16 %v2790
      %v3784 = vunpack.c.l.b16 %v2791
      %v3785 = vunpack.c.h.b16 %v2791
      %v3786 = vunpack.c.l.b16 %v2792
      %v3787 = vunpack.c.h.b16 %v2792
      %v3788 = vunpack.c.l.b16 %v2793
      %v3789 = vunpack.c.h.b16 %v2793
      %v3790 = vunpack.c.l.b16 %v2794
      %v3791 = vunpack.c.h.b16 %v2794
      %v3792 = vunpack.c.l.b16 %v2795
      %v3793 = vunpack.c.h.b16 %v2795
      %v3794 = vunpack.c.l.b16 %v2796
      %v3795 = vunpack.c.h.b16 %v2796
      %v3796 = vunpack.c.l.b16 %v2797
      %v3797 = vunpack.c.h.b16 %v2797
      %v3798 = vunpack.c.l.b16 %v2798
      %v3799 = vunpack.c.h.b16 %v2798
      %v3800 = vunpack.c.l.b16 %v2799
      %v3801 = vunpack.c.h.b16 %v2799
      %v3802 = vunpack.c.l.b16 %v2800
      %v3803 = vunpack.c.h.b16 %v2800
      %v3804 = vunpack.c.l.b16 %v2801
      %v3805 = vunpack.c.h.b16 %v2801
      %v3806 = vunpack.c.l.b16 %v2802
      %v3807 = vunpack.c.h.b16 %v2802
      %v3808 = vunpack.c.l.b16 %v2803
      %v3809 = vunpack.c.h.b16 %v2803
      %v3810 = vunpack.c.l.b16 %v2804
      %v3811 = vunpack.c.h.b16 %v2804
      %v3812 = vunpack.c.l.b16 %v2805
      %v3813 = vunpack.c.h.b16 %v2805
      %v3814 = vunpack.c.l.b16 %v2806
      %v3815 = vunpack.c.h.b16 %v2806
      %v3816 = vunpack.c.l.b16 %v2807
      %v3817 = vunpack.c.h.b16 %v2807
      %v3818 = vunpack.c.l.b16 %v2808
      %v3819 = vunpack.c.h.b16 %v2808
      %v3820 = vunpack.c.l.b16 %v2809
      %v3821 = vunpack.c.h.b16 %v2809
      %v3822 = vunpack.c.l.b16 %v2810
      %v3823 = vunpack.c.h.b16 %v2810
      %v3824 = vunpack.c.l.b16 %v2811
      %v3825 = vunpack.c.h.b16 %v2811
      %v3826 = vunpack.c.l.b16 %v2812
      %v3827 = vunpack.c.h.b16 %v2812
      %v3828 = vunpack.c.l.b16 %v2813
      %v3829 = vunpack.c.h.b16 %v2813
      %v3830 = vunpack.c.l.b16 %v2814
      %v3831 = vunpack.c.h.b16 %v2814
      %v3832 = vunpack.c.l.b16 %v2815
      %v3833 = vunpack.c.h.b16 %v2815
      %v3834 = vunpack.c.l.b16 %v2816
      %v3835 = vunpack.c.h.b16 %v2816
      %v3836 = vunpack.c.l.b16 %v2817
      %v3837 = vunpack.c.h.b16 %v2817
      %v3838 = vunpack.c.l.b16 %v2818
      %v3839 = vunpack.c.h.b16 %v2818
      %v3840 = vunpack.c.l.b16 %v2819
      %v3841 = vunpack.c.h.b16 %v2819
      %v3842 = vunpack.c.l.b16 %v2820
      %v3843 = vunpack.c.h.b16 %v2820
      %v3844 = vunpack.c.l.b16 %v2821
      %v3845 = vunpack.c.h.b16 %v2821
      %v3846 = vunpack.c.l.b16 %v2822
      %v3847 = vunpack.c.h.b16 %v2822
      %v3848 = vunpack.c.l.b16 %v2823
      %v3849 = vunpack.c.h.b16 %v2823
      %v3850 = vunpack.c.l.b16 %v2824
      %v3851 = vunpack.c.h.b16 %v2824
      %v3852 = vunpack.c.l.b16 %v2825
      %v3853 = vunpack.c.h.b16 %v2825
      %v3854 = vunpack.c.l.b16 %v2826
      %v3855 = vunpack.c.h.b16 %v2826
      %v3856 = vunpack.c.l.b16 %v2827
      %v3857 = vunpack.c.h.b16 %v2827
      %v3858 = vunpack.c.l.b16 %v2828
      %v3859 = vunpack.c.h.b16 %v2828
      %v3860 = vunpack.c.l.b16 %v2829
      %v3861 = vunpack.c.h.b16 %v2829
      %v3862 = vunpack.c.l.b16 %v2830
      %v3863 = vunpack.c.h.b16 %v2830
      %v3864 = vunpack.c.l.b16 %v2831
      %v3865 = vunpack.c.h.b16 %v2831
      %v3866 = vunpack.c.l.b16 %v2832
      %v3867 = vunpack.c.h.b16 %v2832
      %v3868 = vunpack.c.l.b16 %v2833
      %v3869 = vunpack.c.h.b16 %v2833
      %v3870 = vunpack.c.l.b16 %v2834
      %v3871 = vunpack.c.h.b16 %v2834
      %v3872 = vunpack.c.l.b16 %v2835
      %v3873 = vunpack.c.h.b16 %v2835
      %v3874 = vunpack.c.l.b16 %v2836
      %v3875 = vunpack.c.h.b16 %v2836
      %v3876 = vunpack.c.l.b16 %v2837
      %v3877 = vunpack.c.h.b16 %v2837
      %v3878 = vunpack.c.l.b16 %v2838
      %v3879 = vunpack.c.h.b16 %v2838
      %v3880 = vunpack.c.l.b16 %v2839
      %v3881 = vunpack.c.h.b16 %v2839
      %v3882 = vunpack.c.l.b16 %v2840
      %v3883 = vunpack.c.h.b16 %v2840
      %v3884 = vunpack.c.l.b16 %v2841
      %v3885 = vunpack.c.h.b16 %v2841
      %v3886 = vunpack.c.l.b16 %v2842
      %v3887 = vunpack.c.h.b16 %v2842
      %v3888 = vunpack.c.l.b16 %v2843
      %v3889 = vunpack.c.h.b16 %v2843
      %v3890 = vunpack.c.l.b16 %v2844
      %v3891 = vunpack.c.h.b16 %v2844
      %v3892 = vunpack.c.l.b16 %v2845
      %v3893 = vunpack.c.h.b16 %v2845
      %v3894 = vunpack.c.l.b16 %v2846
      %v3895 = vunpack.c.h.b16 %v2846
      %v3896 = vunpack.c.l.b16 %v2847
      %v3897 = vunpack.c.h.b16 %v2847
      %v3898 = vunpack.c.l.b16 %v2848
      %v3899 = vunpack.c.h.b16 %v2848
      %v3900 = vunpack.c.l.b16 %v2849
      %v3901 = vunpack.c.h.b16 %v2849
      %v3902 = vunpack.c.l.b16 %v2850
      %v3903 = vunpack.c.h.b16 %v2850
      %v3904 = vunpack.c.l.b16 %v2851
      %v3905 = vunpack.c.h.b16 %v2851
      %v3906 = vunpack.c.l.b16 %v2852
      %v3907 = vunpack.c.h.b16 %v2852
      %v3908 = vunpack.c.l.b16 %v2853
      %v3909 = vunpack.c.h.b16 %v2853
      %v3910 = vunpack.c.l.b16 %v2854
      %v3911 = vunpack.c.h.b16 %v2854
      %v3912 = vunpack.c.l.b16 %v2855
      %v3913 = vunpack.c.h.b16 %v2855
      %v3914 = vunpack.c.l.b16 %v2856
      %v3915 = vunpack.c.h.b16 %v2856
      %v3916 = vunpack.c.l.b16 %v2857
      %v3917 = vunpack.c.h.b16 %v2857
      %v3918 = vunpack.c.l.b16 %v2858
      %v3919 = vunpack.c.h.b16 %v2858
      %v3920 = vunpack.c.l.b16 %v2859
      %v3921 = vunpack.c.h.b16 %v2859
      %v3922 = vunpack.c.l.b16 %v2860
      %v3923 = vunpack.c.h.b16 %v2860
      %v3924 = vunpack.c.l.b16 %v2861
      %v3925 = vunpack.c.h.b16 %v2861
      %v3926 = vunpack.c.l.b16 %v2862
      %v3927 = vunpack.c.h.b16 %v2862
      %v3928 = vunpack.c.l.b16 %v2863
      %v3929 = vunpack.c.h.b16 %v2863
      %v3930 = vunpack.c.l.b16 %v2864
      %v3931 = vunpack.c.h.b16 %v2864
      %v3932 = vunpack.c.l.b16 %v2865
      %v3933 = vunpack.c.h.b16 %v2865
      %v3934 = vunpack.c.l.b16 %v2866
      %v3935 = vunpack.c.h.b16 %v2866
      %v3936 = vunpack.c.l.b16 %v2867
      %v3937 = vunpack.c.h.b16 %v2867
      %v3938 = vunpack.c.l.b16 %v2868
      %v3939 = vunpack.c.h.b16 %v2868
      %v3940 = vunpack.c.l.b16 %v2869
      %v3941 = vunpack.c.h.b16 %v2869
      %v3942 = vunpack.c.l.b16 %v2870
      %v3943 = vunpack.c.h.b16 %v2870
      %v3944 = vunpack.c.l.b16 %v2871
      %v3945 = vunpack.c.h.b16 %v2871
      %v3946 = vunpack.c.l.b16 %v2872
      %v3947 = vunpack.c.h.b16 %v2872
      %v3948 = vunpack.c.l.b16 %v2873
      %v3949 = vunpack.c.h.b16 %v2873
      %v3950 = vunpack.c.l.b16 %v2874
      %v3951 = vunpack.c.h.b16 %v2874
      %v3952 = vunpack.c.l.b16 %v2875
      %v3953 = vunpack.c.h.b16 %v2875
      %v3954 = vunpack.c.l.b16 %v2876
      %v3955 = vunpack.c.h.b16 %v2876
      %v3956 = vunpack.c.l.b16 %v2877
      %v3957 = vunpack.c.h.b16 %v2877
      %v3958 = vunpack.c.l.b16 %v2878
      %v3959 = vunpack.c.h.b16 %v2878
      %v3960 = vunpack.c.l.b16 %v2879
      %v3961 = vunpack.c.h.b16 %v2879
      %v3962 = vunpack.c.l.b16 %v2880
      %v3963 = vunpack.c.h.b16 %v2880
      %v3964 = vunpack.c.l.b16 %v2881
      %v3965 = vunpack.c.h.b16 %v2881
      %v3966 = vunpack.c.l.b16 %v2882
      %v3967 = vunpack.c.h.b16 %v2882
      %v3968 = vunpack.c.l.b16 %v2883
      %v3969 = vunpack.c.h.b16 %v2883
      %v3970 = vunpack.c.l.b16 %v2884
      %v3971 = vunpack.c.h.b16 %v2884
      %v3972 = vunpack.c.l.b16 %v2885
      %v3973 = vunpack.c.h.b16 %v2885
      %v3974 = vunpack.c.l.b16 %v2886
      %v3975 = vunpack.c.h.b16 %v2886
      %v3976 = vunpack.c.l.b16 %v2887
      %v3977 = vunpack.c.h.b16 %v2887
      %v3978 = vunpack.c.l.b16 %v2888
      %v3979 = vunpack.c.h.b16 %v2888
      %v3980 = vunpack.c.l.b16 %v2889
      %v3981 = vunpack.c.h.b16 %v2889
      %v3982 = vunpack.c.l.b16 %v2890
      %v3983 = vunpack.c.h.b16 %v2890
      %v3984 = vunpack.c.l.b16 %v2891
      %v3985 = vunpack.c.h.b16 %v2891
      %v3986 = vunpack.c.l.b16 %v2892
      %v3987 = vunpack.c.h.b16 %v2892
      %v3988 = vunpack.c.l.b16 %v2893
      %v3989 = vunpack.c.h.b16 %v2893
      %v3990 = vunpack.c.l.b16 %v2894
      %v3991 = vunpack.c.h.b16 %v2894
      %v3992 = vunpack.c.l.b16 %v2895
      %v3993 = vunpack.c.h.b16 %v2895
      %v3994 = vunpack.c.l.b16 %v2896
      %v3995 = vunpack.c.h.b16 %v2896
      %v3996 = vunpack.c.l.b16 %v2897
      %v3997 = vunpack.c.h.b16 %v2897
      %v3998 = vunpack.c.l.b16 %v2898
      %v3999 = vunpack.c.h.b16 %v2898
      %v4000 = vunpack.c.l.b16 %v2899
      %v4001 = vunpack.c.h.b16 %v2899
      %v4002 = vunpack.c.l.b16 %v2900
      %v4003 = vunpack.c.h.b16 %v2900
      %v4004 = vunpack.c.l.b16 %v2901
      %v4005 = vunpack.c.h.b16 %v2901
      %v4006 = vunpack.c.l.b16 %v2902
      %v4007 = vunpack.c.h.b16 %v2902
      %v4008 = vunpack.c.l.b16 %v2903
      %v4009 = vunpack.c.h.b16 %v2903
      %v4010 = vunpack.c.l.b16 %v2904
      %v4011 = vunpack.c.h.b16 %v2904
      %v4012 = vunpack.c.l.b16 %v2905
      %v4013 = vunpack.c.h.b16 %v2905
      %v4014 = vunpack.c.l.b16 %v2906
      %v4015 = vunpack.c.h.b16 %v2906
      %v4016 = vunpack.c.l.b16 %v2907
      %v4017 = vunpack.c.h.b16 %v2907
      %v4018 = vunpack.c.l.b16 %v2908
      %v4019 = vunpack.c.h.b16 %v2908
      %v4020 = vunpack.c.l.b16 %v2909
      %v4021 = vunpack.c.h.b16 %v2909
      %v4022 = vunpack.c.l.b16 %v2910
      %v4023 = vunpack.c.h.b16 %v2910
      %v4024 = vunpack.c.l.b16 %v2911
      %v4025 = vunpack.c.h.b16 %v2911
      %v4026 = vunpack.c.l.b16 %v2912
      %v4027 = vunpack.c.h.b16 %v2912
      %v4028 = vunpack.c.l.b16 %v2913
      %v4029 = vunpack.c.h.b16 %v2913
      %v4030 = vunpack.c.l.b16 %v2914
      %v4031 = vunpack.c.h.b16 %v2914
      %v4032 = vunpack.c.l.b16 %v2915
      %v4033 = vunpack.c.h.b16 %v2915
      %v4034 = vunpack.c.l.b16 %v2916
      %v4035 = vunpack.c.h.b16 %v2916
      %v4036 = vunpack.c.l.b16 %v2917
      %v4037 = vunpack.c.h.b16 %v2917
      %v4038 = vunpack.c.l.b16 %v2918
      %v4039 = vunpack.c.h.b16 %v2918
      %v4040 = vunpack.c.l.b16 %v2919
      %v4041 = vunpack.c.h.b16 %v2919
      %v4042 = vunpack.c.l.b16 %v2920
      %v4043 = vunpack.c.h.b16 %v2920
      %v4044 = vunpack.c.l.b16 %v2921
      %v4045 = vunpack.c.h.b16 %v2921
      %v4046 = vunpack.c.l.b16 %v2922
      %v4047 = vunpack.c.h.b16 %v2922
      %v4048 = vunpack.c.l.b16 %v2923
      %v4049 = vunpack.c.h.b16 %v2923
      %v4050 = vunpack.c.l.b16 %v2924
      %v4051 = vunpack.c.h.b16 %v2924
      %v4052 = vunpack.c.l.b16 %v2925
      %v4053 = vunpack.c.h.b16 %v2925
      %v4054 = vunpack.c.l.b16 %v2926
      %v4055 = vunpack.c.h.b16 %v2926
      %v4056 = vunpack.c.l.b16 %v2927
      %v4057 = vunpack.c.h.b16 %v2927
      %v4058 = vunpack.c.l.b16 %v2928
      %v4059 = vunpack.c.h.b16 %v2928
      %v4060 = vunpack.c.l.b16 %v2929
      %v4061 = vunpack.c.h.b16 %v2929
      %v4062 = vunpack.c.l.b16 %v2930
      %v4063 = vunpack.c.h.b16 %v2930
      %v4064 = vunpack.c.l.b16 %v2931
      %v4065 = vunpack.c.h.b16 %v2931
      %v4066 = vunpack.c.l.b16 %v2932
      %v4067 = vunpack.c.h.b16 %v2932
      %v4068 = vunpack.c.l.b16 %v2933
      %v4069 = vunpack.c.h.b16 %v2933
      %v4070 = vunpack.c.l.b16 %v2934
      %v4071 = vunpack.c.h.b16 %v2934
      %v4072 = vunpack.c.l.b16 %v2935
      %v4073 = vunpack.c.h.b16 %v2935
      %v4074 = vunpack.c.l.b16 %v2936
      %v4075 = vunpack.c.h.b16 %v2936
      %v4076 = vunpack.c.l.b16 %v2937
      %v4077 = vunpack.c.h.b16 %v2937
      %v4078 = vunpack.c.l.b16 %v2938
      %v4079 = vunpack.c.h.b16 %v2938
      %v4080 = vunpack.c.l.b16 %v2939
      %v4081 = vunpack.c.h.b16 %v2939
      %v4082 = vunpack.c.l.b16 %v2940
      %v4083 = vunpack.c.h.b16 %v2940
      %v4084 = vunpack.c.l.b16 %v2941
      %v4085 = vunpack.c.h.b16 %v2941
      %v4086 = vunpack.c.l.b16 %v2942
      %v4087 = vunpack.c.h.b16 %v2942
      %v4088 = vunpack.c.l.b16 %v2943
      %v4089 = vunpack.c.h.b16 %v2943
      %v4090 = vunpack.c.l.b16 %v2944
      %v4091 = vunpack.c.h.b16 %v2944
      %v4092 = vunpack.c.l.b16 %v2945
      %v4093 = vunpack.c.h.b16 %v2945
      %v4094 = vunpack.c.l.b16 %v2946
      %v4095 = vunpack.c.h.b16 %v2946
      %v4096 = vunpack.c.l.b16 %v2947
      %v4097 = vunpack.c.h.b16 %v2947
      %v4098 = vunpack.c.l.b16 %v2948
      %v4099 = vunpack.c.h.b16 %v2948
      %v4100 = vunpack.c.l.b16 %v2949
      %v4101 = vunpack.c.h.b16 %v2949
      %v4102 = vpack.c.b16 %v3338, %v3334
      %v4103 = vpack.c.b16 %v3339, %v3335
      %v4104 = vpack.c.b16 %v3340, %v3336
      %v4105 = vpack.c.b16 %v3341, %v3337
      %v4106 = vpack.c.b16 %v3346, %v3342
      %v4107 = vpack.c.b16 %v3347, %v3343
      %v4108 = vpack.c.b16 %v3348, %v3344
      %v4109 = vpack.c.b16 %v3349, %v3345
      %v4110 = vpack.c.b16 %v3354, %v3350
      %v4111 = vpack.c.b16 %v3355, %v3351
      %v4112 = vpack.c.b16 %v3356, %v3352
      %v4113 = vpack.c.b16 %v3357, %v3353
      %v4114 = vpack.c.b16 %v3362, %v3358
      %v4115 = vpack.c.b16 %v3363, %v3359
      %v4116 = vpack.c.b16 %v3364, %v3360
      %v4117 = vpack.c.b16 %v3365, %v3361
      %v4118 = vpack.c.b16 %v3370, %v3366
      %v4119 = vpack.c.b16 %v3371, %v3367
      %v4120 = vpack.c.b16 %v3372, %v3368
      %v4121 = vpack.c.b16 %v3373, %v3369
      %v4122 = vpack.c.b16 %v3378, %v3374
      %v4123 = vpack.c.b16 %v3379, %v3375
      %v4124 = vpack.c.b16 %v3380, %v3376
      %v4125 = vpack.c.b16 %v3381, %v3377
      %v4126 = vpack.c.b16 %v3386, %v3382
      %v4127 = vpack.c.b16 %v3387, %v3383
      %v4128 = vpack.c.b16 %v3388, %v3384
      %v4129 = vpack.c.b16 %v3389, %v3385
      %v4130 = vpack.c.b16 %v3394, %v3390
      %v4131 = vpack.c.b16 %v3395, %v3391
      %v4132 = vpack.c.b16 %v3396, %v3392
      %v4133 = vpack.c.b16 %v3397, %v3393
      %v4134 = vpack.c.b16 %v3402, %v3398
      %v4135 = vpack.c.b16 %v3403, %v3399
      %v4136 = vpack.c.b16 %v3404, %v3400
      %v4137 = vpack.c.b16 %v3405, %v3401
      %v4138 = vpack.c.b16 %v3410, %v3406
      %v4139 = vpack.c.b16 %v3411, %v3407
      %v4140 = vpack.c.b16 %v3412, %v3408
      %v4141 = vpack.c.b16 %v3413, %v3409
      %v4142 = vpack.c.b16 %v3418, %v3414
      %v4143 = vpack.c.b16 %v3419, %v3415
      %v4144 = vpack.c.b16 %v3420, %v3416
      %v4145 = vpack.c.b16 %v3421, %v3417
      %v4146 = vpack.c.b16 %v3426, %v3422
      %v4147 = vpack.c.b16 %v3427, %v3423
      %v4148 = vpack.c.b16 %v3428, %v3424
      %v4149 = vpack.c.b16 %v3429, %v3425
      %v4150 = vpack.c.b16 %v3434, %v3430
      %v4151 = vpack.c.b16 %v3435, %v3431
      %v4152 = vpack.c.b16 %v3436, %v3432
      %v4153 = vpack.c.b16 %v3437, %v3433
      %v4154 = vpack.c.b16 %v3442, %v3438
      %v4155 = vpack.c.b16 %v3443, %v3439
      %v4156 = vpack.c.b16 %v3444, %v3440
      %v4157 = vpack.c.b16 %v3445, %v3441
      %v4158 = vpack.c.b16 %v3450, %v3446
      %v4159 = vpack.c.b16 %v3451, %v3447
      %v4160 = vpack.c.b16 %v3452, %v3448
      %v4161 = vpack.c.b16 %v3453, %v3449
      %v4162 = vpack.c.b16 %v3458, %v3454
      %v4163 = vpack.c.b16 %v3459, %v3455
      %v4164 = vpack.c.b16 %v3460, %v3456
      %v4165 = vpack.c.b16 %v3461, %v3457
      %v4166 = vpack.c.b16 %v3466, %v3462
      %v4167 = vpack.c.b16 %v3467, %v3463
      %v4168 = vpack.c.b16 %v3468, %v3464
      %v4169 = vpack.c.b16 %v3469, %v3465
      %v4170 = vpack.c.b16 %v3474, %v3470
      %v4171 = vpack.c.b16 %v3475, %v3471
      %v4172 = vpack.c.b16 %v3476, %v3472
      %v4173 = vpack.c.b16 %v3477, %v3473
      %v4174 = vpack.c.b16 %v3482, %v3478
      %v4175 = vpack.c.b16 %v3483, %v3479
      %v4176 = vpack.c.b16 %v3484, %v3480
      %v4177 = vpack.c.b16 %v3485, %v3481
      %v4178 = vpack.c.b16 %v3490, %v3486
      %v4179 = vpack.c.b16 %v3491, %v3487
      %v4180 = vpack.c.b16 %v3492, %v3488
      %v4181 = vpack.c.b16 %v3493, %v3489
      %v4182 = vpack.c.b16 %v3498, %v3494
      %v4183 = vpack.c.b16 %v3499, %v3495
      %v4184 = vpack.c.b16 %v3500, %v3496
      %v4185 = vpack.c.b16 %v3501, %v3497
      %v4186 = vpack.c.b16 %v3506, %v3502
      %v4187 = vpack.c.b16 %v3507, %v3503
      %v4188 = vpack.c.b16 %v3508, %v3504
      %v4189 = vpack.c.b16 %v3509, %v3505
      %v4190 = vpack.c.b16 %v3514, %v3510
      %v4191 = vpack.c.b16 %v3515, %v3511
      %v4192 = vpack.c.b16 %v3516, %v3512
      %v4193 = vpack.c.b16 %v3517, %v3513
      %v4194 = vpack.c.b16 %v3522, %v3518
      %v4195 = vpack.c.b16 %v3523, %v3519
      %v4196 = vpack.c.b16 %v3524, %v3520
      %v4197 = vpack.c.b16 %v3525, %v3521
      %v4198 = vpack.c.b16 %v3530, %v3526
      %v4199 = vpack.c.b16 %v3531, %v3527
      %v4200 = vpack.c.b16 %v3532, %v3528
      %v4201 = vpack.c.b16 %v3533, %v3529
      %v4202 = vpack.c.b16 %v3538, %v3534
      %v4203 = vpack.c.b16 %v3539, %v3535
      %v4204 = vpack.c.b16 %v3540, %v3536
      %v4205 = vpack.c.b16 %v3541, %v3537
      %v4206 = vpack.c.b16 %v3546, %v3542
      %v4207 = vpack.c.b16 %v3547, %v3543
      %v4208 = vpack.c.b16 %v3548, %v3544
      %v4209 = vpack.c.b16 %v3549, %v3545
      %v4210 = vpack.c.b16 %v3554, %v3550
      %v4211 = vpack.c.b16 %v3555, %v3551
      %v4212 = vpack.c.b16 %v3556, %v3552
      %v4213 = vpack.c.b16 %v3557, %v3553
      %v4214 = vpack.c.b16 %v3562, %v3558
      %v4215 = vpack.c.b16 %v3563, %v3559
      %v4216 = vpack.c.b16 %v3564, %v3560
      %v4217 = vpack.c.b16 %v3565, %v3561
      %v4218 = vpack.c.b16 %v3570, %v3566
      %v4219 = vpack.c.b16 %v3571, %v3567
      %v4220 = vpack.c.b16 %v3572, %v3568
      %v4221 = vpack.c.b16 %v3573, %v3569
      %v4222 = vpack.c.b16 %v3578, %v3574
      %v4223 = vpack.c.b16 %v3579, %v3575
      %v4224 = vpack.c.b16 %v3580, %v3576
      %v4225 = vpack.c.b16 %v3581, %v3577
      %v4226 = vpack.c.b16 %v3586, %v3582
      %v4227 = vpack.c.b16 %v3587, %v3583
      %v4228 = vpack.c.b16 %v3588, %v3584
      %v4229 = vpack.c.b16 %v3589, %v3585
      %v4230 = vpack.c.b16 %v3594, %v3590
      %v4231 = vpack.c.b16 %v3595, %v3591
      %v4232 = vpack.c.b16 %v3596, %v3592
      %v4233 = vpack.c.b16 %v3597, %v3593
      %v4234 = vpack.c.b16 %v3602, %v3598
      %v4235 = vpack.c.b16 %v3603, %v3599
      %v4236 = vpack.c.b16 %v3604, %v3600
      %v4237 = vpack.c.b16 %v3605, %v3601
      %v4238 = vpack.c.b16 %v3610, %v3606
      %v4239 = vpack.c.b16 %v3611, %v3607
      %v4240 = vpack.c.b16 %v3612, %v3608
      %v4241 = vpack.c.b16 %v3613, %v3609
      %v4242 = vpack.c.b16 %v3618, %v3614
      %v4243 = vpack.c.b16 %v3619, %v3615
      %v4244 = vpack.c.b16 %v3620, %v3616
      %v4245 = vpack.c.b16 %v3621, %v3617
      %v4246 = vpack.c.b16 %v3626, %v3622
      %v4247 = vpack.c.b16 %v3627, %v3623
      %v4248 = vpack.c.b16 %v3628, %v3624
      %v4249 = vpack.c.b16 %v3629, %v3625
      %v4250 = vpack.c.b16 %v3634, %v3630
      %v4251 = vpack.c.b16 %v3635, %v3631
      %v4252 = vpack.c.b16 %v3636, %v3632
      %v4253 = vpack.c.b16 %v3637, %v3633
      %v4254 = vpack.c.b16 %v3642, %v3638
      %v4255 = vpack.c.b16 %v3643, %v3639
      %v4256 = vpack.c.b16 %v3644, %v3640
      %v4257 = vpack.c.b16 %v3645, %v3641
      %v4258 = vpack.c.b16 %v3650, %v3646
      %v4259 = vpack.c.b16 %v3651, %v3647
      %v4260 = vpack.c.b16 %v3652, %v3648
      %v4261 = vpack.c.b16 %v3653, %v3649
      %v4262 = vpack.c.b16 %v3658, %v3654
      %v4263 = vpack.c.b16 %v3659, %v3655
      %v4264 = vpack.c.b16 %v3660, %v3656
      %v4265 = vpack.c.b16 %v3661, %v3657
      %v4266 = vpack.c.b16 %v3666, %v3662
      %v4267 = vpack.c.b16 %v3667, %v3663
      %v4268 = vpack.c.b16 %v3668, %v3664
      %v4269 = vpack.c.b16 %v3669, %v3665
      %v4270 = vpack.c.b16 %v3674, %v3670
      %v4271 = vpack.c.b16 %v3675, %v3671
      %v4272 = vpack.c.b16 %v3676, %v3672
      %v4273 = vpack.c.b16 %v3677, %v3673
      %v4274 = vpack.c.b16 %v3682, %v3678
      %v4275 = vpack.c.b16 %v3683, %v3679
      %v4276 = vpack.c.b16 %v3684, %v3680
      %v4277 = vpack.c.b16 %v3685, %v3681
      %v4278 = vpack.c.b16 %v3690, %v3686
      %v4279 = vpack.c.b16 %v3691, %v3687
      %v4280 = vpack.c.b16 %v3692, %v3688
      %v4281 = vpack.c.b16 %v3693, %v3689
      %v4282 = vpack.c.b16 %v3698, %v3694
      %v4283 = vpack.c.b16 %v3699, %v3695
      %v4284 = vpack.c.b16 %v3700, %v3696
      %v4285 = vpack.c.b16 %v3701, %v3697
      %v4286 = vpack.c.b16 %v3706, %v3702
      %v4287 = vpack.c.b16 %v3707, %v3703
      %v4288 = vpack.c.b16 %v3708, %v3704
      %v4289 = vpack.c.b16 %v3709, %v3705
      %v4290 = vpack.c.b16 %v3714, %v3710
      %v4291 = vpack.c.b16 %v3715, %v3711
      %v4292 = vpack.c.b16 %v3716, %v3712
      %v4293 = vpack.c.b16 %v3717, %v3713
      %v4294 = vpack.c.b16 %v3722, %v3718
      %v4295 = vpack.c.b16 %v3723, %v3719
      %v4296 = vpack.c.b16 %v3724, %v3720
      %v4297 = vpack.c.b16 %v3725, %v3721
      %v4298 = vpack.c.b16 %v3730, %v3726
      %v4299 = vpack.c.b16 %v3731, %v3727
      %v4300 = vpack.c.b16 %v3732, %v3728
      %v4301 = vpack.c.b16 %v3733, %v3729
      %v4302 = vpack.c.b16 %v3738, %v3734
      %v4303 = vpack.c.b16 %v3739, %v3735
      %v4304 = vpack.c.b16 %v3740, %v3736
      %v4305 = vpack.c.b16 %v3741, %v3737
      %v4306 = vpack.c.b16 %v3746, %v3742
      %v4307 = vpack.c.b16 %v3747, %v3743
      %v4308 = vpack.c.b16 %v3748, %v3744
      %v4309 = vpack.c.b16 %v3749, %v3745
      %v4310 = vpack.c.b16 %v3754, %v3750
      %v4311 = vpack.c.b16 %v3755, %v3751
      %v4312 = vpack.c.b16 %v3756, %v3752
      %v4313 = vpack.c.b16 %v3757, %v3753
      %v4314 = vpack.c.b16 %v3762, %v3758
      %v4315 = vpack.c.b16 %v3763, %v3759
      %v4316 = vpack.c.b16 %v3764, %v3760
      %v4317 = vpack.c.b16 %v3765, %v3761
      %v4318 = vpack.c.b16 %v3770, %v3766
      %v4319 = vpack.c.b16 %v3771, %v3767
      %v4320 = vpack.c.b16 %v3772, %v3768
      %v4321 = vpack.c.b16 %v3773, %v3769
      %v4322 = vpack.c.b16 %v3778, %v3774
      %v4323 = vpack.c.b16 %v3779, %v3775
      %v4324 = vpack.c.b16 %v3780, %v3776
      %v4325 = vpack.c.b16 %v3781, %v3777
      %v4326 = vpack.c.b16 %v3786, %v3782
      %v4327 = vpack.c.b16 %v3787, %v3783
      %v4328 = vpack.c.b16 %v3788, %v3784
      %v4329 = vpack.c.b16 %v3789, %v3785
      %v4330 = vpack.c.b16 %v3794, %v3790
      %v4331 = vpack.c.b16 %v3795, %v3791
      %v4332 = vpack.c.b16 %v3796, %v3792
      %v4333 = vpack.c.b16 %v3797, %v3793
      %v4334 = vpack.c.b16 %v3802, %v3798
      %v4335 = vpack.c.b16 %v3803, %v3799
      %v4336 = vpack.c.b16 %v3804, %v3800
      %v4337 = vpack.c.b16 %v3805, %v3801
      %v4338 = vpack.c.b16 %v3810, %v3806
      %v4339 = vpack.c.b16 %v3811, %v3807
      %v4340 = vpack.c.b16 %v3812, %v3808
      %v4341 = vpack.c.b16 %v3813, %v3809
      %v4342 = vpack.c.b16 %v3818, %v3814
      %v4343 = vpack.c.b16 %v3819, %v3815
      %v4344 = vpack.c.b16 %v3820, %v3816
      %v4345 = vpack.c.b16 %v3821, %v3817
      %v4346 = vpack.c.b16 %v3826, %v3822
      %v4347 = vpack.c.b16 %v3827, %v3823
      %v4348 = vpack.c.b16 %v3828, %v3824
      %v4349 = vpack.c.b16 %v3829, %v3825
      %v4350 = vpack.c.b16 %v3834, %v3830
      %v4351 = vpack.c.b16 %v3835, %v3831
      %v4352 = vpack.c.b16 %v3836, %v3832
      %v4353 = vpack.c.b16 %v3837, %v3833
      %v4354 = vpack.c.b16 %v3842, %v3838
      %v4355 = vpack.c.b16 %v3843, %v3839
      %v4356 = vpack.c.b16 %v3844, %v3840
      %v4357 = vpack.c.b16 %v3845, %v3841
      %v4358 = vpack.c.b16 %v3850, %v3846
      %v4359 = vpack.c.b16 %v3851, %v3847
      %v4360 = vpack.c.b16 %v3852, %v3848
      %v4361 = vpack.c.b16 %v3853, %v3849
      %v4362 = vpack.c.b16 %v3858, %v3854
      %v4363 = vpack.c.b16 %v3859, %v3855
      %v4364 = vpack.c.b16 %v3860, %v3856
      %v4365 = vpack.c.b16 %v3861, %v3857
      %v4366 = vpack.c.b16 %v3866, %v3862
      %v4367 = vpack.c.b16 %v3867, %v3863
      %v4368 = vpack.c.b16 %v3868, %v3864
      %v4369 = vpack.c.b16 %v3869, %v3865
      %v4370 = vpack.c.b16 %v3874, %v3870
      %v4371 = vpack.c.b16 %v3875, %v3871
      %v4372 = vpack.c.b16 %v3876, %v3872
      %v4373 = vpack.c.b16 %v3877, %v3873
      %v4374 = vpack.c.b16 %v3882, %v3878
      %v4375 = vpack.c.b16 %v3883, %v3879
      %v4376 = vpack.c.b16 %v3884, %v3880
      %v4377 = vpack.c.b16 %v3885, %v3881
      %v4378 = vpack.c.b16 %v3890, %v3886
      %v4379 = vpack.c.b16 %v3891, %v3887
      %v4380 = vpack.c.b16 %v3892, %v3888
      %v4381 = vpack.c.b16 %v3893, %v3889
      %v4382 = vpack.c.b16 %v3898, %v3894
      %v4383 = vpack.c.b16 %v3899, %v3895
      %v4384 = vpack.c.b16 %v3900, %v3896
      %v4385 = vpack.c.b16 %v3901, %v3897
      %v4386 = vpack.c.b16 %v3906, %v3902
      %v4387 = vpack.c.b16 %v3907, %v3903
      %v4388 = vpack.c.b16 %v3908, %v3904
      %v4389 = vpack.c.b16 %v3909, %v3905
      %v4390 = vpack.c.b16 %v3914, %v3910
      %v4391 = vpack.c.b16 %v3915, %v3911
      %v4392 = vpack.c.b16 %v3916, %v3912
      %v4393 = vpack.c.b16 %v3917, %v3913
      %v4394 = vpack.c.b16 %v3922, %v3918
      %v4395 = vpack.c.b16 %v3923, %v3919
      %v4396 = vpack.c.b16 %v3924, %v3920
      %v4397 = vpack.c.b16 %v3925, %v3921
      %v4398 = vpack.c.b16 %v3930, %v3926
      %v4399 = vpack.c.b16 %v3931, %v3927
      %v4400 = vpack.c.b16 %v3932, %v3928
      %v4401 = vpack.c.b16 %v3933, %v3929
      %v4402 = vpack.c.b16 %v3938, %v3934
      %v4403 = vpack.c.b16 %v3939, %v3935
      %v4404 = vpack.c.b16 %v3940, %v3936
      %v4405 = vpack.c.b16 %v3941, %v3937
      %v4406 = vpack.c.b16 %v3946, %v3942
      %v4407 = vpack.c.b16 %v3947, %v3943
      %v4408 = vpack.c.b16 %v3948, %v3944
      %v4409 = vpack.c.b16 %v3949, %v3945
      %v4410 = vpack.c.b16 %v3954, %v3950
      %v4411 = vpack.c.b16 %v3955, %v3951
      %v4412 = vpack.c.b16 %v3956, %v3952
      %v4413 = vpack.c.b16 %v3957, %v3953
      %v4414 = vpack.c.b16 %v3962, %v3958
      %v4415 = vpack.c.b16 %v3963, %v3959
      %v4416 = vpack.c.b16 %v3964, %v3960
      %v4417 = vpack.c.b16 %v3965, %v3961
      %v4418 = vpack.c.b16 %v3970, %v3966
      %v4419 = vpack.c.b16 %v3971, %v3967
      %v4420 = vpack.c.b16 %v3972, %v3968
      %v4421 = vpack.c.b16 %v3973, %v3969
      %v4422 = vpack.c.b16 %v3978, %v3974
      %v4423 = vpack.c.b16 %v3979, %v3975
      %v4424 = vpack.c.b16 %v3980, %v3976
      %v4425 = vpack.c.b16 %v3981, %v3977
      %v4426 = vpack.c.b16 %v3986, %v3982
      %v4427 = vpack.c.b16 %v3987, %v3983
      %v4428 = vpack.c.b16 %v3988, %v3984
      %v4429 = vpack.c.b16 %v3989, %v3985
      %v4430 = vpack.c.b16 %v3994, %v3990
      %v4431 = vpack.c.b16 %v3995, %v3991
      %v4432 = vpack.c.b16 %v3996, %v3992
      %v4433 = vpack.c.b16 %v3997, %v3993
      %v4434 = vpack.c.b16 %v4002, %v3998
      %v4435 = vpack.c.b16 %v4003, %v3999
      %v4436 = vpack.c.b16 %v4004, %v4000
      %v4437 = vpack.c.b16 %v4005, %v4001
      %v4438 = vpack.c.b16 %v4010, %v4006
      %v4439 = vpack.c.b16 %v4011, %v4007
      %v4440 = vpack.c.b16 %v4012, %v4008
      %v4441 = vpack.c.b16 %v4013, %v4009
      %v4442 = vpack.c.b16 %v4018, %v4014
      %v4443 = vpack.c.b16 %v4019, %v4015
      %v4444 = vpack.c.b16 %v4020, %v4016
      %v4445 = vpack.c.b16 %v4021, %v4017
      %v4446 = vpack.c.b16 %v4026, %v4022
      %v4447 = vpack.c.b16 %v4027, %v4023
      %v4448 = vpack.c.b16 %v4028, %v4024
      %v4449 = vpack.c.b16 %v4029, %v4025
      %v4450 = vpack.c.b16 %v4034, %v4030
      %v4451 = vpack.c.b16 %v4035, %v4031
      %v4452 = vpack.c.b16 %v4036, %v4032
      %v4453 = vpack.c.b16 %v4037, %v4033
      %v4454 = vpack.c.b16 %v4042, %v4038
      %v4455 = vpack.c.b16 %v4043, %v4039
      %v4456 = vpack.c.b16 %v4044, %v4040
      %v4457 = vpack.c.b16 %v4045, %v4041
      %v4458 = vpack.c.b16 %v4050, %v4046
      %v4459 = vpack.c.b16 %v4051, %v4047
      %v4460 = vpack.c.b16 %v4052, %v4048
      %v4461 = vpack.c.b16 %v4053, %v4049
      %v4462 = vpack.c.b16 %v4058, %v4054
      %v4463 = vpack.c.b16 %v4059, %v4055
      %v4464 = vpack.c.b16 %v4060, %v4056
      %v4465 = vpack.c.b16 %v4061, %v4057
      %v4466 = vpack.c.b16 %v4066, %v4062
      %v4467 = vpack.c.b16 %v4067, %v4063
      %v4468 = vpack.c.b16 %v4068, %v4064
      %v4469 = vpack.c.b16 %v4069, %v4065
      %v4470 = vpack.c.b16 %v4074, %v4070
      %v4471 = vpack.c.b16 %v4075, %v4071
      %v4472 = vpack.c.b16 %v4076, %v4072
      %v4473 = vpack.c.b16 %v4077, %v4073
      %v4474 = vpack.c.b16 %v4082, %v4078
      %v4475 = vpack.c.b16 %v4083, %v4079
      %v4476 = vpack.c.b16 %v4084, %v4080
      %v4477 = vpack.c.b16 %v4085, %v4081
      %v4478 = vpack.c.b16 %v4090, %v4086
      %v4479 = vpack.c.b16 %v4091, %v4087
      %v4480 = vpack.c.b16 %v4092, %v4088
      %v4481 = vpack.c.b16 %v4093, %v4089
      %v4482 = vpack.c.b16 %v4098, %v4094
      %v4483 = vpack.c.b16 %v4099, %v4095
      %v4484 = vpack.c.b16 %v4100, %v4096
      %v4485 = vpack.c.b16 %v4101, %v4097
      %4870 = vmatprep.subr.bf16.mxu0 %v4131
      %4871 = vmatpush1.bf16.msra.mxu0 %v4130
      %4872 = vmatprep.subr.bf16.mxu0 %v4127
      %4873 = vmatpush1.bf16.msra.mxu0 %v4126
      %4874 = vmatprep.subr.bf16.mxu0 %v4123
      %4875 = vmatpush1.bf16.msra.mxu0 %v4122
      %4876 = vmatprep.subr.bf16.mxu0 %v4119
      %4877 = vmatpush1.bf16.msra.mxu0 %v4118
      %4878 = vmatprep.subr.bf16.mxu0 %v4115
      %4879 = vmatpush1.bf16.msra.mxu0 %v4114
      %4880 = vmatprep.subr.bf16.mxu0 %v4111
      %4881 = vmatpush1.bf16.msra.mxu0 %v4110
      %4882 = vmatprep.subr.bf16.mxu0 %v4107
      %4883 = vmatpush1.bf16.msra.mxu0 %v4106
      %4884 = vmatprep.subr.bf16.mxu0 %v4103
      %4885 = vmatpush1.bf16.msra.mxu0 %v4102
      %4886 = vmatprep.subr.bf16.mxu0 %v4163
      %4887 = vmatpush2.bf16.msra.mxu0 %v4162
      %4888 = vmatprep.subr.bf16.mxu0 %v4159
      %4889 = vmatpush2.bf16.msra.mxu0 %v4158
      %4890 = vmatprep.subr.bf16.mxu0 %v4155
      %4891 = vmatpush2.bf16.msra.mxu0 %v4154
      %4892 = vmatprep.subr.bf16.mxu0 %v4151
      %4893 = vmatpush2.bf16.msra.mxu0 %v4150
      %4894 = vmatprep.subr.bf16.mxu0 %v4147
      %4895 = vmatpush2.bf16.msra.mxu0 %v4146
      %4896 = vmatprep.subr.bf16.mxu0 %v4143
      %4897 = vmatpush2.bf16.msra.mxu0 %v4142
      %4898 = vmatprep.subr.bf16.mxu0 %v4139
      %4899 = vmatpush2.bf16.msra.mxu0 %v4138
      %4900 = vmatprep.subr.bf16.mxu0 %v4135
      %4901 = vmatpush2.bf16.msra.mxu0 %v4134
      %4902 = vmatprep.mubr.bf16.mxu0 %v2555
      %4903 = vmatmul.mubr.bf16.gmra.mxu0 %v2554
      %v4904 = vpop.f32.mrf.mxu0
      %v4905 = vadd.f32 0.0, %v4904
      %v4906 = vpop.f32.mrf.mxu0
      %v4907 = vadd.f32 0.0, %v4906
      %v4908 = vpop.f32.mrf.mxu0
      %v4909 = vadd.f32 0.0, %v4908
      %v4910 = vpop.f32.mrf.mxu0
      %v4911 = vadd.f32 0.0, %v4910
      %4912 = vdwg.mxu0
      %4913 = vmatprep.subr.bf16.mxu0 %v4195
      %4914 = vmatpush1.bf16.msra.mxu0 %v4194
      %4915 = vmatprep.subr.bf16.mxu0 %v4191
      %4916 = vmatpush1.bf16.msra.mxu0 %v4190
      %4917 = vmatprep.subr.bf16.mxu0 %v4187
      %4918 = vmatpush1.bf16.msra.mxu0 %v4186
      %4919 = vmatprep.subr.bf16.mxu0 %v4183
      %4920 = vmatpush1.bf16.msra.mxu0 %v4182
      %4921 = vmatprep.subr.bf16.mxu0 %v4179
      %4922 = vmatpush1.bf16.msra.mxu0 %v4178
      %4923 = vmatprep.subr.bf16.mxu0 %v4175
      %4924 = vmatpush1.bf16.msra.mxu0 %v4174
      %4925 = vmatprep.subr.bf16.mxu0 %v4171
      %4926 = vmatpush1.bf16.msra.mxu0 %v4170
      %4927 = vmatprep.subr.bf16.mxu0 %v4167
      %4928 = vmatpush1.bf16.msra.mxu0 %v4166
      %4929 = vmatprep.subr.bf16.mxu0 %v4227
      %4930 = vmatpush2.bf16.msra.mxu0 %v4226
      %4931 = vmatprep.subr.bf16.mxu0 %v4223
      %4932 = vmatpush2.bf16.msra.mxu0 %v4222
      %4933 = vmatprep.subr.bf16.mxu0 %v4219
      %4934 = vmatpush2.bf16.msra.mxu0 %v4218
      %4935 = vmatprep.subr.bf16.mxu0 %v4215
      %4936 = vmatpush2.bf16.msra.mxu0 %v4214
      %4937 = vmatprep.subr.bf16.mxu0 %v4211
      %4938 = vmatpush2.bf16.msra.mxu0 %v4210
      %4939 = vmatprep.subr.bf16.mxu0 %v4207
      %4940 = vmatpush2.bf16.msra.mxu0 %v4206
      %4941 = vmatprep.subr.bf16.mxu0 %v4203
      %4942 = vmatpush2.bf16.msra.mxu0 %v4202
      %4943 = vmatprep.subr.bf16.mxu0 %v4199
      %4944 = vmatpush2.bf16.msra.mxu0 %v4198
      %4945 = vmatprep.mubr.bf16.mxu0 %v2557
      %4946 = vmatmul.mubr.bf16.gmra.mxu0 %v2556
      %v4947 = vpop.f32.mrf.mxu0
      %v4948 = vadd.f32 %v4905, %v4947
      %v4949 = vpop.f32.mrf.mxu0
      %v4950 = vadd.f32 %v4907, %v4949
      %v4951 = vpop.f32.mrf.mxu0
      %v4952 = vadd.f32 %v4909, %v4951
      %v4953 = vpop.f32.mrf.mxu0
      %v4954 = vadd.f32 %v4911, %v4953
      %4955 = vdwg.mxu0
      %4956 = vmatprep.subr.bf16.mxu0 %v4259
      %4957 = vmatpush1.bf16.msra.mxu0 %v4258
      %4958 = vmatprep.subr.bf16.mxu0 %v4255
      %4959 = vmatpush1.bf16.msra.mxu0 %v4254
      %4960 = vmatprep.subr.bf16.mxu0 %v4251
      %4961 = vmatpush1.bf16.msra.mxu0 %v4250
      %4962 = vmatprep.subr.bf16.mxu0 %v4247
      %4963 = vmatpush1.bf16.msra.mxu0 %v4246
      %4964 = vmatprep.subr.bf16.mxu0 %v4243
      %4965 = vmatpush1.bf16.msra.mxu0 %v4242
      %4966 = vmatprep.subr.bf16.mxu0 %v4239
      %4967 = vmatpush1.bf16.msra.mxu0 %v4238
      %4968 = vmatprep.subr.bf16.mxu0 %v4235
      %4969 = vmatpush1.bf16.msra.mxu0 %v4234
      %4970 = vmatprep.subr.bf16.mxu0 %v4231
      %4971 = vmatpush1.bf16.msra.mxu0 %v4230
      %4972 = vmatprep.subr.bf16.mxu0 %v4291
      %4973 = vmatpush2.bf16.msra.mxu0 %v4290
      %4974 = vmatprep.subr.bf16.mxu0 %v4287
      %4975 = vmatpush2.bf16.msra.mxu0 %v4286
      %4976 = vmatprep.subr.bf16.mxu0 %v4283
      %4977 = vmatpush2.bf16.msra.mxu0 %v4282
      %4978 = vmatprep.subr.bf16.mxu0 %v4279
      %4979 = vmatpush2.bf16.msra.mxu0 %v4278
      %4980 = vmatprep.subr.bf16.mxu0 %v4275
      %4981 = vmatpush2.bf16.msra.mxu0 %v4274
      %4982 = vmatprep.subr.bf16.mxu0 %v4271
      %4983 = vmatpush2.bf16.msra.mxu0 %v4270
      %4984 = vmatprep.subr.bf16.mxu0 %v4267
      %4985 = vmatpush2.bf16.msra.mxu0 %v4266
      %4986 = vmatprep.subr.bf16.mxu0 %v4263
      %4987 = vmatpush2.bf16.msra.mxu0 %v4262
      %4988 = vmatprep.mubr.bf16.mxu0 %v2559
      %4989 = vmatmul.mubr.bf16.gmra.mxu0 %v2558
      %v4990 = vpop.f32.mrf.mxu0
      %v4991 = vadd.f32 %v4948, %v4990
      %v4992 = vpop.f32.mrf.mxu0
      %v4993 = vadd.f32 %v4950, %v4992
      %v4994 = vpop.f32.mrf.mxu0
      %v4995 = vadd.f32 %v4952, %v4994
      %v4996 = vpop.f32.mrf.mxu0
      %v4997 = vadd.f32 %v4954, %v4996
      %4998 = vdwg.mxu0
      %4999 = vmatprep.subr.bf16.mxu0 %v4323
      %5000 = vmatpush1.bf16.msra.mxu0 %v4322
      %5001 = vmatprep.subr.bf16.mxu0 %v4319
      %5002 = vmatpush1.bf16.msra.mxu0 %v4318
      %5003 = vmatprep.subr.bf16.mxu0 %v4315
      %5004 = vmatpush1.bf16.msra.mxu0 %v4314
      %5005 = vmatprep.subr.bf16.mxu0 %v4311
      %5006 = vmatpush1.bf16.msra.mxu0 %v4310
      %5007 = vmatprep.subr.bf16.mxu0 %v4307
      %5008 = vmatpush1.bf16.msra.mxu0 %v4306
      %5009 = vmatprep.subr.bf16.mxu0 %v4303
      %5010 = vmatpush1.bf16.msra.mxu0 %v4302
      %5011 = vmatprep.subr.bf16.mxu0 %v4299
      %5012 = vmatpush1.bf16.msra.mxu0 %v4298
      %5013 = vmatprep.subr.bf16.mxu0 %v4295
      %5014 = vmatpush1.bf16.msra.mxu0 %v4294
      %5015 = vmatprep.subr.bf16.mxu0 %v4355
      %5016 = vmatpush2.bf16.msra.mxu0 %v4354
      %5017 = vmatprep.subr.bf16.mxu0 %v4351
      %5018 = vmatpush2.bf16.msra.mxu0 %v4350
      %5019 = vmatprep.subr.bf16.mxu0 %v4347
      %5020 = vmatpush2.bf16.msra.mxu0 %v4346
      %5021 = vmatprep.subr.bf16.mxu0 %v4343
      %5022 = vmatpush2.bf16.msra.mxu0 %v4342
      %5023 = vmatprep.subr.bf16.mxu0 %v4339
      %5024 = vmatpush2.bf16.msra.mxu0 %v4338
      %5025 = vmatprep.subr.bf16.mxu0 %v4335
      %5026 = vmatpush2.bf16.msra.mxu0 %v4334
      %5027 = vmatprep.subr.bf16.mxu0 %v4331
      %5028 = vmatpush2.bf16.msra.mxu0 %v4330
      %5029 = vmatprep.subr.bf16.mxu0 %v4327
      %5030 = vmatpush2.bf16.msra.mxu0 %v4326
      %5031 = vmatprep.mubr.bf16.mxu0 %v2561
      %5032 = vmatmul.mubr.bf16.gmra.mxu0 %v2560
      %v5033 = vpop.f32.mrf.mxu0
      %v5034 = vadd.f32 %v4991, %v5033
      %v5035 = vpop.f32.mrf.mxu0
      %v5036 = vadd.f32 %v4993, %v5035
      %v5037 = vpop.f32.mrf.mxu0
      %v5038 = vadd.f32 %v4995, %v5037
      %v5039 = vpop.f32.mrf.mxu0
      %v5040 = vadd.f32 %v4997, %v5039
      %5041 = vdwg.mxu0
      %5042 = vmatprep.subr.bf16.mxu0 %v4387
      %5043 = vmatpush1.bf16.msra.mxu0 %v4386
      %5044 = vmatprep.subr.bf16.mxu0 %v4383
      %5045 = vmatpush1.bf16.msra.mxu0 %v4382
      %5046 = vmatprep.subr.bf16.mxu0 %v4379
      %5047 = vmatpush1.bf16.msra.mxu0 %v4378
      %5048 = vmatprep.subr.bf16.mxu0 %v4375
      %5049 = vmatpush1.bf16.msra.mxu0 %v4374
      %5050 = vmatprep.subr.bf16.mxu0 %v4371
      %5051 = vmatpush1.bf16.msra.mxu0 %v4370
      %5052 = vmatprep.subr.bf16.mxu0 %v4367
      %5053 = vmatpush1.bf16.msra.mxu0 %v4366
      %5054 = vmatprep.subr.bf16.mxu0 %v4363
      %5055 = vmatpush1.bf16.msra.mxu0 %v4362
      %5056 = vmatprep.subr.bf16.mxu0 %v4359
      %5057 = vmatpush1.bf16.msra.mxu0 %v4358
      %5058 = vmatprep.subr.bf16.mxu0 %v4419
      %5059 = vmatpush2.bf16.msra.mxu0 %v4418
      %5060 = vmatprep.subr.bf16.mxu0 %v4415
      %5061 = vmatpush2.bf16.msra.mxu0 %v4414
      %5062 = vmatprep.subr.bf16.mxu0 %v4411
      %5063 = vmatpush2.bf16.msra.mxu0 %v4410
      %5064 = vmatprep.subr.bf16.mxu0 %v4407
      %5065 = vmatpush2.bf16.msra.mxu0 %v4406
      %5066 = vmatprep.subr.bf16.mxu0 %v4403
      %5067 = vmatpush2.bf16.msra.mxu0 %v4402
      %5068 = vmatprep.subr.bf16.mxu0 %v4399
      %5069 = vmatpush2.bf16.msra.mxu0 %v4398
      %5070 = vmatprep.subr.bf16.mxu0 %v4395
      %5071 = vmatpush2.bf16.msra.mxu0 %v4394
      %5072 = vmatprep.subr.bf16.mxu0 %v4391
      %5073 = vmatpush2.bf16.msra.mxu0 %v4390
      %5074 = vmatprep.mubr.bf16.mxu0 %v2563
      %5075 = vmatmul.mubr.bf16.gmra.mxu0 %v2562
      %v5076 = vpop.f32.mrf.mxu0
      %v5077 = vadd.f32 %v5034, %v5076
      %v5078 = vpop.f32.mrf.mxu0
      %v5079 = vadd.f32 %v5036, %v5078
      %v5080 = vpop.f32.mrf.mxu0
      %v5081 = vadd.f32 %v5038, %v5080
      %v5082 = vpop.f32.mrf.mxu0
      %v5083 = vadd.f32 %v5040, %v5082
      %5084 = vdwg.mxu0
      %5085 = vmatprep.subr.bf16.mxu0 %v4451
      %5086 = vmatpush1.bf16.msra.mxu0 %v4450
      %5087 = vmatprep.subr.bf16.mxu0 %v4447
      %5088 = vmatpush1.bf16.msra.mxu0 %v4446
      %5089 = vmatprep.subr.bf16.mxu0 %v4443
      %5090 = vmatpush1.bf16.msra.mxu0 %v4442
      %5091 = vmatprep.subr.bf16.mxu0 %v4439
      %5092 = vmatpush1.bf16.msra.mxu0 %v4438
      %5093 = vmatprep.subr.bf16.mxu0 %v4435
      %5094 = vmatpush1.bf16.msra.mxu0 %v4434
      %5095 = vmatprep.subr.bf16.mxu0 %v4431
      %5096 = vmatpush1.bf16.msra.mxu0 %v4430
      %5097 = vmatprep.subr.bf16.mxu0 %v4427
      %5098 = vmatpush1.bf16.msra.mxu0 %v4426
      %5099 = vmatprep.subr.bf16.mxu0 %v4423
      %5100 = vmatpush1.bf16.msra.mxu0 %v4422
      %5101 = vmatprep.subr.bf16.mxu0 %v4483
      %5102 = vmatpush2.bf16.msra.mxu0 %v4482
      %5103 = vmatprep.subr.bf16.mxu0 %v4479
      %5104 = vmatpush2.bf16.msra.mxu0 %v4478
      %5105 = vmatprep.subr.bf16.mxu0 %v4475
      %5106 = vmatpush2.bf16.msra.mxu0 %v4474
      %5107 = vmatprep.subr.bf16.mxu0 %v4471
      %5108 = vmatpush2.bf16.msra.mxu0 %v4470
      %5109 = vmatprep.subr.bf16.mxu0 %v4467
      %5110 = vmatpush2.bf16.msra.mxu0 %v4466
      %5111 = vmatprep.subr.bf16.mxu0 %v4463
      %5112 = vmatpush2.bf16.msra.mxu0 %v4462
      %5113 = vmatprep.subr.bf16.mxu0 %v4459
      %5114 = vmatpush2.bf16.msra.mxu0 %v4458
      %5115 = vmatprep.subr.bf16.mxu0 %v4455
      %5116 = vmatpush2.bf16.msra.mxu0 %v4454
      %5117 = vmatprep.mubr.bf16.mxu0 %v2565
      %5118 = vmatmul.mubr.bf16.gmra.mxu0 %v2564
      %v5119 = vpop.f32.mrf.mxu0
      %v5120 = vadd.f32 %v5077, %v5119
      %v5121 = vpop.f32.mrf.mxu0
      %v5122 = vadd.f32 %v5079, %v5121
      %v5123 = vpop.f32.mrf.mxu0
      %v5124 = vadd.f32 %v5081, %v5123
      %v5125 = vpop.f32.mrf.mxu0
      %v5126 = vadd.f32 %v5083, %v5125
      %5127 = vdwg.mxu0
      %5128 = vmatprep.subr.bf16.mxu0 %v4133
      %5129 = vmatpush1.bf16.msra.mxu0 %v4132
      %5130 = vmatprep.subr.bf16.mxu0 %v4129
      %5131 = vmatpush1.bf16.msra.mxu0 %v4128
      %5132 = vmatprep.subr.bf16.mxu0 %v4125
      %5133 = vmatpush1.bf16.msra.mxu0 %v4124
      %5134 = vmatprep.subr.bf16.mxu0 %v4121
      %5135 = vmatpush1.bf16.msra.mxu0 %v4120
      %5136 = vmatprep.subr.bf16.mxu0 %v4117
      %5137 = vmatpush1.bf16.msra.mxu0 %v4116
      %5138 = vmatprep.subr.bf16.mxu0 %v4113
      %5139 = vmatpush1.bf16.msra.mxu0 %v4112
      %5140 = vmatprep.subr.bf16.mxu0 %v4109
      %5141 = vmatpush1.bf16.msra.mxu0 %v4108
      %5142 = vmatprep.subr.bf16.mxu0 %v4105
      %5143 = vmatpush1.bf16.msra.mxu0 %v4104
      %5144 = vmatprep.subr.bf16.mxu0 %v4165
      %5145 = vmatpush2.bf16.msra.mxu0 %v4164
      %5146 = vmatprep.subr.bf16.mxu0 %v4161
      %5147 = vmatpush2.bf16.msra.mxu0 %v4160
      %5148 = vmatprep.subr.bf16.mxu0 %v4157
      %5149 = vmatpush2.bf16.msra.mxu0 %v4156
      %5150 = vmatprep.subr.bf16.mxu0 %v4153
      %5151 = vmatpush2.bf16.msra.mxu0 %v4152
      %5152 = vmatprep.subr.bf16.mxu0 %v4149
      %5153 = vmatpush2.bf16.msra.mxu0 %v4148
      %5154 = vmatprep.subr.bf16.mxu0 %v4145
      %5155 = vmatpush2.bf16.msra.mxu0 %v4144
      %5156 = vmatprep.subr.bf16.mxu0 %v4141
      %5157 = vmatpush2.bf16.msra.mxu0 %v4140
      %5158 = vmatprep.subr.bf16.mxu0 %v4137
      %5159 = vmatpush2.bf16.msra.mxu0 %v4136
      %5160 = vmatprep.mubr.bf16.mxu0 %v2555
      %5161 = vmatmul.mubr.bf16.gmra.mxu0 %v2554
      %v5162 = vpop.f32.mrf.mxu0
      %v5163 = vadd.f32 0.0, %v5162
      %v5164 = vpop.f32.mrf.mxu0
      %v5165 = vadd.f32 0.0, %v5164
      %v5166 = vpop.f32.mrf.mxu0
      %v5167 = vadd.f32 0.0, %v5166
      %v5168 = vpop.f32.mrf.mxu0
      %v5169 = vadd.f32 0.0, %v5168
      %5170 = vdwg.mxu0
      %5171 = vmatprep.subr.bf16.mxu0 %v4197
      %5172 = vmatpush1.bf16.msra.mxu0 %v4196
      %5173 = vmatprep.subr.bf16.mxu0 %v4193
      %5174 = vmatpush1.bf16.msra.mxu0 %v4192
      %5175 = vmatprep.subr.bf16.mxu0 %v4189
      %5176 = vmatpush1.bf16.msra.mxu0 %v4188
      %5177 = vmatprep.subr.bf16.mxu0 %v4185
      %5178 = vmatpush1.bf16.msra.mxu0 %v4184
      %5179 = vmatprep.subr.bf16.mxu0 %v4181
      %5180 = vmatpush1.bf16.msra.mxu0 %v4180
      %5181 = vmatprep.subr.bf16.mxu0 %v4177
      %5182 = vmatpush1.bf16.msra.mxu0 %v4176
      %5183 = vmatprep.subr.bf16.mxu0 %v4173
      %5184 = vmatpush1.bf16.msra.mxu0 %v4172
      %5185 = vmatprep.subr.bf16.mxu0 %v4169
      %5186 = vmatpush1.bf16.msra.mxu0 %v4168
      %5187 = vmatprep.subr.bf16.mxu0 %v4229
      %5188 = vmatpush2.bf16.msra.mxu0 %v4228
      %5189 = vmatprep.subr.bf16.mxu0 %v4225
      %5190 = vmatpush2.bf16.msra.mxu0 %v4224
      %5191 = vmatprep.subr.bf16.mxu0 %v4221
      %5192 = vmatpush2.bf16.msra.mxu0 %v4220
      %5193 = vmatprep.subr.bf16.mxu0 %v4217
      %5194 = vmatpush2.bf16.msra.mxu0 %v4216
      %5195 = vmatprep.subr.bf16.mxu0 %v4213
      %5196 = vmatpush2.bf16.msra.mxu0 %v4212
      %5197 = vmatprep.subr.bf16.mxu0 %v4209
      %5198 = vmatpush2.bf16.msra.mxu0 %v4208
      %5199 = vmatprep.subr.bf16.mxu0 %v4205
      %5200 = vmatpush2.bf16.msra.mxu0 %v4204
      %5201 = vmatprep.subr.bf16.mxu0 %v4201
      %5202 = vmatpush2.bf16.msra.mxu0 %v4200
      %5203 = vmatprep.mubr.bf16.mxu0 %v2557
      %5204 = vmatmul.mubr.bf16.gmra.mxu0 %v2556
      %v5205 = vpop.f32.mrf.mxu0
      %v5206 = vadd.f32 %v5163, %v5205
      %v5207 = vpop.f32.mrf.mxu0
      %v5208 = vadd.f32 %v5165, %v5207
      %v5209 = vpop.f32.mrf.mxu0
      %v5210 = vadd.f32 %v5167, %v5209
      %v5211 = vpop.f32.mrf.mxu0
      %v5212 = vadd.f32 %v5169, %v5211
      %5213 = vdwg.mxu0
      %5214 = vmatprep.subr.bf16.mxu0 %v4261
      %5215 = vmatpush1.bf16.msra.mxu0 %v4260
      %5216 = vmatprep.subr.bf16.mxu0 %v4257
      %5217 = vmatpush1.bf16.msra.mxu0 %v4256
      %5218 = vmatprep.subr.bf16.mxu0 %v4253
      %5219 = vmatpush1.bf16.msra.mxu0 %v4252
      %5220 = vmatprep.subr.bf16.mxu0 %v4249
      %5221 = vmatpush1.bf16.msra.mxu0 %v4248
      %5222 = vmatprep.subr.bf16.mxu0 %v4245
      %5223 = vmatpush1.bf16.msra.mxu0 %v4244
      %5224 = vmatprep.subr.bf16.mxu0 %v4241
      %5225 = vmatpush1.bf16.msra.mxu0 %v4240
      %5226 = vmatprep.subr.bf16.mxu0 %v4237
      %5227 = vmatpush1.bf16.msra.mxu0 %v4236
      %5228 = vmatprep.subr.bf16.mxu0 %v4233
      %5229 = vmatpush1.bf16.msra.mxu0 %v4232
      %5230 = vmatprep.subr.bf16.mxu0 %v4293
      %5231 = vmatpush2.bf16.msra.mxu0 %v4292
      %5232 = vmatprep.subr.bf16.mxu0 %v4289
      %5233 = vmatpush2.bf16.msra.mxu0 %v4288
      %5234 = vmatprep.subr.bf16.mxu0 %v4285
      %5235 = vmatpush2.bf16.msra.mxu0 %v4284
      %5236 = vmatprep.subr.bf16.mxu0 %v4281
      %5237 = vmatpush2.bf16.msra.mxu0 %v4280
      %5238 = vmatprep.subr.bf16.mxu0 %v4277
      %5239 = vmatpush2.bf16.msra.mxu0 %v4276
      %5240 = vmatprep.subr.bf16.mxu0 %v4273
      %5241 = vmatpush2.bf16.msra.mxu0 %v4272
      %5242 = vmatprep.subr.bf16.mxu0 %v4269
      %5243 = vmatpush2.bf16.msra.mxu0 %v4268
      %5244 = vmatprep.subr.bf16.mxu0 %v4265
      %5245 = vmatpush2.bf16.msra.mxu0 %v4264
      %5246 = vmatprep.mubr.bf16.mxu0 %v2559
      %5247 = vmatmul.mubr.bf16.gmra.mxu0 %v2558
      %v5248 = vpop.f32.mrf.mxu0
      %v5249 = vadd.f32 %v5206, %v5248
      %v5250 = vpop.f32.mrf.mxu0
      %v5251 = vadd.f32 %v5208, %v5250
      %v5252 = vpop.f32.mrf.mxu0
      %v5253 = vadd.f32 %v5210, %v5252
      %v5254 = vpop.f32.mrf.mxu0
      %v5255 = vadd.f32 %v5212, %v5254
      %5256 = vdwg.mxu0
      %5257 = vmatprep.subr.bf16.mxu0 %v4325
      %5258 = vmatpush1.bf16.msra.mxu0 %v4324
      %5259 = vmatprep.subr.bf16.mxu0 %v4321
      %5260 = vmatpush1.bf16.msra.mxu0 %v4320
      %5261 = vmatprep.subr.bf16.mxu0 %v4317
      %5262 = vmatpush1.bf16.msra.mxu0 %v4316
      %5263 = vmatprep.subr.bf16.mxu0 %v4313
      %5264 = vmatpush1.bf16.msra.mxu0 %v4312
      %5265 = vmatprep.subr.bf16.mxu0 %v4309
      %5266 = vmatpush1.bf16.msra.mxu0 %v4308
      %5267 = vmatprep.subr.bf16.mxu0 %v4305
      %5268 = vmatpush1.bf16.msra.mxu0 %v4304
      %5269 = vmatprep.subr.bf16.mxu0 %v4301
      %5270 = vmatpush1.bf16.msra.mxu0 %v4300
      %5271 = vmatprep.subr.bf16.mxu0 %v4297
      %5272 = vmatpush1.bf16.msra.mxu0 %v4296
      %5273 = vmatprep.subr.bf16.mxu0 %v4357
      %5274 = vmatpush2.bf16.msra.mxu0 %v4356
      %5275 = vmatprep.subr.bf16.mxu0 %v4353
      %5276 = vmatpush2.bf16.msra.mxu0 %v4352
      %5277 = vmatprep.subr.bf16.mxu0 %v4349
      %5278 = vmatpush2.bf16.msra.mxu0 %v4348
      %5279 = vmatprep.subr.bf16.mxu0 %v4345
      %5280 = vmatpush2.bf16.msra.mxu0 %v4344
      %5281 = vmatprep.subr.bf16.mxu0 %v4341
      %5282 = vmatpush2.bf16.msra.mxu0 %v4340
      %5283 = vmatprep.subr.bf16.mxu0 %v4337
      %5284 = vmatpush2.bf16.msra.mxu0 %v4336
      %5285 = vmatprep.subr.bf16.mxu0 %v4333
      %5286 = vmatpush2.bf16.msra.mxu0 %v4332
      %5287 = vmatprep.subr.bf16.mxu0 %v4329
      %5288 = vmatpush2.bf16.msra.mxu0 %v4328
      %5289 = vmatprep.mubr.bf16.mxu0 %v2561
      %5290 = vmatmul.mubr.bf16.gmra.mxu0 %v2560
      %v5291 = vpop.f32.mrf.mxu0
      %v5292 = vadd.f32 %v5249, %v5291
      %v5293 = vpop.f32.mrf.mxu0
      %v5294 = vadd.f32 %v5251, %v5293
      %v5295 = vpop.f32.mrf.mxu0
      %v5296 = vadd.f32 %v5253, %v5295
      %v5297 = vpop.f32.mrf.mxu0
      %v5298 = vadd.f32 %v5255, %v5297
      %5299 = vdwg.mxu0
      %5300 = vmatprep.subr.bf16.mxu0 %v4389
      %5301 = vmatpush1.bf16.msra.mxu0 %v4388
      %5302 = vmatprep.subr.bf16.mxu0 %v4385
      %5303 = vmatpush1.bf16.msra.mxu0 %v4384
      %5304 = vmatprep.subr.bf16.mxu0 %v4381
      %5305 = vmatpush1.bf16.msra.mxu0 %v4380
      %5306 = vmatprep.subr.bf16.mxu0 %v4377
      %5307 = vmatpush1.bf16.msra.mxu0 %v4376
      %5308 = vmatprep.subr.bf16.mxu0 %v4373
      %5309 = vmatpush1.bf16.msra.mxu0 %v4372
      %5310 = vmatprep.subr.bf16.mxu0 %v4369
      %5311 = vmatpush1.bf16.msra.mxu0 %v4368
      %5312 = vmatprep.subr.bf16.mxu0 %v4365
      %5313 = vmatpush1.bf16.msra.mxu0 %v4364
      %5314 = vmatprep.subr.bf16.mxu0 %v4361
      %5315 = vmatpush1.bf16.msra.mxu0 %v4360
      %5316 = vmatprep.subr.bf16.mxu0 %v4421
      %5317 = vmatpush2.bf16.msra.mxu0 %v4420
      %5318 = vmatprep.subr.bf16.mxu0 %v4417
      %5319 = vmatpush2.bf16.msra.mxu0 %v4416
      %5320 = vmatprep.subr.bf16.mxu0 %v4413
      %5321 = vmatpush2.bf16.msra.mxu0 %v4412
      %5322 = vmatprep.subr.bf16.mxu0 %v4409
      %5323 = vmatpush2.bf16.msra.mxu0 %v4408
      %5324 = vmatprep.subr.bf16.mxu0 %v4405
      %5325 = vmatpush2.bf16.msra.mxu0 %v4404
      %5326 = vmatprep.subr.bf16.mxu0 %v4401
      %5327 = vmatpush2.bf16.msra.mxu0 %v4400
      %5328 = vmatprep.subr.bf16.mxu0 %v4397
      %5329 = vmatpush2.bf16.msra.mxu0 %v4396
      %5330 = vmatprep.subr.bf16.mxu0 %v4393
      %5331 = vmatpush2.bf16.msra.mxu0 %v4392
      %5332 = vmatprep.mubr.bf16.mxu0 %v2563
      %5333 = vmatmul.mubr.bf16.gmra.mxu0 %v2562
      %v5334 = vpop.f32.mrf.mxu0
      %v5335 = vadd.f32 %v5292, %v5334
      %v5336 = vpop.f32.mrf.mxu0
      %v5337 = vadd.f32 %v5294, %v5336
      %v5338 = vpop.f32.mrf.mxu0
      %v5339 = vadd.f32 %v5296, %v5338
      %v5340 = vpop.f32.mrf.mxu0
      %v5341 = vadd.f32 %v5298, %v5340
      %5342 = vdwg.mxu0
      %5343 = vmatprep.subr.bf16.mxu0 %v4453
      %5344 = vmatpush1.bf16.msra.mxu0 %v4452
      %5345 = vmatprep.subr.bf16.mxu0 %v4449
      %5346 = vmatpush1.bf16.msra.mxu0 %v4448
      %5347 = vmatprep.subr.bf16.mxu0 %v4445
      %5348 = vmatpush1.bf16.msra.mxu0 %v4444
      %5349 = vmatprep.subr.bf16.mxu0 %v4441
      %5350 = vmatpush1.bf16.msra.mxu0 %v4440
      %5351 = vmatprep.subr.bf16.mxu0 %v4437
      %5352 = vmatpush1.bf16.msra.mxu0 %v4436
      %5353 = vmatprep.subr.bf16.mxu0 %v4433
      %5354 = vmatpush1.bf16.msra.mxu0 %v4432
      %5355 = vmatprep.subr.bf16.mxu0 %v4429
      %5356 = vmatpush1.bf16.msra.mxu0 %v4428
      %5357 = vmatprep.subr.bf16.mxu0 %v4425
      %5358 = vmatpush1.bf16.msra.mxu0 %v4424
      %5359 = vmatprep.subr.bf16.mxu0 %v4485
      %5360 = vmatpush2.bf16.msra.mxu0 %v4484
      %5361 = vmatprep.subr.bf16.mxu0 %v4481
      %5362 = vmatpush2.bf16.msra.mxu0 %v4480
      %5363 = vmatprep.subr.bf16.mxu0 %v4477
      %5364 = vmatpush2.bf16.msra.mxu0 %v4476
      %5365 = vmatprep.subr.bf16.mxu0 %v4473
      %5366 = vmatpush2.bf16.msra.mxu0 %v4472
      %5367 = vmatprep.subr.bf16.mxu0 %v4469
      %5368 = vmatpush2.bf16.msra.mxu0 %v4468
      %5369 = vmatprep.subr.bf16.mxu0 %v4465
      %5370 = vmatpush2.bf16.msra.mxu0 %v4464
      %5371 = vmatprep.subr.bf16.mxu0 %v4461
      %5372 = vmatpush2.bf16.msra.mxu0 %v4460
      %5373 = vmatprep.subr.bf16.mxu0 %v4457
      %5374 = vmatpush2.bf16.msra.mxu0 %v4456
      %5375 = vmatprep.mubr.bf16.mxu0 %v2565
      %5376 = vmatmul.mubr.bf16.gmra.mxu0 %v2564
      %v5377 = vpop.f32.mrf.mxu0
      %v5378 = vadd.f32 %v5335, %v5377
      %v5379 = vpop.f32.mrf.mxu0
      %v5380 = vadd.f32 %v5337, %v5379
      %v5381 = vpop.f32.mrf.mxu0
      %v5382 = vadd.f32 %v5339, %v5381
      %v5383 = vpop.f32.mrf.mxu0
      %v5384 = vadd.f32 %v5341, %v5383
      %5385 = vdwg.mxu0
      %v5386 = vrot.slane %v5120, 4
      %v5387 = vadd.f32 %v5120, %v5386
      %v5388 = vrot.slane %v5387, 2
      %v5389 = vadd.f32 %v5387, %v5388
      %v5390 = vrot.slane %v5389, 1
      %v5391 = vadd.f32 %v5389, %v5390
      %v5392 = vrot.slane %v5122, 4
      %v5393 = vadd.f32 %v5122, %v5392
      %v5394 = vrot.slane %v5393, 2
      %v5395 = vadd.f32 %v5393, %v5394
      %v5396 = vrot.slane %v5395, 1
      %v5397 = vadd.f32 %v5395, %v5396
      %v5398 = vrot.slane %v5378, 4
      %v5399 = vadd.f32 %v5378, %v5398
      %v5400 = vrot.slane %v5399, 2
      %v5401 = vadd.f32 %v5399, %v5400
      %v5402 = vrot.slane %v5401, 1
      %v5403 = vadd.f32 %v5401, %v5402
      %v5404 = vrot.slane %v5380, 4
      %v5405 = vadd.f32 %v5380, %v5404
      %v5406 = vrot.slane %v5405, 2
      %v5407 = vadd.f32 %v5405, %v5406
      %v5408 = vrot.slane %v5407, 1
      %v5409 = vadd.f32 %v5407, %v5408
      %v5410 = vrot.slane %v5124, 4
      %v5411 = vadd.f32 %v5124, %v5410
      %v5412 = vrot.slane %v5411, 2
      %v5413 = vadd.f32 %v5411, %v5412
      %v5414 = vrot.slane %v5413, 1
      %v5415 = vadd.f32 %v5413, %v5414
      %v5416 = vrot.slane %v5126, 4
      %v5417 = vadd.f32 %v5126, %v5416
      %v5418 = vrot.slane %v5417, 2
      %v5419 = vadd.f32 %v5417, %v5418
      %v5420 = vrot.slane %v5419, 1
      %v5421 = vadd.f32 %v5419, %v5420
      %v5422 = vrot.slane %v5382, 4
      %v5423 = vadd.f32 %v5382, %v5422
      %v5424 = vrot.slane %v5423, 2
      %v5425 = vadd.f32 %v5423, %v5424
      %v5426 = vrot.slane %v5425, 1
      %v5427 = vadd.f32 %v5425, %v5426
      %v5428 = vrot.slane %v5384, 4
      %v5429 = vadd.f32 %v5384, %v5428
      %v5430 = vrot.slane %v5429, 2
      %v5431 = vadd.f32 %v5429, %v5430
      %v5432 = vrot.slane %v5431, 1
      %v5433 = vadd.f32 %v5431, %v5432
      %v5434 = vmul.f32 %v5120, %v5120
      %v5435 = vmul.f32 %v5122, %v5122
      %v5436 = vmul.f32 %v5378, %v5378
      %v5437 = vmul.f32 %v5380, %v5380
      %v5438 = vmul.f32 %v5124, %v5124
      %v5439 = vmul.f32 %v5126, %v5126
      %v5440 = vmul.f32 %v5382, %v5382
      %v5441 = vmul.f32 %v5384, %v5384
      %v5442 = vrot.slane %v5434, 4
      %v5443 = vadd.f32 %v5434, %v5442
      %v5444 = vrot.slane %v5443, 2
      %v5445 = vadd.f32 %v5443, %v5444
      %v5446 = vrot.slane %v5445, 1
      %v5447 = vadd.f32 %v5445, %v5446
      %v5448 = vrot.slane %v5435, 4
      %v5449 = vadd.f32 %v5435, %v5448
      %v5450 = vrot.slane %v5449, 2
      %v5451 = vadd.f32 %v5449, %v5450
      %v5452 = vrot.slane %v5451, 1
      %v5453 = vadd.f32 %v5451, %v5452
      %v5454 = vrot.slane %v5436, 4
      %v5455 = vadd.f32 %v5436, %v5454
      %v5456 = vrot.slane %v5455, 2
      %v5457 = vadd.f32 %v5455, %v5456
      %v5458 = vrot.slane %v5457, 1
      %v5459 = vadd.f32 %v5457, %v5458
      %v5460 = vrot.slane %v5437, 4
      %v5461 = vadd.f32 %v5437, %v5460
      %v5462 = vrot.slane %v5461, 2
      %v5463 = vadd.f32 %v5461, %v5462
      %v5464 = vrot.slane %v5463, 1
      %v5465 = vadd.f32 %v5463, %v5464
      %v5466 = vrot.slane %v5438, 4
      %v5467 = vadd.f32 %v5438, %v5466
      %v5468 = vrot.slane %v5467, 2
      %v5469 = vadd.f32 %v5467, %v5468
      %v5470 = vrot.slane %v5469, 1
      %v5471 = vadd.f32 %v5469, %v5470
      %v5472 = vrot.slane %v5439, 4
      %v5473 = vadd.f32 %v5439, %v5472
      %v5474 = vrot.slane %v5473, 2
      %v5475 = vadd.f32 %v5473, %v5474
      %v5476 = vrot.slane %v5475, 1
      %v5477 = vadd.f32 %v5475, %v5476
      %v5478 = vrot.slane %v5440, 4
      %v5479 = vadd.f32 %v5440, %v5478
      %v5480 = vrot.slane %v5479, 2
      %v5481 = vadd.f32 %v5479, %v5480
      %v5482 = vrot.slane %v5481, 1
      %v5483 = vadd.f32 %v5481, %v5482
      %v5484 = vrot.slane %v5441, 4
      %v5485 = vadd.f32 %v5441, %v5484
      %v5486 = vrot.slane %v5485, 2
      %v5487 = vadd.f32 %v5485, %v5486
      %v5488 = vrot.slane %v5487, 1
      %v5489 = vadd.f32 %v5487, %v5488
      %v5498 = vsel %vm1851, %v5415, %v5391
      %v5499 = vsel %vm1851, %v5421, %v5397
      %v5500 = vsel %vm1851, %v5427, %v5403
      %v5501 = vsel %vm1851, %v5433, %v5409
      %v5514 = vsel %vm1868, %v5471, %v5447
      %v5515 = vsel %vm1868, %v5477, %v5453
      %v5516 = vsel %vm1868, %v5483, %v5459
      %v5517 = vsel %vm1868, %v5489, %v5465
      %v5522 = vsel %vm1877, %v5498, %v5514
      %v5523 = vsel %vm1877, %v5499, %v5515
      %v5524 = vsel %vm1877, %v5500, %v5516
      %v5525 = vsel %vm1877, %v5501, %v5517
      %v5526 = vld [vmem:[%s3] sm:$0xff]
      %v5527 = vld [vmem:[%s3 + $0x8] sm:$0xff]
      %v5528 = vld [vmem:[%s3 + $0x10] sm:$0xff]
      %v5529 = vld [vmem:[%s3 + $0x18] sm:$0xff]
      %v5530 = vld [vmem:[%s3 + $0x20] sm:$0xff]
      %v5531 = vld [vmem:[%s3 + $0x28] sm:$0xff]
      %v5532 = vld [vmem:[%s3 + $0x30] sm:$0xff]
      %v5533 = vld [vmem:[%s3 + $0x38] sm:$0xff]
      %v5534 = vld [vmem:[%s3 + $0x40] sm:$0xff]
      %v5535 = vld [vmem:[%s3 + $0x48] sm:$0xff]
      %v5536 = vld [vmem:[%s3 + $0x50] sm:$0xff]
      %v5537 = vld [vmem:[%s3 + $0x58] sm:$0xff]
      %v5538 = vld [vmem:[%s3 + $0x60] sm:$0xff]
      %v5539 = vld [vmem:[%s3 + $0x68] sm:$0xff]
      %v5540 = vld [vmem:[%s3 + $0x70] sm:$0xff]
      %v5541 = vld [vmem:[%s3 + $0x78] sm:$0xff]
      %v5542 = vld [vmem:[%s3 + $0x80] sm:$0xff]
      %v5543 = vld [vmem:[%s3 + $0x88] sm:$0xff]
      %v5544 = vld [vmem:[%s3 + $0x90] sm:$0xff]
      %v5545 = vld [vmem:[%s3 + $0x98] sm:$0xff]
      %v5546 = vld [vmem:[%s3 + $0xa0] sm:$0xff]
      %v5547 = vld [vmem:[%s3 + $0xa8] sm:$0xff]
      %v5548 = vld [vmem:[%s3 + $0xb0] sm:$0xff]
      %v5549 = vld [vmem:[%s3 + $0xb8] sm:$0xff]
      %v5550 = vld [vmem:[%s3 + $0xc0] sm:$0xff]
      %v5551 = vld [vmem:[%s3 + $0xc8] sm:$0xff]
      %v5552 = vld [vmem:[%s3 + $0xd0] sm:$0xff]
      %v5553 = vld [vmem:[%s3 + $0xd8] sm:$0xff]
      %v5554 = vld [vmem:[%s3 + $0xe0] sm:$0xff]
      %v5555 = vld [vmem:[%s3 + $0xe8] sm:$0xff]
      %v5556 = vld [vmem:[%s3 + $0xf0] sm:$0xff]
      %v5557 = vld [vmem:[%s3 + $0xf8] sm:$0xff]
      %v5558 = vld [vmem:[%s3 + $0x100] sm:$0xff]
      %v5559 = vld [vmem:[%s3 + $0x108] sm:$0xff]
      %v5560 = vld [vmem:[%s3 + $0x110] sm:$0xff]
      %v5561 = vld [vmem:[%s3 + $0x118] sm:$0xff]
      %v5562 = vld [vmem:[%s3 + $0x120] sm:$0xff]
      %v5563 = vld [vmem:[%s3 + $0x128] sm:$0xff]
      %v5564 = vld [vmem:[%s3 + $0x130] sm:$0xff]
      %v5565 = vld [vmem:[%s3 + $0x138] sm:$0xff]
      %v5566 = vld [vmem:[%s3 + $0x140] sm:$0xff]
      %v5567 = vld [vmem:[%s3 + $0x148] sm:$0xff]
      %v5568 = vld [vmem:[%s3 + $0x150] sm:$0xff]
      %v5569 = vld [vmem:[%s3 + $0x158] sm:$0xff]
      %v5570 = vld [vmem:[%s3 + $0x160] sm:$0xff]
      %v5571 = vld [vmem:[%s3 + $0x168] sm:$0xff]
      %v5572 = vld [vmem:[%s3 + $0x170] sm:$0xff]
      %v5573 = vld [vmem:[%s3 + $0x178] sm:$0xff]
      %v5574 = vld [vmem:[%s3 + $0x180] sm:$0xff]
      %v5575 = vld [vmem:[%s3 + $0x188] sm:$0xff]
      %v5576 = vld [vmem:[%s3 + $0x190] sm:$0xff]
      %v5577 = vld [vmem:[%s3 + $0x198] sm:$0xff]
      %v5578 = vld [vmem:[%s3 + $0x1a0] sm:$0xff]
      %v5579 = vld [vmem:[%s3 + $0x1a8] sm:$0xff]
      %v5580 = vld [vmem:[%s3 + $0x1b0] sm:$0xff]
      %v5581 = vld [vmem:[%s3 + $0x1b8] sm:$0xff]
      %v5582 = vld [vmem:[%s3 + $0x1c0] sm:$0xff]
      %v5583 = vld [vmem:[%s3 + $0x1c8] sm:$0xff]
      %v5584 = vld [vmem:[%s3 + $0x1d0] sm:$0xff]
      %v5585 = vld [vmem:[%s3 + $0x1d8] sm:$0xff]
      %v5586 = vld [vmem:[%s3 + $0x1e0] sm:$0xff]
      %v5587 = vld [vmem:[%s3 + $0x1e8] sm:$0xff]
      %v5588 = vld [vmem:[%s3 + $0x1f0] sm:$0xff]
      %v5589 = vld [vmem:[%s3 + $0x1f8] sm:$0xff]
      %5590 = vmatprep.subr.mxu0 0.0
      %5591 = vmatpush1.msra.mxu0 %v5541
      %5592 = vmatprep.subr.mxu0 0.0
      %5593 = vmatpush1.msra.mxu0 %v5540
      %5594 = vmatprep.subr.mxu0 0.0
      %5595 = vmatpush1.msra.mxu0 %v5539
      %5596 = vmatprep.subr.mxu0 0.0
      %5597 = vmatpush1.msra.mxu0 %v5538
      %5598 = vmatprep.subr.mxu0 0.0
      %5599 = vmatpush1.msra.mxu0 %v5537
      %5600 = vmatprep.subr.mxu0 0.0
      %5601 = vmatpush1.msra.mxu0 %v5536
      %5602 = vmatprep.subr.mxu0 0.0
      %5603 = vmatpush1.msra.mxu0 %v5535
      %5604 = vmatprep.subr.mxu0 0.0
      %5605 = vmatpush1.msra.mxu0 %v5534
      %5606 = vmatprep.subr.mxu0 0.0
      %5607 = vmatpush1.msra.mxu0 %v5533
      %5608 = vmatprep.subr.mxu0 0.0
      %5609 = vmatpush1.msra.mxu0 %v5532
      %5610 = vmatprep.subr.mxu0 0.0
      %5611 = vmatpush1.msra.mxu0 %v5531
      %5612 = vmatprep.subr.mxu0 0.0
      %5613 = vmatpush1.msra.mxu0 %v5530
      %5614 = vmatprep.subr.mxu0 0.0
      %5615 = vmatpush1.msra.mxu0 %v5529
      %5616 = vmatprep.subr.mxu0 0.0
      %5617 = vmatpush1.msra.mxu0 %v5528
      %5618 = vmatprep.subr.mxu0 0.0
      %5619 = vmatpush1.msra.mxu0 %v5527
      %5620 = vmatprep.subr.mxu0 0.0
      %5621 = vmatpush1.msra.mxu0 %v5526
      %5622 = vmatprep.subr.mxu0 0.0
      %5623 = vmatpush2.msra.mxu0 %v5557
      %5624 = vmatprep.subr.mxu0 0.0
      %5625 = vmatpush2.msra.mxu0 %v5556
      %5626 = vmatprep.subr.mxu0 0.0
      %5627 = vmatpush2.msra.mxu0 %v5555
      %5628 = vmatprep.subr.mxu0 0.0
      %5629 = vmatpush2.msra.mxu0 %v5554
      %5630 = vmatprep.subr.mxu0 0.0
      %5631 = vmatpush2.msra.mxu0 %v5553
      %5632 = vmatprep.subr.mxu0 0.0
      %5633 = vmatpush2.msra.mxu0 %v5552
      %5634 = vmatprep.subr.mxu0 0.0
      %5635 = vmatpush2.msra.mxu0 %v5551
      %5636 = vmatprep.subr.mxu0 0.0
      %5637 = vmatpush2.msra.mxu0 %v5550
      %5638 = vmatprep.subr.mxu0 0.0
      %5639 = vmatpush2.msra.mxu0 %v5549
      %5640 = vmatprep.subr.mxu0 0.0
      %5641 = vmatpush2.msra.mxu0 %v5548
      %5642 = vmatprep.subr.mxu0 0.0
      %5643 = vmatpush2.msra.mxu0 %v5547
      %5644 = vmatprep.subr.mxu0 0.0
      %5645 = vmatpush2.msra.mxu0 %v5546
      %5646 = vmatprep.subr.mxu0 0.0
      %5647 = vmatpush2.msra.mxu0 %v5545
      %5648 = vmatprep.subr.mxu0 0.0
      %5649 = vmatpush2.msra.mxu0 %v5544
      %5650 = vmatprep.subr.mxu0 0.0
      %5651 = vmatpush2.msra.mxu0 %v5543
      %5652 = vmatprep.subr.mxu0 0.0
      %5653 = vmatpush2.msra.mxu0 %v5542
      %5654 = vmatprep.mubr.f32.mxu0 %v5523
      %5655 = vmatmul.mubr.f32.gmra.mxu0 %v5522
      %v5656 = vpop.f32.mrf.mxu0
      %v5657 = vadd.f32 0.0, %v5656
      %v5658 = vpop.f32.mrf.mxu0
      %5659 = vdwg.mxu0
      %5660 = vmatprep.subr.mxu0 0.0
      %5661 = vmatpush1.msra.mxu0 %v5573
      %5662 = vmatprep.subr.mxu0 0.0
      %5663 = vmatpush1.msra.mxu0 %v5572
      %5664 = vmatprep.subr.mxu0 0.0
      %5665 = vmatpush1.msra.mxu0 %v5571
      %5666 = vmatprep.subr.mxu0 0.0
      %5667 = vmatpush1.msra.mxu0 %v5570
      %5668 = vmatprep.subr.mxu0 0.0
      %5669 = vmatpush1.msra.mxu0 %v5569
      %5670 = vmatprep.subr.mxu0 0.0
      %5671 = vmatpush1.msra.mxu0 %v5568
      %5672 = vmatprep.subr.mxu0 0.0
      %5673 = vmatpush1.msra.mxu0 %v5567
      %5674 = vmatprep.subr.mxu0 0.0
      %5675 = vmatpush1.msra.mxu0 %v5566
      %5676 = vmatprep.subr.mxu0 0.0
      %5677 = vmatpush1.msra.mxu0 %v5565
      %5678 = vmatprep.subr.mxu0 0.0
      %5679 = vmatpush1.msra.mxu0 %v5564
      %5680 = vmatprep.subr.mxu0 0.0
      %5681 = vmatpush1.msra.mxu0 %v5563
      %5682 = vmatprep.subr.mxu0 0.0
      %5683 = vmatpush1.msra.mxu0 %v5562
      %5684 = vmatprep.subr.mxu0 0.0
      %5685 = vmatpush1.msra.mxu0 %v5561
      %5686 = vmatprep.subr.mxu0 0.0
      %5687 = vmatpush1.msra.mxu0 %v5560
      %5688 = vmatprep.subr.mxu0 0.0
      %5689 = vmatpush1.msra.mxu0 %v5559
      %5690 = vmatprep.subr.mxu0 0.0
      %5691 = vmatpush1.msra.mxu0 %v5558
      %5692 = vmatprep.subr.mxu0 0.0
      %5693 = vmatpush2.msra.mxu0 %v5589
      %5694 = vmatprep.subr.mxu0 0.0
      %5695 = vmatpush2.msra.mxu0 %v5588
      %5696 = vmatprep.subr.mxu0 0.0
      %5697 = vmatpush2.msra.mxu0 %v5587
      %5698 = vmatprep.subr.mxu0 0.0
      %5699 = vmatpush2.msra.mxu0 %v5586
      %5700 = vmatprep.subr.mxu0 0.0
      %5701 = vmatpush2.msra.mxu0 %v5585
      %5702 = vmatprep.subr.mxu0 0.0
      %5703 = vmatpush2.msra.mxu0 %v5584
      %5704 = vmatprep.subr.mxu0 0.0
      %5705 = vmatpush2.msra.mxu0 %v5583
      %5706 = vmatprep.subr.mxu0 0.0
      %5707 = vmatpush2.msra.mxu0 %v5582
      %5708 = vmatprep.subr.mxu0 0.0
      %5709 = vmatpush2.msra.mxu0 %v5581
      %5710 = vmatprep.subr.mxu0 0.0
      %5711 = vmatpush2.msra.mxu0 %v5580
      %5712 = vmatprep.subr.mxu0 0.0
      %5713 = vmatpush2.msra.mxu0 %v5579
      %5714 = vmatprep.subr.mxu0 0.0
      %5715 = vmatpush2.msra.mxu0 %v5578
      %5716 = vmatprep.subr.mxu0 0.0
      %5717 = vmatpush2.msra.mxu0 %v5577
      %5718 = vmatprep.subr.mxu0 0.0
      %5719 = vmatpush2.msra.mxu0 %v5576
      %5720 = vmatprep.subr.mxu0 0.0
      %5721 = vmatpush2.msra.mxu0 %v5575
      %5722 = vmatprep.subr.mxu0 0.0
      %5723 = vmatpush2.msra.mxu0 %v5574
      %5724 = vmatprep.mubr.f32.mxu0 %v5525
      %5725 = vmatmul.mubr.f32.gmra.mxu0 %v5524
      %v5726 = vpop.f32.mrf.mxu0
      %v5727 = vadd.f32 %v5657, %v5726
      %v5728 = vpop.f32.mrf.mxu0
      %5729 = vdwg.mxu0
      %v5730 = vmul.f32 %v5727, 0.001953125
      %v5731 = vmul.f32 %v5730, %v5730
      %v5733 = vrot.slane %v5731, 6
      %v5735 = vsub.f32 %v5730, %v5733
      %v5736 = vmax.f32 %v5735, 0.0
      %v5737 = vadd.f32 %v5736, 1e-05
      %v5738 = vrsqrt.pop %v5737
      %v5739 = vsel %vm1877, %v5730, %v5738
      %v5740 = vld [vmem:[%s4] sm:$0xff]
      %v5741 = vld [vmem:[%s4 + $0x8] sm:$0xff]
      %v5742 = vld [vmem:[%s4 + $0x10] sm:$0xff]
      %v5743 = vld [vmem:[%s4 + $0x18] sm:$0xff]
      %v5745 = vsel %vm2100, %v5739, 0
      %5747 = vmatprep.subr.mxu0 0.0
      %5748 = vmatpush1.msra.mxu0 0.0
      %5749 = vmatprep.subr.mxu0 0.0
      %5750 = vmatpush1.msra.mxu0 0.0
      %5751 = vmatprep.subr.mxu0 0.0
      %5752 = vmatpush1.msra.mxu0 0.0
      %5753 = vmatprep.subr.mxu0 0.0
      %5754 = vmatpush1.msra.mxu0 0.0
      %5755 = vmatprep.subr.mxu0 0.0
      %5756 = vmatpush1.msra.mxu0 0.0
      %5757 = vmatprep.subr.mxu0 0.0
      %5758 = vmatpush1.msra.mxu0 0.0
      %5759 = vmatprep.subr.mxu0 0.0
      %5760 = vmatpush1.msra.mxu0 0.0
      %5761 = vmatprep.subr.mxu0 0.0
      %5762 = vmatpush1.msra.mxu0 0.0
      %5763 = vmatprep.subr.mxu0 0.0
      %5764 = vmatpush1.msra.mxu0 0.0
      %5765 = vmatprep.subr.mxu0 0.0
      %5766 = vmatpush1.msra.mxu0 0.0
      %5767 = vmatprep.subr.mxu0 0.0
      %5768 = vmatpush1.msra.mxu0 0.0
      %5769 = vmatprep.subr.mxu0 0.0
      %5770 = vmatpush1.msra.mxu0 0.0
      %5771 = vmatprep.subr.mxu0 0.0
      %5772 = vmatpush1.msra.mxu0 0.0
      %5773 = vmatprep.subr.mxu0 0.0
      %5774 = vmatpush1.msra.mxu0 0.0
      %5775 = vmatprep.subr.mxu0 0.0
      %5776 = vmatpush1.msra.mxu0 0.0
      %5777 = vmatprep.subr.mxu0 %v5741
      %5778 = vmatpush1.msra.mxu0 %v5740
      %5779 = vmatprep.subr.mxu0 0.0
      %5780 = vmatpush2.msra.mxu0 0.0
      %5781 = vmatprep.subr.mxu0 0.0
      %5782 = vmatpush2.msra.mxu0 0.0
      %5783 = vmatprep.subr.mxu0 0.0
      %5784 = vmatpush2.msra.mxu0 0.0
      %5785 = vmatprep.subr.mxu0 0.0
      %5786 = vmatpush2.msra.mxu0 0.0
      %5787 = vmatprep.subr.mxu0 0.0
      %5788 = vmatpush2.msra.mxu0 0.0
      %5789 = vmatprep.subr.mxu0 0.0
      %5790 = vmatpush2.msra.mxu0 0.0
      %5791 = vmatprep.subr.mxu0 0.0
      %5792 = vmatpush2.msra.mxu0 0.0
      %5793 = vmatprep.subr.mxu0 0.0
      %5794 = vmatpush2.msra.mxu0 0.0
      %5795 = vmatprep.subr.mxu0 0.0
      %5796 = vmatpush2.msra.mxu0 0.0
      %5797 = vmatprep.subr.mxu0 0.0
      %5798 = vmatpush2.msra.mxu0 0.0
      %5799 = vmatprep.subr.mxu0 0.0
      %5800 = vmatpush2.msra.mxu0 0.0
      %5801 = vmatprep.subr.mxu0 0.0
      %5802 = vmatpush2.msra.mxu0 0.0
      %5803 = vmatprep.subr.mxu0 0.0
      %5804 = vmatpush2.msra.mxu0 0.0
      %5805 = vmatprep.subr.mxu0 0.0
      %5806 = vmatpush2.msra.mxu0 0.0
      %5807 = vmatprep.subr.mxu0 0.0
      %5808 = vmatpush2.msra.mxu0 0.0
      %5809 = vmatprep.subr.mxu0 0.0
      %5810 = vmatpush2.msra.mxu0 0.0
      %5811 = vmatprep.mubr.f32.mxu0 0.0
      %5812 = vmatmul.mubr.f32.gmra.mxu0 %v5745
      %v5813 = vpop.f32.mrf.mxu0
      %v5814 = vadd.f32 0.0, %v5813
      %v5815 = vpop.f32.mrf.mxu0
      %v5816 = vadd.f32 0.0, %v5815
      %5817 = vdwg.mxu0
      %5818 = vmatprep.subr.mxu0 0.0
      %5819 = vmatpush1.msra.mxu0 0.0
      %5820 = vmatprep.subr.mxu0 0.0
      %5821 = vmatpush1.msra.mxu0 0.0
      %5822 = vmatprep.subr.mxu0 0.0
      %5823 = vmatpush1.msra.mxu0 0.0
      %5824 = vmatprep.subr.mxu0 0.0
      %5825 = vmatpush1.msra.mxu0 0.0
      %5826 = vmatprep.subr.mxu0 0.0
      %5827 = vmatpush1.msra.mxu0 0.0
      %5828 = vmatprep.subr.mxu0 0.0
      %5829 = vmatpush1.msra.mxu0 0.0
      %5830 = vmatprep.subr.mxu0 0.0
      %5831 = vmatpush1.msra.mxu0 0.0
      %5832 = vmatprep.subr.mxu0 0.0
      %5833 = vmatpush1.msra.mxu0 0.0
      %5834 = vmatprep.subr.mxu0 0.0
      %5835 = vmatpush1.msra.mxu0 0.0
      %5836 = vmatprep.subr.mxu0 0.0
      %5837 = vmatpush1.msra.mxu0 0.0
      %5838 = vmatprep.subr.mxu0 0.0
      %5839 = vmatpush1.msra.mxu0 0.0
      %5840 = vmatprep.subr.mxu0 0.0
      %5841 = vmatpush1.msra.mxu0 0.0
      %5842 = vmatprep.subr.mxu0 0.0
      %5843 = vmatpush1.msra.mxu0 0.0
      %5844 = vmatprep.subr.mxu0 0.0
      %5845 = vmatpush1.msra.mxu0 0.0
      %5846 = vmatprep.subr.mxu0 0.0
      %5847 = vmatpush1.msra.mxu0 0.0
      %5848 = vmatprep.subr.mxu0 %v5743
      %5849 = vmatpush1.msra.mxu0 %v5742
      %5850 = vmatprep.subr.mxu0 0.0
      %5851 = vmatpush2.msra.mxu0 0.0
      %5852 = vmatprep.subr.mxu0 0.0
      %5853 = vmatpush2.msra.mxu0 0.0
      %5854 = vmatprep.subr.mxu0 0.0
      %5855 = vmatpush2.msra.mxu0 0.0
      %5856 = vmatprep.subr.mxu0 0.0
      %5857 = vmatpush2.msra.mxu0 0.0
      %5858 = vmatprep.subr.mxu0 0.0
      %5859 = vmatpush2.msra.mxu0 0.0
      %5860 = vmatprep.subr.mxu0 0.0
      %5861 = vmatpush2.msra.mxu0 0.0
      %5862 = vmatprep.subr.mxu0 0.0
      %5863 = vmatpush2.msra.mxu0 0.0
      %5864 = vmatprep.subr.mxu0 0.0
      %5865 = vmatpush2.msra.mxu0 0.0
      %5866 = vmatprep.subr.mxu0 0.0
      %5867 = vmatpush2.msra.mxu0 0.0
      %5868 = vmatprep.subr.mxu0 0.0
      %5869 = vmatpush2.msra.mxu0 0.0
      %5870 = vmatprep.subr.mxu0 0.0
      %5871 = vmatpush2.msra.mxu0 0.0
      %5872 = vmatprep.subr.mxu0 0.0
      %5873 = vmatpush2.msra.mxu0 0.0
      %5874 = vmatprep.subr.mxu0 0.0
      %5875 = vmatpush2.msra.mxu0 0.0
      %5876 = vmatprep.subr.mxu0 0.0
      %5877 = vmatpush2.msra.mxu0 0.0
      %5878 = vmatprep.subr.mxu0 0.0
      %5879 = vmatpush2.msra.mxu0 0.0
      %5880 = vmatprep.subr.mxu0 0.0
      %5881 = vmatpush2.msra.mxu0 0.0
      %5882 = vmatprep.mubr.f32.mxu0 0.0
      %5883 = vmatmul.mubr.f32.gmra.mxu0 %v5745
      %v5884 = vpop.f32.mrf.mxu0
      %v5885 = vadd.f32 0.0, %v5884
      %v5886 = vpop.f32.mrf.mxu0
      %v5887 = vadd.f32 0.0, %v5886
      %5888 = vdwg.mxu0
      %v5893 = vcombine.low %v5814, %v5816
      %v5894 = vcombine.low %v5885, %v5887
      %v5896 = vunpack.c.l.s4 1966171168
      %v5897 = vunpack.c.0.s8 %v5896
      %v5898 = vlaneseq
      %v5899 = vshrl.u32 %v5898, 7
      %v5900 = vsub.s32 %v5897, %v5899
      %v5901 = vrot.slane %v5893, %v5900
      %v5903 = vunpack.c.l.s4 1966171168
      %v5904 = vunpack.c.0.s8 %v5903
      %v5905 = vlaneseq
      %v5906 = vshrl.u32 %v5905, 7
      %v5907 = vsub.s32 %v5904, %v5906
      %v5908 = vrot.slane %v5894, %v5907
      %v5909 = vcombine.low %v5901, %v5908
      %v5910 = vcombine.high %v5901, %v5908
      %v5912 = vunpack.c.l.s4 1966171168
      %v5913 = vunpack.c.0.s8 %v5912
      %v5914 = vlaneseq
      %v5915 = vshrl.u32 %v5914, 7
      %v5916 = vsub.s32 %v5913, %v5915
      %v5917 = vrot.slane %v5909, %v5916
      %v5919 = vunpack.c.l.s4 1966171168
      %v5920 = vunpack.c.0.s8 %v5919
      %v5921 = vlaneseq
      %v5922 = vshrl.u32 %v5921, 7
      %v5923 = vsub.s32 %v5920, %v5922
      %v5924 = vrot.slane %v5910, %v5923
      %v5925 = vlaneseq
      %v5926 = vshrl.u32 %v5925, 7
      %v5927 = vsub.s32 0, %v5926
      %v5928 = vrot.slane %v5917, %v5927
      %v5929 = vlaneseq
      %v5930 = vshrl.u32 %v5929, 7
      %v5931 = vsub.s32 1, %v5930
      %v5932 = vrot.slane %v5917, %v5931
      %v5933 = vlaneseq
      %v5934 = vshrl.u32 %v5933, 7
      %v5935 = vsub.s32 2, %v5934
      %v5936 = vrot.slane %v5917, %v5935
      %v5937 = vlaneseq
      %v5938 = vshrl.u32 %v5937, 7
      %v5939 = vsub.s32 3, %v5938
      %v5940 = vrot.slane %v5917, %v5939
      %v5941 = vlaneseq
      %v5942 = vshrl.u32 %v5941, 7
      %v5943 = vsub.s32 0, %v5942
      %v5944 = vrot.slane %v5924, %v5943
      %v5945 = vlaneseq
      %v5946 = vshrl.u32 %v5945, 7
      %v5947 = vsub.s32 1, %v5946
      %v5948 = vrot.slane %v5924, %v5947
      %v5949 = vlaneseq
      %v5950 = vshrl.u32 %v5949, 7
      %v5951 = vsub.s32 2, %v5950
      %v5952 = vrot.slane %v5924, %v5951
      %v5953 = vlaneseq
      %v5954 = vshrl.u32 %v5953, 7
      %v5955 = vsub.s32 3, %v5954
      %v5956 = vrot.slane %v5924, %v5955
      %v5965 = vsub.f32 %v5120, %v5928
      %v5966 = vsub.f32 %v5122, %v5932
      %v5967 = vsub.f32 %v5378, %v5936
      %v5968 = vsub.f32 %v5380, %v5940
      %v5969 = vsub.f32 %v5124, %v5944
      %v5970 = vsub.f32 %v5126, %v5948
      %v5971 = vsub.f32 %v5382, %v5952
      %v5972 = vsub.f32 %v5384, %v5956
      %v5973 = vcombine.high %v5917, %v5917
      %v5974 = vcombine.high %v5924, %v5924
      %v5975 = vlaneseq
      %v5976 = vshrl.u32 %v5975, 7
      %v5977 = vsub.s32 0, %v5976
      %v5978 = vrot.slane %v5973, %v5977
      %v5979 = vlaneseq
      %v5980 = vshrl.u32 %v5979, 7
      %v5981 = vsub.s32 1, %v5980
      %v5982 = vrot.slane %v5973, %v5981
      %v5983 = vlaneseq
      %v5984 = vshrl.u32 %v5983, 7
      %v5985 = vsub.s32 2, %v5984
      %v5986 = vrot.slane %v5973, %v5985
      %v5987 = vlaneseq
      %v5988 = vshrl.u32 %v5987, 7
      %v5989 = vsub.s32 3, %v5988
      %v5990 = vrot.slane %v5973, %v5989
      %v5991 = vlaneseq
      %v5992 = vshrl.u32 %v5991, 7
      %v5993 = vsub.s32 0, %v5992
      %v5994 = vrot.slane %v5974, %v5993
      %v5995 = vlaneseq
      %v5996 = vshrl.u32 %v5995, 7
      %v5997 = vsub.s32 1, %v5996
      %v5998 = vrot.slane %v5974, %v5997
      %v5999 = vlaneseq
      %v6000 = vshrl.u32 %v5999, 7
      %v6001 = vsub.s32 2, %v6000
      %v6002 = vrot.slane %v5974, %v6001
      %v6003 = vlaneseq
      %v6004 = vshrl.u32 %v6003, 7
      %v6005 = vsub.s32 3, %v6004
      %v6006 = vrot.slane %v5974, %v6005
      %v6015 = vmul.f32 %v5965, %v5978
      %v6016 = vmul.f32 %v5966, %v5982
      %v6017 = vmul.f32 %v5967, %v5986
      %v6018 = vmul.f32 %v5968, %v5990
      %v6019 = vmul.f32 %v5969, %v5994
      %v6020 = vmul.f32 %v5970, %v5998
      %v6021 = vmul.f32 %v5971, %v6002
      %v6022 = vmul.f32 %v5972, %v6006
      %vm6023 = vcmp.ge.f32.partialorder %v6015, 0.0
      %vm6024 = vcmp.ge.f32.partialorder %v6016, 0.0
      %vm6025 = vcmp.ge.f32.partialorder %v6017, 0.0
      %vm6026 = vcmp.ge.f32.partialorder %v6018, 0.0
      %vm6027 = vcmp.ge.f32.partialorder %v6019, 0.0
      %vm6028 = vcmp.ge.f32.partialorder %v6020, 0.0
      %vm6029 = vcmp.ge.f32.partialorder %v6021, 0.0
      %vm6030 = vcmp.ge.f32.partialorder %v6022, 0.0
      %v6031 = vmul.f32 %v6015, 0.01
      %v6032 = vmul.f32 %v6016, 0.01
      %v6033 = vmul.f32 %v6017, 0.01
      %v6034 = vmul.f32 %v6018, 0.01
      %v6035 = vmul.f32 %v6019, 0.01
      %v6036 = vmul.f32 %v6020, 0.01
      %v6037 = vmul.f32 %v6021, 0.01
      %v6038 = vmul.f32 %v6022, 0.01
      %v6039 = vsel %vm6023, %v6015, %v6031
      %v6040 = vsel %vm6024, %v6016, %v6032
      %v6041 = vsel %vm6025, %v6017, %v6033
      %v6042 = vsel %vm6026, %v6018, %v6034
      %v6043 = vsel %vm6027, %v6019, %v6035
      %v6044 = vsel %vm6028, %v6020, %v6036
      %v6045 = vsel %vm6029, %v6021, %v6037
      %v6046 = vsel %vm6030, %v6022, %v6038
      %6047 = vst [vmem:[%s231] sm:$0xff] %v6039
      %6048 = vst [vmem:[%s231 + $0x8] sm:$0xff] %v6040
      %6049 = vst [vmem:[%s231 + $0x10] sm:$0xff] %v6041
      %6050 = vst [vmem:[%s231 + $0x18] sm:$0xff] %v6042
      %6051 = vst [vmem:[%s231 + $0x20] sm:$0xff] %v6043
      %6052 = vst [vmem:[%s231 + $0x28] sm:$0xff] %v6044
      %6053 = vst [vmem:[%s231 + $0x30] sm:$0xff] %v6045
      %6054 = vst [vmem:[%s231 + $0x38] sm:$0xff] %v6046
      %s6055 = smul.u32 2, %s16
      %p6056 = scmp.lt.s32.totalorder %s6055, 3
      %s6057 = scalar_select %p6056, %s6055, 3
      %s6058 = smul.addr %s6057, 4
      %s6059 = smul.addr %s6058, 8
      %s6060 = scalar_lea.vmem %s5, %s6059
      // Predicated region
      $region41: #{conv_block_forward.1} parent=39 // pred_check
        %p6061 = pneg %p144
      $region42: #{conv_block_forward.1} parent=39 // pred_check_branch
        %6063 = sbr.rel (%p6061) target = $region44
      $region43: #{conv_block_forward.1} parent=39 // pred_region
        %s6064 = smul.u32 2, %s16
      $region44: #{conv_block_forward.1} parent=39 // pred_fallthru
        _
    $region40: #{conv_block_forward.1} parent=5 // pred_fallthru
      _
    %p6065 = scmp.le.s32.totalorder 2, %s11
    // Predicated region
    $region45: #{conv_block_forward.1} parent=5 // pred_check
      %p6066 = pneg %p6065
    $region46: #{conv_block_forward.1} parent=5 // pred_check_branch
      %6068 = sbr.rel (%p6066) target = $region48
    $region47: #{conv_block_forward.1} parent=5 // pred_region
      %s6069 = ssub.s32 %s11, 2
      // Predicated region
      $region49: #{conv_block_forward.1} parent=47 // pred_check
        %p6070 = pneg %p150
      $region50: #{conv_block_forward.1} parent=47 // pred_check_branch
        %6072 = sbr.rel (%p6070) target = $region52
      $region51: #{conv_block_forward.1} parent=47 // pred_region
        %s6073 = smul.u32 2, %s17
        %p6074 = scmp.lt.s32.totalorder %s6073, 3
        %s6075 = scalar_select %p6074, %s6073, 3
        %s6076 = smul.addr %s6075, 4
        %s6077 = smul.addr %s6076, 8
        %s6078 = scalar_lea.vmem %s5, %s6077
      $region52: #{conv_block_forward.1} parent=47 // pred_fallthru
        _
    $region48: #{conv_block_forward.1} parent=5 // pred_fallthru
      _
  $region6: #{conv_block_forward.1} parent=0 // loop_footer
    %s15 = sadd.s32 1, %s11
  $region7: #{conv_block_forward.1} parent=0 // loop_footer_branch
    %10 = sbr.rel target = $region3
  $region8: #{conv_block_forward.1} parent=0 // loop_exit
    _

</llo_original>
